<compile_context>
chip_gen: v7x
topology: tpu7x:2x2x1
jax: 0.10.0
libtpu: 0.0.40
codegen_flags: <defaults>
</compile_context>

<pallas_src>
import math
import functools

import jax
import jax.numpy as jnp
from jax.experimental import pallas as pl
from jax.experimental.pallas import tpu as pltpu

# ---- small synthetic BERT config ----
VOCAB = 32
TYPE_VOCAB = 2
MAX_POS = 16
EMB_ROWS = 64                       # VOCAB + MAX_POS + TYPE_VOCAB (=50), padded to 64
HIDDEN = 128
N_HEADS = 2
HEAD_DIM = HIDDEN // N_HEADS
INTERMEDIATE = 256
N_LAYERS = 2
N_LABELS = 16
LN_EPS = 1e-12
LANE = 128                          # lane-dense padded width for classifier output

B = 2
S = 8


# ---------------- fused whole-model Pallas kernel ----------------

def _model_kernel(ids_ref, keycode_ref, emb_ref, wqkv_ref, bqkv_ref, wo_ref,
                  w1_ref, b1_ref, w2_ref, whead_ref, vec_ref, logits_ref,
                  *, n_layers, n_heads, seq_len, batch):
    bs = batch * seq_len
    hidden = emb_ref.shape[-1]
    dh = hidden // n_heads
    scale = 1.0 / math.sqrt(dh)
    f32, bf16 = jnp.float32, jnp.bfloat16

    def vrow(i):                     # one [1, H] param row from the packed slab
        return vec_ref[i:i + 1, :]

    def layernorm(x, g, b):
        # one-pass stats: var = E[x^2] - E[x]^2 (both lane reduces back-to-back)
        m1 = jnp.mean(x, axis=-1, keepdims=True)
        m2 = jnp.mean(x * x, axis=-1, keepdims=True)
        var = m2 - m1 * m1
        return (x - m1) * jax.lax.rsqrt(var + LN_EPS) * g + b

    # ---- fused embedding lookup: one-hot [bs, EMB_ROWS] @ packed table ----
    word_ids = ids_ref[:, 0:1]                                   # [bs,1] int32
    type_ids = ids_ref[:, 1:2]
    pos_ids = ids_ref[:, 2:3]
    row_batch = ids_ref[:, 3:4]
    col = jax.lax.broadcasted_iota(jnp.int32, (bs, emb_ref.shape[0]), 1)
    hit = ((col == word_ids)
           | (col == VOCAB + pos_ids)
           | (col == VOCAB + MAX_POS + type_ids))
    onehot = jnp.where(hit, 1.0, 0.0).astype(bf16)               # [bs, EMB_ROWS]
    emb_sum = jnp.dot(onehot, emb_ref[...], preferred_element_type=f32)
    h = layernorm(emb_sum, vrow(0), vrow(1))                     # [bs, H] f32
    # TODO(synk): dropout (p=0.4) treated as identity (inference/eval semantics).

    # ---- additive mask: block-diagonal over batch + key padding (one compare)
    addmask = jnp.where(row_batch == keycode_ref[...], 0.0, -1e9).astype(f32)  # [bs,bs]

    for l in range(n_layers):                                    # static unroll
        base = 2 + 6 * l
        hb = h.astype(bf16)
        attn = jnp.zeros((bs, hidden), f32)
        for hd in range(n_heads):
            iq, ik, iv = 3 * hd, 3 * hd + 1, 3 * hd + 2
            # per-head, lane-aligned projection panels (bf16 operands, f32 acc)
            q = jnp.dot(hb, wqkv_ref[l, iq], preferred_element_type=f32) + bqkv_ref[l, iq]
            k = jnp.dot(hb, wqkv_ref[l, ik], preferred_element_type=f32) + bqkv_ref[l, ik]
            v = jnp.dot(hb, wqkv_ref[l, iv], preferred_element_type=f32) + bqkv_ref[l, iv]
            # whole-batch scores with block-diagonal mask (no per-batch loop)
            s = jnp.dot(q.astype(bf16), k.T.astype(bf16),
                        preferred_element_type=f32) * scale + addmask   # [bs,bs]
            s = s - jnp.max(s, axis=-1, keepdims=True)
            p = jnp.exp(s)
            p = p * pl.reciprocal(jnp.sum(p, axis=-1, keepdims=True), approx=True)
            ctx = jnp.dot(p.astype(bf16), v.astype(bf16),
                          preferred_element_type=f32)                    # [bs, dh]
            # heads folded into the output projection (MXU accumulate, no concat)
            attn = attn + jnp.dot(ctx.astype(bf16), wo_ref[l, hd],
                                  preferred_element_type=f32)            # [bs, H]
        h = layernorm(attn + vrow(base + 0) + h, vrow(base + 1), vrow(base + 2))

        inter = jnp.dot(h.astype(bf16), w1_ref[l], preferred_element_type=f32) + b1_ref[l]
        # TODO(synk): HF BERT uses erf-gelu; tanh-approx gelu used here (EUP-friendly).
        inter = jax.nn.gelu(inter, approximate=True)
        ffn = jnp.dot(inter.astype(bf16), w2_ref[l], preferred_element_type=f32)
        h = layernorm(ffn + vrow(base + 3) + h, vrow(base + 4), vrow(base + 5))

    base2 = 2 + 6 * n_layers
    # ---- pooler: first-token selection as a tiny one-hot matmul (no row concat)
    rsel = jax.lax.broadcasted_iota(jnp.int32, (batch, bs), 0) * seq_len
    csel = jax.lax.broadcasted_iota(jnp.int32, (batch, bs), 1)
    sel = jnp.where(rsel == csel, 1.0, 0.0).astype(bf16)                 # [B, bs]
    first = jnp.dot(sel, h.astype(bf16), preferred_element_type=f32)     # [B, H]
    pooled = jnp.tanh(jnp.dot(first.astype(bf16), whead_ref[0],
                              preferred_element_type=f32) + vrow(base2 + 0))
    logits_ref[...] = (jnp.dot(pooled.astype(bf16), whead_ref[1],
                               preferred_element_type=f32) + vrow(base2 + 1))


def _full_spec(shape):
    zeros = (0,) * len(shape)
    return pl.BlockSpec(tuple(shape), lambda i, _z=zeros: _z)


# ---------------- parameters (deterministic synthetic init, packed) ----------------

def init_params(key):
    keys = iter(jax.random.split(key, 64))

    def nrm(shape):
        return jax.random.normal(next(keys), shape, jnp.float32) * 0.02

    # packed embedding table: [word | position | token-type | zero pad] rows
    emb = jnp.zeros((EMB_ROWS, HIDDEN), jnp.float32)
    emb = emb.at[:VOCAB].set(nrm((VOCAB, HIDDEN)))
    emb = emb.at[VOCAB:VOCAB + MAX_POS].set(nrm((MAX_POS, HIDDEN)))
    emb = emb.at[VOCAB + MAX_POS:VOCAB + MAX_POS + TYPE_VOCAB].set(
        nrm((TYPE_VOCAB, HIDDEN)))

    # per-head, lane-aligned Q/K/V panels and per-head output-projection panels
    wqkv = jnp.zeros((N_LAYERS, 3 * N_HEADS, HIDDEN, HEAD_DIM), jnp.float32)
    wo = jnp.zeros((N_LAYERS, N_HEADS, HEAD_DIM, HIDDEN), jnp.float32)
    w1 = jnp.zeros((N_LAYERS, HIDDEN, INTERMEDIATE), jnp.float32)
    w2 = jnp.zeros((N_LAYERS, INTERMEDIATE, HIDDEN), jnp.float32)
    for l in range(N_LAYERS):
        wq_, wk_, wv_ = nrm((HIDDEN, HIDDEN)), nrm((HIDDEN, HIDDEN)), nrm((HIDDEN, HIDDEN))
        wo_ = nrm((HIDDEN, HIDDEN))
        for hd in range(N_HEADS):
            c0 = hd * HEAD_DIM
            wqkv = wqkv.at[l, 3 * hd + 0].set(wq_[:, c0:c0 + HEAD_DIM])
            wqkv = wqkv.at[l, 3 * hd + 1].set(wk_[:, c0:c0 + HEAD_DIM])
            wqkv = wqkv.at[l, 3 * hd + 2].set(wv_[:, c0:c0 + HEAD_DIM])
            wo = wo.at[l, hd].set(wo_[c0:c0 + HEAD_DIM, :])
        w1 = w1.at[l].set(nrm((HIDDEN, INTERMEDIATE)))
        w2 = w2.at[l].set(nrm((INTERMEDIATE, HIDDEN)))

    bqkv = jnp.zeros((N_LAYERS, 3 * N_HEADS, 1, HEAD_DIM), jnp.float32)
    b1 = jnp.zeros((N_LAYERS, 1, INTERMEDIATE), jnp.float32)

    pool_w = nrm((HIDDEN, HIDDEN))
    cls_w_pad = jnp.zeros((HIDDEN, LANE), jnp.float32).at[:, :N_LABELS].set(
        nrm((HIDDEN, N_LABELS)))
    whead = jnp.stack([pool_w, cls_w_pad])                        # [2, H, 128]

    # packed [16, H] slab of all H-wide vector params:
    #   0/1: embedding LN gamma/beta
    #   2+6l .. 7+6l: attn-out bias, LN1 gamma, LN1 beta, ffn-out bias, LN2 gamma, LN2 beta
    #   14/15: pooler bias, (padded) classifier bias
    n_vec = 2 + 6 * N_LAYERS + 2
    vec = jnp.zeros((n_vec, HIDDEN), jnp.float32)
    vec = vec.at[0].set(1.0)                                      # emb LN gamma
    for l in range(N_LAYERS):
        vec = vec.at[2 + 6 * l + 1].set(1.0)                      # LN1 gamma
        vec = vec.at[2 + 6 * l + 4].set(1.0)                      # LN2 gamma

    return {
        "emb": emb.astype(jnp.bfloat16),
        "wqkv": wqkv.astype(jnp.bfloat16),
        "bqkv": bqkv,
        "wo": wo.astype(jnp.bfloat16),
        "w1": w1.astype(jnp.bfloat16),
        "b1": b1,
        "w2": w2.astype(jnp.bfloat16),
        "whead": whead.astype(jnp.bfloat16),
        "vec": vec,
    }


# ---------------- forward (mirrors Classifier_model.forward) ----------------

def classifier_forward(params, input_ids, attention_mask, token_type_ids):
    B_, S_ = input_ids.shape

    # tiny integer glue inputs (word / type / position / batch-row ids); the
    # whole forward (embedding, layers, pooler, classifier) runs in one kernel.
    pos = jnp.tile(jnp.arange(S_, dtype=jnp.int32), B_)
    batch_idx = jnp.repeat(jnp.arange(B_, dtype=jnp.int32), S_)
    ids = jnp.stack([input_ids.reshape(-1).astype(jnp.int32),
                     token_type_ids.reshape(-1).astype(jnp.int32),
                     pos, batch_idx], axis=1)                     # [B*S, 4]
    # key code: batch index where the key is attendable, -1 where padded out
    keycode = jnp.where(attention_mask.reshape(-1) > 0,
                        batch_idx, -1).astype(jnp.int32)[None, :]  # [1, B*S]

    inputs = [ids, keycode,
              params["emb"], params["wqkv"], params["bqkv"], params["wo"],
              params["w1"], params["b1"], params["w2"],
              params["whead"], params["vec"]]

    logits_pad = pl.pallas_call(
        functools.partial(_model_kernel, n_layers=N_LAYERS, n_heads=N_HEADS,
                          seq_len=S_, batch=B_),
        out_shape=jax.ShapeDtypeStruct((B_, LANE), jnp.float32),
        grid=(1,),
        in_specs=[_full_spec(a.shape) for a in inputs],
        out_specs=_full_spec((B_, LANE)),
        compiler_params=pltpu.CompilerParams(
            dimension_semantics=("arbitrary",)),
    )(*inputs)
    return logits_pad[:, :N_LABELS]


if __name__ == "__main__":
    key = jax.random.PRNGKey(0)
    pkey, ikey = jax.random.split(key, 2)
    params = init_params(pkey)

    x = jax.random.randint(ikey, (B, S), 0, VOCAB, dtype=jnp.int32)
    attention_mask = jnp.ones((B, S), jnp.int32).at[1, S - 2:].set(0)
    # third positional arg ("labels" in the PyTorch module) binds to
    # token_type_ids in the HF forward signature:
    labels = jnp.zeros((B, S), jnp.int32)

    logits = classifier_forward(params, x, attention_mask, labels)
    jax.block_until_ready(logits)
    assert logits.shape == (B, N_LABELS) and logits.dtype == jnp.float32
    print("KERNEL_OK")
</pallas_src>

<mosaic_0001>
module attributes {stable_mosaic.version = 11 : i64} {
  func.func @_model_kernel(%arg0: i32, %arg1: memref<16x4xi32, #tpu.memory_space<vmem>>, %arg2: memref<1x16xi32, #tpu.memory_space<vmem>>, %arg3: memref<64x128xbf16, #tpu.memory_space<vmem>>, %arg4: memref<2x6x128x64xbf16, #tpu.memory_space<vmem>>, %arg5: memref<2x6x1x64xf32, #tpu.memory_space<vmem>>, %arg6: memref<2x2x64x128xbf16, #tpu.memory_space<vmem>>, %arg7: memref<2x128x256xbf16, #tpu.memory_space<vmem>>, %arg8: memref<2x1x256xf32, #tpu.memory_space<vmem>>, %arg9: memref<2x256x128xbf16, #tpu.memory_space<vmem>>, %arg10: memref<2x128x128xbf16, #tpu.memory_space<vmem>>, %arg11: memref<16x128xf32, #tpu.memory_space<vmem>>, %arg12: memref<2x128xf32, #tpu.memory_space<vmem>>) attributes {dimension_semantics = [#tpu.dimension_semantics<arbitrary>], iteration_bounds = array<i64: 1>, scalar_prefetch = 0 : i64, scratch_operands = 0 : i64, tpu.core_type = #tpu.core_type<tc>, window_params = [{pipeline_mode = #tpu.pipeline_mode<synchronous>, transform_indices = @transform_0, window_bounds = array<i64: 16, 4>}, {pipeline_mode = #tpu.pipeline_mode<synchronous>, transform_indices = @transform_1, window_bounds = array<i64: 1, 16>}, {pipeline_mode = #tpu.pipeline_mode<synchronous>, transform_indices = @transform_2, window_bounds = array<i64: 64, 128>}, {pipeline_mode = #tpu.pipeline_mode<synchronous>, transform_indices = @transform_3, window_bounds = array<i64: 2, 6, 128, 64>}, {pipeline_mode = #tpu.pipeline_mode<synchronous>, transform_indices = @transform_4, window_bounds = array<i64: 2, 6, 1, 64>}, {pipeline_mode = #tpu.pipeline_mode<synchronous>, transform_indices = @transform_5, window_bounds = array<i64: 2, 2, 64, 128>}, {pipeline_mode = #tpu.pipeline_mode<synchronous>, transform_indices = @transform_6, window_bounds = array<i64: 2, 128, 256>}, {pipeline_mode = #tpu.pipeline_mode<synchronous>, transform_indices = @transform_7, window_bounds = array<i64: 2, 1, 256>}, {pipeline_mode = #tpu.pipeline_mode<synchronous>, transform_indices = @transform_8, window_bounds = array<i64: 2, 256, 128>}, {pipeline_mode = #tpu.pipeline_mode<synchronous>, transform_indices = @transform_9, window_bounds = array<i64: 2, 128, 128>}, {pipeline_mode = #tpu.pipeline_mode<synchronous>, transform_indices = @transform_10, window_bounds = array<i64: 16, 128>}, {pipeline_mode = #tpu.pipeline_mode<synchronous>, transform_indices = @transform_11, window_bounds = array<i64: 2, 128>}]} {
    %c0 = arith.constant 0 : index
    %c0_0 = arith.constant 0 : index
    %0 = vector.load %arg1[%c0, %c0_0] : memref<16x4xi32, #tpu.memory_space<vmem>>, vector<16x1xi32>
    %c0_1 = arith.constant 0 : index
    %c1 = arith.constant 1 : index
    %1 = vector.load %arg1[%c0_1, %c1] : memref<16x4xi32, #tpu.memory_space<vmem>>, vector<16x1xi32>
    %c0_2 = arith.constant 0 : index
    %c2 = arith.constant 2 : index
    %2 = vector.load %arg1[%c0_2, %c2] : memref<16x4xi32, #tpu.memory_space<vmem>>, vector<16x1xi32>
    %c0_3 = arith.constant 0 : index
    %c3 = arith.constant 3 : index
    %3 = vector.load %arg1[%c0_3, %c3] : memref<16x4xi32, #tpu.memory_space<vmem>>, vector<16x1xi32>
    %4 = tpu.iota {dimensions = array<i32: 1>} : vector<16x64xi32>
    %5 = vector.broadcast %0 : vector<16x1xi32> to vector<16x64xi32>
    %6 = arith.cmpi eq, %4, %5 : vector<16x64xi32>
    %c32_i32 = arith.constant 32 : i32
    %7 = vector.broadcast %c32_i32 : i32 to vector<16x1xi32>
    %8 = arith.addi %7, %2 : vector<16x1xi32>
    %9 = vector.broadcast %8 : vector<16x1xi32> to vector<16x64xi32>
    %10 = arith.cmpi eq, %4, %9 : vector<16x64xi32>
    %11 = arith.ori %6, %10 : vector<16x64xi1>
    %c48_i32 = arith.constant 48 : i32
    %12 = vector.broadcast %c48_i32 : i32 to vector<16x1xi32>
    %13 = arith.addi %12, %1 : vector<16x1xi32>
    %14 = vector.broadcast %13 : vector<16x1xi32> to vector<16x64xi32>
    %15 = arith.cmpi eq, %4, %14 : vector<16x64xi32>
    %16 = arith.ori %11, %15 : vector<16x64xi1>
    %cst = arith.constant 1.000000e+00 : f32
    %cst_4 = arith.constant 0.000000e+00 : f32
    %17 = vector.broadcast %cst : f32 to vector<16x64xf32>
    %18 = vector.broadcast %cst_4 : f32 to vector<16x64xf32>
    %19 = arith.select %16, %17, %18 : vector<16x64xi1>, vector<16x64xf32>
    %20 = arith.truncf %19 : vector<16x64xf32> to vector<16x64xbf16>
    %c0_5 = arith.constant 0 : index
    %c0_6 = arith.constant 0 : index
    %21 = vector.load %arg3[%c0_5, %c0_6] : memref<64x128xbf16, #tpu.memory_space<vmem>>, vector<64x128xbf16>
    %cst_7 = arith.constant dense<0.000000e+00> : vector<16x128xf32>
    %22 = tpu.matmul %20, %21, %cst_7 {dimension_numbers = #tpu.dot_dimension_numbers<[1], [0], [0], [1], [0, 0, 1, 1], [], []>} : vector<16x64xbf16>, vector<64x128xbf16>, vector<16x128xf32> -> vector<16x128xf32>
    %c0_8 = arith.constant 0 : index
    %c0_9 = arith.constant 0 : index
    %23 = vector.load %arg11[%c0_8, %c0_9] : memref<16x128xf32, #tpu.memory_space<vmem>>, vector<1x128xf32>
    %c1_10 = arith.constant 1 : index
    %c0_11 = arith.constant 0 : index
    %24 = vector.load %arg11[%c1_10, %c0_11] : memref<16x128xf32, #tpu.memory_space<vmem>>, vector<1x128xf32>
    %cst_12 = arith.constant dense<0.000000e+00> : vector<16xf32>
    %25 = vector.multi_reduction <add>, %22, %cst_12 [1] : vector<16x128xf32> to vector<16xf32>
    %26 = vector.shape_cast %25 : vector<16xf32> to vector<16x1xf32>
    %cst_13 = arith.constant 1.280000e+02 : f32
    %27 = vector.broadcast %cst_13 : f32 to vector<16x1xf32>
    %28 = arith.divf %26, %27 : vector<16x1xf32>
    %29 = arith.mulf %22, %22 : vector<16x128xf32>
    %cst_14 = arith.constant dense<0.000000e+00> : vector<16xf32>
    %30 = vector.multi_reduction <add>, %29, %cst_14 [1] : vector<16x128xf32> to vector<16xf32>
    %31 = vector.shape_cast %30 : vector<16xf32> to vector<16x1xf32>
    %cst_15 = arith.constant 1.280000e+02 : f32
    %32 = vector.broadcast %cst_15 : f32 to vector<16x1xf32>
    %33 = arith.divf %31, %32 : vector<16x1xf32>
    %34 = arith.mulf %28, %28 : vector<16x1xf32>
    %35 = arith.subf %33, %34 : vector<16x1xf32>
    %36 = vector.broadcast %28 : vector<16x1xf32> to vector<16x128xf32>
    %37 = arith.subf %22, %36 : vector<16x128xf32>
    %cst_16 = arith.constant 9.99999996E-13 : f32
    %38 = vector.broadcast %cst_16 : f32 to vector<16x1xf32>
    %39 = arith.addf %35, %38 : vector<16x1xf32>
    %40 = math.rsqrt %39 : vector<16x1xf32>
    %41 = vector.broadcast %40 : vector<16x1xf32> to vector<16x128xf32>
    %42 = arith.mulf %37, %41 : vector<16x128xf32>
    %43 = vector.broadcast %23 : vector<1x128xf32> to vector<16x128xf32>
    %44 = arith.mulf %42, %43 : vector<16x128xf32>
    %45 = vector.broadcast %24 : vector<1x128xf32> to vector<16x128xf32>
    %46 = arith.addf %44, %45 : vector<16x128xf32>
    %c0_17 = arith.constant 0 : index
    %c0_18 = arith.constant 0 : index
    %47 = vector.load %arg2[%c0_17, %c0_18] : memref<1x16xi32, #tpu.memory_space<vmem>>, vector<1x16xi32>
    %48 = vector.broadcast %3 : vector<16x1xi32> to vector<16x16xi32>
    %49 = vector.broadcast %47 : vector<1x16xi32> to vector<16x16xi32>
    %50 = arith.cmpi eq, %48, %49 : vector<16x16xi32>
    %cst_19 = arith.constant 0.000000e+00 : f32
    %cst_20 = arith.constant -1.000000e+09 : f32
    %51 = vector.broadcast %cst_19 : f32 to vector<16x16xf32>
    %52 = vector.broadcast %cst_20 : f32 to vector<16x16xf32>
    %53 = arith.select %50, %51, %52 : vector<16x16xi1>, vector<16x16xf32>
    %54 = arith.truncf %46 : vector<16x128xf32> to vector<16x128xbf16>
    %cst_21 = arith.constant 0.000000e+00 : f32
    %55 = vector.broadcast %cst_21 : f32 to vector<16x128xf32>
    %c0_22 = arith.constant 0 : index
    %c0_23 = arith.constant 0 : index
    %c0_24 = arith.constant 0 : index
    %c0_25 = arith.constant 0 : index
    %56 = vector.load %arg4[%c0_22, %c0_23, %c0_24, %c0_25] : memref<2x6x128x64xbf16, #tpu.memory_space<vmem>>, vector<1x1x128x64xbf16>
    %57 = vector.shape_cast %56 : vector<1x1x128x64xbf16> to vector<128x64xbf16>
    %cst_26 = arith.constant dense<0.000000e+00> : vector<16x64xf32>
    %58 = tpu.matmul %54, %57, %cst_26 {dimension_numbers = #tpu.dot_dimension_numbers<[1], [0], [0], [1], [0, 0, 1, 1], [], []>} : vector<16x128xbf16>, vector<128x64xbf16>, vector<16x64xf32> -> vector<16x64xf32>
    %c0_27 = arith.constant 0 : index
    %c0_28 = arith.constant 0 : index
    %c0_29 = arith.constant 0 : index
    %c0_30 = arith.constant 0 : index
    %59 = vector.load %arg5[%c0_27, %c0_28, %c0_29, %c0_30] : memref<2x6x1x64xf32, #tpu.memory_space<vmem>>, vector<1x1x1x64xf32>
    %60 = vector.shape_cast %59 : vector<1x1x1x64xf32> to vector<1x64xf32>
    %61 = vector.broadcast %60 : vector<1x64xf32> to vector<16x64xf32>
    %62 = arith.addf %58, %61 : vector<16x64xf32>
    %c0_31 = arith.constant 0 : index
    %c1_32 = arith.constant 1 : index
    %c0_33 = arith.constant 0 : index
    %c0_34 = arith.constant 0 : index
    %63 = vector.load %arg4[%c0_31, %c1_32, %c0_33, %c0_34] : memref<2x6x128x64xbf16, #tpu.memory_space<vmem>>, vector<1x1x128x64xbf16>
    %64 = vector.shape_cast %63 : vector<1x1x128x64xbf16> to vector<128x64xbf16>
    %cst_35 = arith.constant dense<0.000000e+00> : vector<16x64xf32>
    %65 = tpu.matmul %54, %64, %cst_35 {dimension_numbers = #tpu.dot_dimension_numbers<[1], [0], [0], [1], [0, 0, 1, 1], [], []>} : vector<16x128xbf16>, vector<128x64xbf16>, vector<16x64xf32> -> vector<16x64xf32>
    %c0_36 = arith.constant 0 : index
    %c1_37 = arith.constant 1 : index
    %c0_38 = arith.constant 0 : index
    %c0_39 = arith.constant 0 : index
    %66 = vector.load %arg5[%c0_36, %c1_37, %c0_38, %c0_39] : memref<2x6x1x64xf32, #tpu.memory_space<vmem>>, vector<1x1x1x64xf32>
    %67 = vector.shape_cast %66 : vector<1x1x1x64xf32> to vector<1x64xf32>
    %68 = vector.broadcast %67 : vector<1x64xf32> to vector<16x64xf32>
    %69 = arith.addf %65, %68 : vector<16x64xf32>
    %c0_40 = arith.constant 0 : index
    %c2_41 = arith.constant 2 : index
    %c0_42 = arith.constant 0 : index
    %c0_43 = arith.constant 0 : index
    %70 = vector.load %arg4[%c0_40, %c2_41, %c0_42, %c0_43] : memref<2x6x128x64xbf16, #tpu.memory_space<vmem>>, vector<1x1x128x64xbf16>
    %71 = vector.shape_cast %70 : vector<1x1x128x64xbf16> to vector<128x64xbf16>
    %cst_44 = arith.constant dense<0.000000e+00> : vector<16x64xf32>
    %72 = tpu.matmul %54, %71, %cst_44 {dimension_numbers = #tpu.dot_dimension_numbers<[1], [0], [0], [1], [0, 0, 1, 1], [], []>} : vector<16x128xbf16>, vector<128x64xbf16>, vector<16x64xf32> -> vector<16x64xf32>
    %c0_45 = arith.constant 0 : index
    %c2_46 = arith.constant 2 : index
    %c0_47 = arith.constant 0 : index
    %c0_48 = arith.constant 0 : index
    %73 = vector.load %arg5[%c0_45, %c2_46, %c0_47, %c0_48] : memref<2x6x1x64xf32, #tpu.memory_space<vmem>>, vector<1x1x1x64xf32>
    %74 = vector.shape_cast %73 : vector<1x1x1x64xf32> to vector<1x64xf32>
    %75 = vector.broadcast %74 : vector<1x64xf32> to vector<16x64xf32>
    %76 = arith.addf %72, %75 : vector<16x64xf32>
    %77 = arith.truncf %62 : vector<16x64xf32> to vector<16x64xbf16>
    %78 = tpu.transpose %69, [1, 0] : vector<16x64xf32> -> vector<64x16xf32>
    %79 = arith.truncf %78 : vector<64x16xf32> to vector<64x16xbf16>
    %cst_49 = arith.constant dense<0.000000e+00> : vector<16x16xf32>
    %80 = tpu.matmul %77, %79, %cst_49 {dimension_numbers = #tpu.dot_dimension_numbers<[1], [0], [0], [1], [0, 0, 1, 1], [], []>} : vector<16x64xbf16>, vector<64x16xbf16>, vector<16x16xf32> -> vector<16x16xf32>
    %cst_50 = arith.constant 1.250000e-01 : f32
    %81 = vector.broadcast %cst_50 : f32 to vector<16x16xf32>
    %82 = arith.mulf %80, %81 : vector<16x16xf32>
    %83 = arith.addf %82, %53 : vector<16x16xf32>
    %cst_51 = arith.constant dense<0xFF800000> : vector<16xf32>
    %84 = vector.multi_reduction <maximumf>, %83, %cst_51 [1] : vector<16x16xf32> to vector<16xf32>
    %85 = vector.shape_cast %84 : vector<16xf32> to vector<16x1xf32>
    %86 = vector.broadcast %85 : vector<16x1xf32> to vector<16x16xf32>
    %87 = arith.subf %83, %86 : vector<16x16xf32>
    %88 = math.exp %87 : vector<16x16xf32>
    %cst_52 = arith.constant dense<0.000000e+00> : vector<16xf32>
    %89 = vector.multi_reduction <add>, %88, %cst_52 [1] : vector<16x16xf32> to vector<16xf32>
    %90 = vector.shape_cast %89 : vector<16xf32> to vector<16x1xf32>
    %91 = tpu.reciprocal %90 {approx = true} : vector<16x1xf32> -> vector<16x1xf32>
    %92 = vector.broadcast %91 : vector<16x1xf32> to vector<16x16xf32>
    %93 = arith.mulf %88, %92 : vector<16x16xf32>
    %94 = arith.truncf %93 : vector<16x16xf32> to vector<16x16xbf16>
    %95 = arith.truncf %76 : vector<16x64xf32> to vector<16x64xbf16>
    %cst_53 = arith.constant dense<0.000000e+00> : vector<16x64xf32>
    %96 = tpu.matmul %94, %95, %cst_53 {dimension_numbers = #tpu.dot_dimension_numbers<[1], [0], [0], [1], [0, 0, 1, 1], [], []>} : vector<16x16xbf16>, vector<16x64xbf16>, vector<16x64xf32> -> vector<16x64xf32>
    %97 = arith.truncf %96 : vector<16x64xf32> to vector<16x64xbf16>
    %c0_54 = arith.constant 0 : index
    %c0_55 = arith.constant 0 : index
    %c0_56 = arith.constant 0 : index
    %c0_57 = arith.constant 0 : index
    %98 = vector.load %arg6[%c0_54, %c0_55, %c0_56, %c0_57] : memref<2x2x64x128xbf16, #tpu.memory_space<vmem>>, vector<1x1x64x128xbf16>
    %99 = vector.shape_cast %98 : vector<1x1x64x128xbf16> to vector<64x128xbf16>
    %cst_58 = arith.constant dense<0.000000e+00> : vector<16x128xf32>
    %100 = tpu.matmul %97, %99, %cst_58 {dimension_numbers = #tpu.dot_dimension_numbers<[1], [0], [0], [1], [0, 0, 1, 1], [], []>} : vector<16x64xbf16>, vector<64x128xbf16>, vector<16x128xf32> -> vector<16x128xf32>
    %101 = arith.addf %55, %100 : vector<16x128xf32>
    %c0_59 = arith.constant 0 : index
    %c3_60 = arith.constant 3 : index
    %c0_61 = arith.constant 0 : index
    %c0_62 = arith.constant 0 : index
    %102 = vector.load %arg4[%c0_59, %c3_60, %c0_61, %c0_62] : memref<2x6x128x64xbf16, #tpu.memory_space<vmem>>, vector<1x1x128x64xbf16>
    %103 = vector.shape_cast %102 : vector<1x1x128x64xbf16> to vector<128x64xbf16>
    %cst_63 = arith.constant dense<0.000000e+00> : vector<16x64xf32>
    %104 = tpu.matmul %54, %103, %cst_63 {dimension_numbers = #tpu.dot_dimension_numbers<[1], [0], [0], [1], [0, 0, 1, 1], [], []>} : vector<16x128xbf16>, vector<128x64xbf16>, vector<16x64xf32> -> vector<16x64xf32>
    %c0_64 = arith.constant 0 : index
    %c3_65 = arith.constant 3 : index
    %c0_66 = arith.constant 0 : index
    %c0_67 = arith.constant 0 : index
    %105 = vector.load %arg5[%c0_64, %c3_65, %c0_66, %c0_67] : memref<2x6x1x64xf32, #tpu.memory_space<vmem>>, vector<1x1x1x64xf32>
    %106 = vector.shape_cast %105 : vector<1x1x1x64xf32> to vector<1x64xf32>
    %107 = vector.broadcast %106 : vector<1x64xf32> to vector<16x64xf32>
    %108 = arith.addf %104, %107 : vector<16x64xf32>
    %c0_68 = arith.constant 0 : index
    %c4 = arith.constant 4 : index
    %c0_69 = arith.constant 0 : index
    %c0_70 = arith.constant 0 : index
    %109 = vector.load %arg4[%c0_68, %c4, %c0_69, %c0_70] : memref<2x6x128x64xbf16, #tpu.memory_space<vmem>>, vector<1x1x128x64xbf16>
    %110 = vector.shape_cast %109 : vector<1x1x128x64xbf16> to vector<128x64xbf16>
    %cst_71 = arith.constant dense<0.000000e+00> : vector<16x64xf32>
    %111 = tpu.matmul %54, %110, %cst_71 {dimension_numbers = #tpu.dot_dimension_numbers<[1], [0], [0], [1], [0, 0, 1, 1], [], []>} : vector<16x128xbf16>, vector<128x64xbf16>, vector<16x64xf32> -> vector<16x64xf32>
    %c0_72 = arith.constant 0 : index
    %c4_73 = arith.constant 4 : index
    %c0_74 = arith.constant 0 : index
    %c0_75 = arith.constant 0 : index
    %112 = vector.load %arg5[%c0_72, %c4_73, %c0_74, %c0_75] : memref<2x6x1x64xf32, #tpu.memory_space<vmem>>, vector<1x1x1x64xf32>
    %113 = vector.shape_cast %112 : vector<1x1x1x64xf32> to vector<1x64xf32>
    %114 = vector.broadcast %113 : vector<1x64xf32> to vector<16x64xf32>
    %115 = arith.addf %111, %114 : vector<16x64xf32>
    %c0_76 = arith.constant 0 : index
    %c5 = arith.constant 5 : index
    %c0_77 = arith.constant 0 : index
    %c0_78 = arith.constant 0 : index
    %116 = vector.load %arg4[%c0_76, %c5, %c0_77, %c0_78] : memref<2x6x128x64xbf16, #tpu.memory_space<vmem>>, vector<1x1x128x64xbf16>
    %117 = vector.shape_cast %116 : vector<1x1x128x64xbf16> to vector<128x64xbf16>
    %cst_79 = arith.constant dense<0.000000e+00> : vector<16x64xf32>
    %118 = tpu.matmul %54, %117, %cst_79 {dimension_numbers = #tpu.dot_dimension_numbers<[1], [0], [0], [1], [0, 0, 1, 1], [], []>} : vector<16x128xbf16>, vector<128x64xbf16>, vector<16x64xf32> -> vector<16x64xf32>
    %c0_80 = arith.constant 0 : index
    %c5_81 = arith.constant 5 : index
    %c0_82 = arith.constant 0 : index
    %c0_83 = arith.constant 0 : index
    %119 = vector.load %arg5[%c0_80, %c5_81, %c0_82, %c0_83] : memref<2x6x1x64xf32, #tpu.memory_space<vmem>>, vector<1x1x1x64xf32>
    %120 = vector.shape_cast %119 : vector<1x1x1x64xf32> to vector<1x64xf32>
    %121 = vector.broadcast %120 : vector<1x64xf32> to vector<16x64xf32>
    %122 = arith.addf %118, %121 : vector<16x64xf32>
    %123 = arith.truncf %108 : vector<16x64xf32> to vector<16x64xbf16>
    %124 = tpu.transpose %115, [1, 0] : vector<16x64xf32> -> vector<64x16xf32>
    %125 = arith.truncf %124 : vector<64x16xf32> to vector<64x16xbf16>
    %cst_84 = arith.constant dense<0.000000e+00> : vector<16x16xf32>
    %126 = tpu.matmul %123, %125, %cst_84 {dimension_numbers = #tpu.dot_dimension_numbers<[1], [0], [0], [1], [0, 0, 1, 1], [], []>} : vector<16x64xbf16>, vector<64x16xbf16>, vector<16x16xf32> -> vector<16x16xf32>
    %cst_85 = arith.constant 1.250000e-01 : f32
    %127 = vector.broadcast %cst_85 : f32 to vector<16x16xf32>
    %128 = arith.mulf %126, %127 : vector<16x16xf32>
    %129 = arith.addf %128, %53 : vector<16x16xf32>
    %cst_86 = arith.constant dense<0xFF800000> : vector<16xf32>
    %130 = vector.multi_reduction <maximumf>, %129, %cst_86 [1] : vector<16x16xf32> to vector<16xf32>
    %131 = vector.shape_cast %130 : vector<16xf32> to vector<16x1xf32>
    %132 = vector.broadcast %131 : vector<16x1xf32> to vector<16x16xf32>
    %133 = arith.subf %129, %132 : vector<16x16xf32>
    %134 = math.exp %133 : vector<16x16xf32>
    %cst_87 = arith.constant dense<0.000000e+00> : vector<16xf32>
    %135 = vector.multi_reduction <add>, %134, %cst_87 [1] : vector<16x16xf32> to vector<16xf32>
    %136 = vector.shape_cast %135 : vector<16xf32> to vector<16x1xf32>
    %137 = tpu.reciprocal %136 {approx = true} : vector<16x1xf32> -> vector<16x1xf32>
    %138 = vector.broadcast %137 : vector<16x1xf32> to vector<16x16xf32>
    %139 = arith.mulf %134, %138 : vector<16x16xf32>
    %140 = arith.truncf %139 : vector<16x16xf32> to vector<16x16xbf16>
    %141 = arith.truncf %122 : vector<16x64xf32> to vector<16x64xbf16>
    %cst_88 = arith.constant dense<0.000000e+00> : vector<16x64xf32>
    %142 = tpu.matmul %140, %141, %cst_88 {dimension_numbers = #tpu.dot_dimension_numbers<[1], [0], [0], [1], [0, 0, 1, 1], [], []>} : vector<16x16xbf16>, vector<16x64xbf16>, vector<16x64xf32> -> vector<16x64xf32>
    %143 = arith.truncf %142 : vector<16x64xf32> to vector<16x64xbf16>
    %c0_89 = arith.constant 0 : index
    %c1_90 = arith.constant 1 : index
    %c0_91 = arith.constant 0 : index
    %c0_92 = arith.constant 0 : index
    %144 = vector.load %arg6[%c0_89, %c1_90, %c0_91, %c0_92] : memref<2x2x64x128xbf16, #tpu.memory_space<vmem>>, vector<1x1x64x128xbf16>
    %145 = vector.shape_cast %144 : vector<1x1x64x128xbf16> to vector<64x128xbf16>
    %cst_93 = arith.constant dense<0.000000e+00> : vector<16x128xf32>
    %146 = tpu.matmul %143, %145, %cst_93 {dimension_numbers = #tpu.dot_dimension_numbers<[1], [0], [0], [1], [0, 0, 1, 1], [], []>} : vector<16x64xbf16>, vector<64x128xbf16>, vector<16x128xf32> -> vector<16x128xf32>
    %147 = arith.addf %101, %146 : vector<16x128xf32>
    %c2_94 = arith.constant 2 : index
    %c0_95 = arith.constant 0 : index
    %148 = vector.load %arg11[%c2_94, %c0_95] : memref<16x128xf32, #tpu.memory_space<vmem>>, vector<1x128xf32>
    %149 = vector.broadcast %148 : vector<1x128xf32> to vector<16x128xf32>
    %150 = arith.addf %147, %149 : vector<16x128xf32>
    %151 = arith.addf %150, %46 : vector<16x128xf32>
    %c3_96 = arith.constant 3 : index
    %c0_97 = arith.constant 0 : index
    %152 = vector.load %arg11[%c3_96, %c0_97] : memref<16x128xf32, #tpu.memory_space<vmem>>, vector<1x128xf32>
    %c4_98 = arith.constant 4 : index
    %c0_99 = arith.constant 0 : index
    %153 = vector.load %arg11[%c4_98, %c0_99] : memref<16x128xf32, #tpu.memory_space<vmem>>, vector<1x128xf32>
    %cst_100 = arith.constant dense<0.000000e+00> : vector<16xf32>
    %154 = vector.multi_reduction <add>, %151, %cst_100 [1] : vector<16x128xf32> to vector<16xf32>
    %155 = vector.shape_cast %154 : vector<16xf32> to vector<16x1xf32>
    %cst_101 = arith.constant 1.280000e+02 : f32
    %156 = vector.broadcast %cst_101 : f32 to vector<16x1xf32>
    %157 = arith.divf %155, %156 : vector<16x1xf32>
    %158 = arith.mulf %151, %151 : vector<16x128xf32>
    %cst_102 = arith.constant dense<0.000000e+00> : vector<16xf32>
    %159 = vector.multi_reduction <add>, %158, %cst_102 [1] : vector<16x128xf32> to vector<16xf32>
    %160 = vector.shape_cast %159 : vector<16xf32> to vector<16x1xf32>
    %cst_103 = arith.constant 1.280000e+02 : f32
    %161 = vector.broadcast %cst_103 : f32 to vector<16x1xf32>
    %162 = arith.divf %160, %161 : vector<16x1xf32>
    %163 = arith.mulf %157, %157 : vector<16x1xf32>
    %164 = arith.subf %162, %163 : vector<16x1xf32>
    %165 = vector.broadcast %157 : vector<16x1xf32> to vector<16x128xf32>
    %166 = arith.subf %151, %165 : vector<16x128xf32>
    %cst_104 = arith.constant 9.99999996E-13 : f32
    %167 = vector.broadcast %cst_104 : f32 to vector<16x1xf32>
    %168 = arith.addf %164, %167 : vector<16x1xf32>
    %169 = math.rsqrt %168 : vector<16x1xf32>
    %170 = vector.broadcast %169 : vector<16x1xf32> to vector<16x128xf32>
    %171 = arith.mulf %166, %170 : vector<16x128xf32>
    %172 = vector.broadcast %152 : vector<1x128xf32> to vector<16x128xf32>
    %173 = arith.mulf %171, %172 : vector<16x128xf32>
    %174 = vector.broadcast %153 : vector<1x128xf32> to vector<16x128xf32>
    %175 = arith.addf %173, %174 : vector<16x128xf32>
    %176 = arith.truncf %175 : vector<16x128xf32> to vector<16x128xbf16>
    %c0_105 = arith.constant 0 : index
    %c0_106 = arith.constant 0 : index
    %c0_107 = arith.constant 0 : index
    %177 = vector.load %arg7[%c0_105, %c0_106, %c0_107] : memref<2x128x256xbf16, #tpu.memory_space<vmem>>, vector<1x128x256xbf16>
    %178 = vector.shape_cast %177 : vector<1x128x256xbf16> to vector<128x256xbf16>
    %cst_108 = arith.constant dense<0.000000e+00> : vector<16x256xf32>
    %179 = tpu.matmul %176, %178, %cst_108 {dimension_numbers = #tpu.dot_dimension_numbers<[1], [0], [0], [1], [0, 0, 1, 1], [], []>} : vector<16x128xbf16>, vector<128x256xbf16>, vector<16x256xf32> -> vector<16x256xf32>
    %c0_109 = arith.constant 0 : index
    %c0_110 = arith.constant 0 : index
    %c0_111 = arith.constant 0 : index
    %180 = vector.load %arg8[%c0_109, %c0_110, %c0_111] : memref<2x1x256xf32, #tpu.memory_space<vmem>>, vector<1x1x256xf32>
    %181 = vector.shape_cast %180 : vector<1x1x256xf32> to vector<1x256xf32>
    %182 = vector.broadcast %181 : vector<1x256xf32> to vector<16x256xf32>
    %183 = arith.addf %179, %182 : vector<16x256xf32>
    %184 = arith.mulf %183, %183 : vector<16x256xf32>
    %185 = arith.mulf %183, %184 : vector<16x256xf32>
    %cst_112 = arith.constant 4.471500e-02 : f32
    %186 = vector.broadcast %cst_112 : f32 to vector<16x256xf32>
    %187 = arith.mulf %186, %185 : vector<16x256xf32>
    %188 = arith.addf %183, %187 : vector<16x256xf32>
    %cst_113 = arith.constant 0.797884583 : f32
    %189 = vector.broadcast %cst_113 : f32 to vector<16x256xf32>
    %190 = arith.mulf %189, %188 : vector<16x256xf32>
    %191 = math.tanh %190 : vector<16x256xf32>
    %cst_114 = arith.constant 1.000000e+00 : f32
    %192 = vector.broadcast %cst_114 : f32 to vector<16x256xf32>
    %193 = arith.addf %192, %191 : vector<16x256xf32>
    %cst_115 = arith.constant 5.000000e-01 : f32
    %194 = vector.broadcast %cst_115 : f32 to vector<16x256xf32>
    %195 = arith.mulf %194, %193 : vector<16x256xf32>
    %196 = arith.mulf %183, %195 : vector<16x256xf32>
    %197 = arith.truncf %196 : vector<16x256xf32> to vector<16x256xbf16>
    %c0_116 = arith.constant 0 : index
    %c0_117 = arith.constant 0 : index
    %c0_118 = arith.constant 0 : index
    %198 = vector.load %arg9[%c0_116, %c0_117, %c0_118] : memref<2x256x128xbf16, #tpu.memory_space<vmem>>, vector<1x256x128xbf16>
    %199 = vector.shape_cast %198 : vector<1x256x128xbf16> to vector<256x128xbf16>
    %cst_119 = arith.constant dense<0.000000e+00> : vector<16x128xf32>
    %200 = tpu.matmul %197, %199, %cst_119 {dimension_numbers = #tpu.dot_dimension_numbers<[1], [0], [0], [1], [0, 0, 1, 1], [], []>} : vector<16x256xbf16>, vector<256x128xbf16>, vector<16x128xf32> -> vector<16x128xf32>
    %c5_120 = arith.constant 5 : index
    %c0_121 = arith.constant 0 : index
    %201 = vector.load %arg11[%c5_120, %c0_121] : memref<16x128xf32, #tpu.memory_space<vmem>>, vector<1x128xf32>
    %202 = vector.broadcast %201 : vector<1x128xf32> to vector<16x128xf32>
    %203 = arith.addf %200, %202 : vector<16x128xf32>
    %204 = arith.addf %203, %175 : vector<16x128xf32>
    %c6 = arith.constant 6 : index
    %c0_122 = arith.constant 0 : index
    %205 = vector.load %arg11[%c6, %c0_122] : memref<16x128xf32, #tpu.memory_space<vmem>>, vector<1x128xf32>
    %c7 = arith.constant 7 : index
    %c0_123 = arith.constant 0 : index
    %206 = vector.load %arg11[%c7, %c0_123] : memref<16x128xf32, #tpu.memory_space<vmem>>, vector<1x128xf32>
    %cst_124 = arith.constant dense<0.000000e+00> : vector<16xf32>
    %207 = vector.multi_reduction <add>, %204, %cst_124 [1] : vector<16x128xf32> to vector<16xf32>
    %208 = vector.shape_cast %207 : vector<16xf32> to vector<16x1xf32>
    %cst_125 = arith.constant 1.280000e+02 : f32
    %209 = vector.broadcast %cst_125 : f32 to vector<16x1xf32>
    %210 = arith.divf %208, %209 : vector<16x1xf32>
    %211 = arith.mulf %204, %204 : vector<16x128xf32>
    %cst_126 = arith.constant dense<0.000000e+00> : vector<16xf32>
    %212 = vector.multi_reduction <add>, %211, %cst_126 [1] : vector<16x128xf32> to vector<16xf32>
    %213 = vector.shape_cast %212 : vector<16xf32> to vector<16x1xf32>
    %cst_127 = arith.constant 1.280000e+02 : f32
    %214 = vector.broadcast %cst_127 : f32 to vector<16x1xf32>
    %215 = arith.divf %213, %214 : vector<16x1xf32>
    %216 = arith.mulf %210, %210 : vector<16x1xf32>
    %217 = arith.subf %215, %216 : vector<16x1xf32>
    %218 = vector.broadcast %210 : vector<16x1xf32> to vector<16x128xf32>
    %219 = arith.subf %204, %218 : vector<16x128xf32>
    %cst_128 = arith.constant 9.99999996E-13 : f32
    %220 = vector.broadcast %cst_128 : f32 to vector<16x1xf32>
    %221 = arith.addf %217, %220 : vector<16x1xf32>
    %222 = math.rsqrt %221 : vector<16x1xf32>
    %223 = vector.broadcast %222 : vector<16x1xf32> to vector<16x128xf32>
    %224 = arith.mulf %219, %223 : vector<16x128xf32>
    %225 = vector.broadcast %205 : vector<1x128xf32> to vector<16x128xf32>
    %226 = arith.mulf %224, %225 : vector<16x128xf32>
    %227 = vector.broadcast %206 : vector<1x128xf32> to vector<16x128xf32>
    %228 = arith.addf %226, %227 : vector<16x128xf32>
    %229 = arith.truncf %228 : vector<16x128xf32> to vector<16x128xbf16>
    %cst_129 = arith.constant 0.000000e+00 : f32
    %230 = vector.broadcast %cst_129 : f32 to vector<16x128xf32>
    %c1_130 = arith.constant 1 : index
    %c0_131 = arith.constant 0 : index
    %c0_132 = arith.constant 0 : index
    %c0_133 = arith.constant 0 : index
    %231 = vector.load %arg4[%c1_130, %c0_131, %c0_132, %c0_133] : memref<2x6x128x64xbf16, #tpu.memory_space<vmem>>, vector<1x1x128x64xbf16>
    %232 = vector.shape_cast %231 : vector<1x1x128x64xbf16> to vector<128x64xbf16>
    %cst_134 = arith.constant dense<0.000000e+00> : vector<16x64xf32>
    %233 = tpu.matmul %229, %232, %cst_134 {dimension_numbers = #tpu.dot_dimension_numbers<[1], [0], [0], [1], [0, 0, 1, 1], [], []>} : vector<16x128xbf16>, vector<128x64xbf16>, vector<16x64xf32> -> vector<16x64xf32>
    %c1_135 = arith.constant 1 : index
    %c0_136 = arith.constant 0 : index
    %c0_137 = arith.constant 0 : index
    %c0_138 = arith.constant 0 : index
    %234 = vector.load %arg5[%c1_135, %c0_136, %c0_137, %c0_138] : memref<2x6x1x64xf32, #tpu.memory_space<vmem>>, vector<1x1x1x64xf32>
    %235 = vector.shape_cast %234 : vector<1x1x1x64xf32> to vector<1x64xf32>
    %236 = vector.broadcast %235 : vector<1x64xf32> to vector<16x64xf32>
    %237 = arith.addf %233, %236 : vector<16x64xf32>
    %c1_139 = arith.constant 1 : index
    %c1_140 = arith.constant 1 : index
    %c0_141 = arith.constant 0 : index
    %c0_142 = arith.constant 0 : index
    %238 = vector.load %arg4[%c1_139, %c1_140, %c0_141, %c0_142] : memref<2x6x128x64xbf16, #tpu.memory_space<vmem>>, vector<1x1x128x64xbf16>
    %239 = vector.shape_cast %238 : vector<1x1x128x64xbf16> to vector<128x64xbf16>
    %cst_143 = arith.constant dense<0.000000e+00> : vector<16x64xf32>
    %240 = tpu.matmul %229, %239, %cst_143 {dimension_numbers = #tpu.dot_dimension_numbers<[1], [0], [0], [1], [0, 0, 1, 1], [], []>} : vector<16x128xbf16>, vector<128x64xbf16>, vector<16x64xf32> -> vector<16x64xf32>
    %c1_144 = arith.constant 1 : index
    %c1_145 = arith.constant 1 : index
    %c0_146 = arith.constant 0 : index
    %c0_147 = arith.constant 0 : index
    %241 = vector.load %arg5[%c1_144, %c1_145, %c0_146, %c0_147] : memref<2x6x1x64xf32, #tpu.memory_space<vmem>>, vector<1x1x1x64xf32>
    %242 = vector.shape_cast %241 : vector<1x1x1x64xf32> to vector<1x64xf32>
    %243 = vector.broadcast %242 : vector<1x64xf32> to vector<16x64xf32>
    %244 = arith.addf %240, %243 : vector<16x64xf32>
    %c1_148 = arith.constant 1 : index
    %c2_149 = arith.constant 2 : index
    %c0_150 = arith.constant 0 : index
    %c0_151 = arith.constant 0 : index
    %245 = vector.load %arg4[%c1_148, %c2_149, %c0_150, %c0_151] : memref<2x6x128x64xbf16, #tpu.memory_space<vmem>>, vector<1x1x128x64xbf16>
    %246 = vector.shape_cast %245 : vector<1x1x128x64xbf16> to vector<128x64xbf16>
    %cst_152 = arith.constant dense<0.000000e+00> : vector<16x64xf32>
    %247 = tpu.matmul %229, %246, %cst_152 {dimension_numbers = #tpu.dot_dimension_numbers<[1], [0], [0], [1], [0, 0, 1, 1], [], []>} : vector<16x128xbf16>, vector<128x64xbf16>, vector<16x64xf32> -> vector<16x64xf32>
    %c1_153 = arith.constant 1 : index
    %c2_154 = arith.constant 2 : index
    %c0_155 = arith.constant 0 : index
    %c0_156 = arith.constant 0 : index
    %248 = vector.load %arg5[%c1_153, %c2_154, %c0_155, %c0_156] : memref<2x6x1x64xf32, #tpu.memory_space<vmem>>, vector<1x1x1x64xf32>
    %249 = vector.shape_cast %248 : vector<1x1x1x64xf32> to vector<1x64xf32>
    %250 = vector.broadcast %249 : vector<1x64xf32> to vector<16x64xf32>
    %251 = arith.addf %247, %250 : vector<16x64xf32>
    %252 = arith.truncf %237 : vector<16x64xf32> to vector<16x64xbf16>
    %253 = tpu.transpose %244, [1, 0] : vector<16x64xf32> -> vector<64x16xf32>
    %254 = arith.truncf %253 : vector<64x16xf32> to vector<64x16xbf16>
    %cst_157 = arith.constant dense<0.000000e+00> : vector<16x16xf32>
    %255 = tpu.matmul %252, %254, %cst_157 {dimension_numbers = #tpu.dot_dimension_numbers<[1], [0], [0], [1], [0, 0, 1, 1], [], []>} : vector<16x64xbf16>, vector<64x16xbf16>, vector<16x16xf32> -> vector<16x16xf32>
    %cst_158 = arith.constant 1.250000e-01 : f32
    %256 = vector.broadcast %cst_158 : f32 to vector<16x16xf32>
    %257 = arith.mulf %255, %256 : vector<16x16xf32>
    %258 = arith.addf %257, %53 : vector<16x16xf32>
    %cst_159 = arith.constant dense<0xFF800000> : vector<16xf32>
    %259 = vector.multi_reduction <maximumf>, %258, %cst_159 [1] : vector<16x16xf32> to vector<16xf32>
    %260 = vector.shape_cast %259 : vector<16xf32> to vector<16x1xf32>
    %261 = vector.broadcast %260 : vector<16x1xf32> to vector<16x16xf32>
    %262 = arith.subf %258, %261 : vector<16x16xf32>
    %263 = math.exp %262 : vector<16x16xf32>
    %cst_160 = arith.constant dense<0.000000e+00> : vector<16xf32>
    %264 = vector.multi_reduction <add>, %263, %cst_160 [1] : vector<16x16xf32> to vector<16xf32>
    %265 = vector.shape_cast %264 : vector<16xf32> to vector<16x1xf32>
    %266 = tpu.reciprocal %265 {approx = true} : vector<16x1xf32> -> vector<16x1xf32>
    %267 = vector.broadcast %266 : vector<16x1xf32> to vector<16x16xf32>
    %268 = arith.mulf %263, %267 : vector<16x16xf32>
    %269 = arith.truncf %268 : vector<16x16xf32> to vector<16x16xbf16>
    %270 = arith.truncf %251 : vector<16x64xf32> to vector<16x64xbf16>
    %cst_161 = arith.constant dense<0.000000e+00> : vector<16x64xf32>
    %271 = tpu.matmul %269, %270, %cst_161 {dimension_numbers = #tpu.dot_dimension_numbers<[1], [0], [0], [1], [0, 0, 1, 1], [], []>} : vector<16x16xbf16>, vector<16x64xbf16>, vector<16x64xf32> -> vector<16x64xf32>
    %272 = arith.truncf %271 : vector<16x64xf32> to vector<16x64xbf16>
    %c1_162 = arith.constant 1 : index
    %c0_163 = arith.constant 0 : index
    %c0_164 = arith.constant 0 : index
    %c0_165 = arith.constant 0 : index
    %273 = vector.load %arg6[%c1_162, %c0_163, %c0_164, %c0_165] : memref<2x2x64x128xbf16, #tpu.memory_space<vmem>>, vector<1x1x64x128xbf16>
    %274 = vector.shape_cast %273 : vector<1x1x64x128xbf16> to vector<64x128xbf16>
    %cst_166 = arith.constant dense<0.000000e+00> : vector<16x128xf32>
    %275 = tpu.matmul %272, %274, %cst_166 {dimension_numbers = #tpu.dot_dimension_numbers<[1], [0], [0], [1], [0, 0, 1, 1], [], []>} : vector<16x64xbf16>, vector<64x128xbf16>, vector<16x128xf32> -> vector<16x128xf32>
    %276 = arith.addf %230, %275 : vector<16x128xf32>
    %c1_167 = arith.constant 1 : index
    %c3_168 = arith.constant 3 : index
    %c0_169 = arith.constant 0 : index
    %c0_170 = arith.constant 0 : index
    %277 = vector.load %arg4[%c1_167, %c3_168, %c0_169, %c0_170] : memref<2x6x128x64xbf16, #tpu.memory_space<vmem>>, vector<1x1x128x64xbf16>
    %278 = vector.shape_cast %277 : vector<1x1x128x64xbf16> to vector<128x64xbf16>
    %cst_171 = arith.constant dense<0.000000e+00> : vector<16x64xf32>
    %279 = tpu.matmul %229, %278, %cst_171 {dimension_numbers = #tpu.dot_dimension_numbers<[1], [0], [0], [1], [0, 0, 1, 1], [], []>} : vector<16x128xbf16>, vector<128x64xbf16>, vector<16x64xf32> -> vector<16x64xf32>
    %c1_172 = arith.constant 1 : index
    %c3_173 = arith.constant 3 : index
    %c0_174 = arith.constant 0 : index
    %c0_175 = arith.constant 0 : index
    %280 = vector.load %arg5[%c1_172, %c3_173, %c0_174, %c0_175] : memref<2x6x1x64xf32, #tpu.memory_space<vmem>>, vector<1x1x1x64xf32>
    %281 = vector.shape_cast %280 : vector<1x1x1x64xf32> to vector<1x64xf32>
    %282 = vector.broadcast %281 : vector<1x64xf32> to vector<16x64xf32>
    %283 = arith.addf %279, %282 : vector<16x64xf32>
    %c1_176 = arith.constant 1 : index
    %c4_177 = arith.constant 4 : index
    %c0_178 = arith.constant 0 : index
    %c0_179 = arith.constant 0 : index
    %284 = vector.load %arg4[%c1_176, %c4_177, %c0_178, %c0_179] : memref<2x6x128x64xbf16, #tpu.memory_space<vmem>>, vector<1x1x128x64xbf16>
    %285 = vector.shape_cast %284 : vector<1x1x128x64xbf16> to vector<128x64xbf16>
    %cst_180 = arith.constant dense<0.000000e+00> : vector<16x64xf32>
    %286 = tpu.matmul %229, %285, %cst_180 {dimension_numbers = #tpu.dot_dimension_numbers<[1], [0], [0], [1], [0, 0, 1, 1], [], []>} : vector<16x128xbf16>, vector<128x64xbf16>, vector<16x64xf32> -> vector<16x64xf32>
    %c1_181 = arith.constant 1 : index
    %c4_182 = arith.constant 4 : index
    %c0_183 = arith.constant 0 : index
    %c0_184 = arith.constant 0 : index
    %287 = vector.load %arg5[%c1_181, %c4_182, %c0_183, %c0_184] : memref<2x6x1x64xf32, #tpu.memory_space<vmem>>, vector<1x1x1x64xf32>
    %288 = vector.shape_cast %287 : vector<1x1x1x64xf32> to vector<1x64xf32>
    %289 = vector.broadcast %288 : vector<1x64xf32> to vector<16x64xf32>
    %290 = arith.addf %286, %289 : vector<16x64xf32>
    %c1_185 = arith.constant 1 : index
    %c5_186 = arith.constant 5 : index
    %c0_187 = arith.constant 0 : index
    %c0_188 = arith.constant 0 : index
    %291 = vector.load %arg4[%c1_185, %c5_186, %c0_187, %c0_188] : memref<2x6x128x64xbf16, #tpu.memory_space<vmem>>, vector<1x1x128x64xbf16>
    %292 = vector.shape_cast %291 : vector<1x1x128x64xbf16> to vector<128x64xbf16>
    %cst_189 = arith.constant dense<0.000000e+00> : vector<16x64xf32>
    %293 = tpu.matmul %229, %292, %cst_189 {dimension_numbers = #tpu.dot_dimension_numbers<[1], [0], [0], [1], [0, 0, 1, 1], [], []>} : vector<16x128xbf16>, vector<128x64xbf16>, vector<16x64xf32> -> vector<16x64xf32>
    %c1_190 = arith.constant 1 : index
    %c5_191 = arith.constant 5 : index
    %c0_192 = arith.constant 0 : index
    %c0_193 = arith.constant 0 : index
    %294 = vector.load %arg5[%c1_190, %c5_191, %c0_192, %c0_193] : memref<2x6x1x64xf32, #tpu.memory_space<vmem>>, vector<1x1x1x64xf32>
    %295 = vector.shape_cast %294 : vector<1x1x1x64xf32> to vector<1x64xf32>
    %296 = vector.broadcast %295 : vector<1x64xf32> to vector<16x64xf32>
    %297 = arith.addf %293, %296 : vector<16x64xf32>
    %298 = arith.truncf %283 : vector<16x64xf32> to vector<16x64xbf16>
    %299 = tpu.transpose %290, [1, 0] : vector<16x64xf32> -> vector<64x16xf32>
    %300 = arith.truncf %299 : vector<64x16xf32> to vector<64x16xbf16>
    %cst_194 = arith.constant dense<0.000000e+00> : vector<16x16xf32>
    %301 = tpu.matmul %298, %300, %cst_194 {dimension_numbers = #tpu.dot_dimension_numbers<[1], [0], [0], [1], [0, 0, 1, 1], [], []>} : vector<16x64xbf16>, vector<64x16xbf16>, vector<16x16xf32> -> vector<16x16xf32>
    %cst_195 = arith.constant 1.250000e-01 : f32
    %302 = vector.broadcast %cst_195 : f32 to vector<16x16xf32>
    %303 = arith.mulf %301, %302 : vector<16x16xf32>
    %304 = arith.addf %303, %53 : vector<16x16xf32>
    %cst_196 = arith.constant dense<0xFF800000> : vector<16xf32>
    %305 = vector.multi_reduction <maximumf>, %304, %cst_196 [1] : vector<16x16xf32> to vector<16xf32>
    %306 = vector.shape_cast %305 : vector<16xf32> to vector<16x1xf32>
    %307 = vector.broadcast %306 : vector<16x1xf32> to vector<16x16xf32>
    %308 = arith.subf %304, %307 : vector<16x16xf32>
    %309 = math.exp %308 : vector<16x16xf32>
    %cst_197 = arith.constant dense<0.000000e+00> : vector<16xf32>
    %310 = vector.multi_reduction <add>, %309, %cst_197 [1] : vector<16x16xf32> to vector<16xf32>
    %311 = vector.shape_cast %310 : vector<16xf32> to vector<16x1xf32>
    %312 = tpu.reciprocal %311 {approx = true} : vector<16x1xf32> -> vector<16x1xf32>
    %313 = vector.broadcast %312 : vector<16x1xf32> to vector<16x16xf32>
    %314 = arith.mulf %309, %313 : vector<16x16xf32>
    %315 = arith.truncf %314 : vector<16x16xf32> to vector<16x16xbf16>
    %316 = arith.truncf %297 : vector<16x64xf32> to vector<16x64xbf16>
    %cst_198 = arith.constant dense<0.000000e+00> : vector<16x64xf32>
    %317 = tpu.matmul %315, %316, %cst_198 {dimension_numbers = #tpu.dot_dimension_numbers<[1], [0], [0], [1], [0, 0, 1, 1], [], []>} : vector<16x16xbf16>, vector<16x64xbf16>, vector<16x64xf32> -> vector<16x64xf32>
    %318 = arith.truncf %317 : vector<16x64xf32> to vector<16x64xbf16>
    %c1_199 = arith.constant 1 : index
    %c1_200 = arith.constant 1 : index
    %c0_201 = arith.constant 0 : index
    %c0_202 = arith.constant 0 : index
    %319 = vector.load %arg6[%c1_199, %c1_200, %c0_201, %c0_202] : memref<2x2x64x128xbf16, #tpu.memory_space<vmem>>, vector<1x1x64x128xbf16>
    %320 = vector.shape_cast %319 : vector<1x1x64x128xbf16> to vector<64x128xbf16>
    %cst_203 = arith.constant dense<0.000000e+00> : vector<16x128xf32>
    %321 = tpu.matmul %318, %320, %cst_203 {dimension_numbers = #tpu.dot_dimension_numbers<[1], [0], [0], [1], [0, 0, 1, 1], [], []>} : vector<16x64xbf16>, vector<64x128xbf16>, vector<16x128xf32> -> vector<16x128xf32>
    %322 = arith.addf %276, %321 : vector<16x128xf32>
    %c8 = arith.constant 8 : index
    %c0_204 = arith.constant 0 : index
    %323 = vector.load %arg11[%c8, %c0_204] : memref<16x128xf32, #tpu.memory_space<vmem>>, vector<1x128xf32>
    %324 = vector.broadcast %323 : vector<1x128xf32> to vector<16x128xf32>
    %325 = arith.addf %322, %324 : vector<16x128xf32>
    %326 = arith.addf %325, %228 : vector<16x128xf32>
    %c9 = arith.constant 9 : index
    %c0_205 = arith.constant 0 : index
    %327 = vector.load %arg11[%c9, %c0_205] : memref<16x128xf32, #tpu.memory_space<vmem>>, vector<1x128xf32>
    %c10 = arith.constant 10 : index
    %c0_206 = arith.constant 0 : index
    %328 = vector.load %arg11[%c10, %c0_206] : memref<16x128xf32, #tpu.memory_space<vmem>>, vector<1x128xf32>
    %cst_207 = arith.constant dense<0.000000e+00> : vector<16xf32>
    %329 = vector.multi_reduction <add>, %326, %cst_207 [1] : vector<16x128xf32> to vector<16xf32>
    %330 = vector.shape_cast %329 : vector<16xf32> to vector<16x1xf32>
    %cst_208 = arith.constant 1.280000e+02 : f32
    %331 = vector.broadcast %cst_208 : f32 to vector<16x1xf32>
    %332 = arith.divf %330, %331 : vector<16x1xf32>
    %333 = arith.mulf %326, %326 : vector<16x128xf32>
    %cst_209 = arith.constant dense<0.000000e+00> : vector<16xf32>
    %334 = vector.multi_reduction <add>, %333, %cst_209 [1] : vector<16x128xf32> to vector<16xf32>
    %335 = vector.shape_cast %334 : vector<16xf32> to vector<16x1xf32>
    %cst_210 = arith.constant 1.280000e+02 : f32
    %336 = vector.broadcast %cst_210 : f32 to vector<16x1xf32>
    %337 = arith.divf %335, %336 : vector<16x1xf32>
    %338 = arith.mulf %332, %332 : vector<16x1xf32>
    %339 = arith.subf %337, %338 : vector<16x1xf32>
    %340 = vector.broadcast %332 : vector<16x1xf32> to vector<16x128xf32>
    %341 = arith.subf %326, %340 : vector<16x128xf32>
    %cst_211 = arith.constant 9.99999996E-13 : f32
    %342 = vector.broadcast %cst_211 : f32 to vector<16x1xf32>
    %343 = arith.addf %339, %342 : vector<16x1xf32>
    %344 = math.rsqrt %343 : vector<16x1xf32>
    %345 = vector.broadcast %344 : vector<16x1xf32> to vector<16x128xf32>
    %346 = arith.mulf %341, %345 : vector<16x128xf32>
    %347 = vector.broadcast %327 : vector<1x128xf32> to vector<16x128xf32>
    %348 = arith.mulf %346, %347 : vector<16x128xf32>
    %349 = vector.broadcast %328 : vector<1x128xf32> to vector<16x128xf32>
    %350 = arith.addf %348, %349 : vector<16x128xf32>
    %351 = arith.truncf %350 : vector<16x128xf32> to vector<16x128xbf16>
    %c1_212 = arith.constant 1 : index
    %c0_213 = arith.constant 0 : index
    %c0_214 = arith.constant 0 : index
    %352 = vector.load %arg7[%c1_212, %c0_213, %c0_214] : memref<2x128x256xbf16, #tpu.memory_space<vmem>>, vector<1x128x256xbf16>
    %353 = vector.shape_cast %352 : vector<1x128x256xbf16> to vector<128x256xbf16>
    %cst_215 = arith.constant dense<0.000000e+00> : vector<16x256xf32>
    %354 = tpu.matmul %351, %353, %cst_215 {dimension_numbers = #tpu.dot_dimension_numbers<[1], [0], [0], [1], [0, 0, 1, 1], [], []>} : vector<16x128xbf16>, vector<128x256xbf16>, vector<16x256xf32> -> vector<16x256xf32>
    %c1_216 = arith.constant 1 : index
    %c0_217 = arith.constant 0 : index
    %c0_218 = arith.constant 0 : index
    %355 = vector.load %arg8[%c1_216, %c0_217, %c0_218] : memref<2x1x256xf32, #tpu.memory_space<vmem>>, vector<1x1x256xf32>
    %356 = vector.shape_cast %355 : vector<1x1x256xf32> to vector<1x256xf32>
    %357 = vector.broadcast %356 : vector<1x256xf32> to vector<16x256xf32>
    %358 = arith.addf %354, %357 : vector<16x256xf32>
    %359 = arith.mulf %358, %358 : vector<16x256xf32>
    %360 = arith.mulf %358, %359 : vector<16x256xf32>
    %cst_219 = arith.constant 4.471500e-02 : f32
    %361 = vector.broadcast %cst_219 : f32 to vector<16x256xf32>
    %362 = arith.mulf %361, %360 : vector<16x256xf32>
    %363 = arith.addf %358, %362 : vector<16x256xf32>
    %cst_220 = arith.constant 0.797884583 : f32
    %364 = vector.broadcast %cst_220 : f32 to vector<16x256xf32>
    %365 = arith.mulf %364, %363 : vector<16x256xf32>
    %366 = math.tanh %365 : vector<16x256xf32>
    %cst_221 = arith.constant 1.000000e+00 : f32
    %367 = vector.broadcast %cst_221 : f32 to vector<16x256xf32>
    %368 = arith.addf %367, %366 : vector<16x256xf32>
    %cst_222 = arith.constant 5.000000e-01 : f32
    %369 = vector.broadcast %cst_222 : f32 to vector<16x256xf32>
    %370 = arith.mulf %369, %368 : vector<16x256xf32>
    %371 = arith.mulf %358, %370 : vector<16x256xf32>
    %372 = arith.truncf %371 : vector<16x256xf32> to vector<16x256xbf16>
    %c1_223 = arith.constant 1 : index
    %c0_224 = arith.constant 0 : index
    %c0_225 = arith.constant 0 : index
    %373 = vector.load %arg9[%c1_223, %c0_224, %c0_225] : memref<2x256x128xbf16, #tpu.memory_space<vmem>>, vector<1x256x128xbf16>
    %374 = vector.shape_cast %373 : vector<1x256x128xbf16> to vector<256x128xbf16>
    %cst_226 = arith.constant dense<0.000000e+00> : vector<16x128xf32>
    %375 = tpu.matmul %372, %374, %cst_226 {dimension_numbers = #tpu.dot_dimension_numbers<[1], [0], [0], [1], [0, 0, 1, 1], [], []>} : vector<16x256xbf16>, vector<256x128xbf16>, vector<16x128xf32> -> vector<16x128xf32>
    %c11 = arith.constant 11 : index
    %c0_227 = arith.constant 0 : index
    %376 = vector.load %arg11[%c11, %c0_227] : memref<16x128xf32, #tpu.memory_space<vmem>>, vector<1x128xf32>
    %377 = vector.broadcast %376 : vector<1x128xf32> to vector<16x128xf32>
    %378 = arith.addf %375, %377 : vector<16x128xf32>
    %379 = arith.addf %378, %350 : vector<16x128xf32>
    %c12 = arith.constant 12 : index
    %c0_228 = arith.constant 0 : index
    %380 = vector.load %arg11[%c12, %c0_228] : memref<16x128xf32, #tpu.memory_space<vmem>>, vector<1x128xf32>
    %c13 = arith.constant 13 : index
    %c0_229 = arith.constant 0 : index
    %381 = vector.load %arg11[%c13, %c0_229] : memref<16x128xf32, #tpu.memory_space<vmem>>, vector<1x128xf32>
    %cst_230 = arith.constant dense<0.000000e+00> : vector<16xf32>
    %382 = vector.multi_reduction <add>, %379, %cst_230 [1] : vector<16x128xf32> to vector<16xf32>
    %383 = vector.shape_cast %382 : vector<16xf32> to vector<16x1xf32>
    %cst_231 = arith.constant 1.280000e+02 : f32
    %384 = vector.broadcast %cst_231 : f32 to vector<16x1xf32>
    %385 = arith.divf %383, %384 : vector<16x1xf32>
    %386 = arith.mulf %379, %379 : vector<16x128xf32>
    %cst_232 = arith.constant dense<0.000000e+00> : vector<16xf32>
    %387 = vector.multi_reduction <add>, %386, %cst_232 [1] : vector<16x128xf32> to vector<16xf32>
    %388 = vector.shape_cast %387 : vector<16xf32> to vector<16x1xf32>
    %cst_233 = arith.constant 1.280000e+02 : f32
    %389 = vector.broadcast %cst_233 : f32 to vector<16x1xf32>
    %390 = arith.divf %388, %389 : vector<16x1xf32>
    %391 = arith.mulf %385, %385 : vector<16x1xf32>
    %392 = arith.subf %390, %391 : vector<16x1xf32>
    %393 = vector.broadcast %385 : vector<16x1xf32> to vector<16x128xf32>
    %394 = arith.subf %379, %393 : vector<16x128xf32>
    %cst_234 = arith.constant 9.99999996E-13 : f32
    %395 = vector.broadcast %cst_234 : f32 to vector<16x1xf32>
    %396 = arith.addf %392, %395 : vector<16x1xf32>
    %397 = math.rsqrt %396 : vector<16x1xf32>
    %398 = vector.broadcast %397 : vector<16x1xf32> to vector<16x128xf32>
    %399 = arith.mulf %394, %398 : vector<16x128xf32>
    %400 = vector.broadcast %380 : vector<1x128xf32> to vector<16x128xf32>
    %401 = arith.mulf %399, %400 : vector<16x128xf32>
    %402 = vector.broadcast %381 : vector<1x128xf32> to vector<16x128xf32>
    %403 = arith.addf %401, %402 : vector<16x128xf32>
    %404 = tpu.iota {dimensions = array<i32: 0>} : vector<2x16xi32>
    %c8_i32 = arith.constant 8 : i32
    %405 = vector.broadcast %c8_i32 : i32 to vector<2x16xi32>
    %406 = arith.muli %404, %405 : vector<2x16xi32>
    %407 = tpu.iota {dimensions = array<i32: 1>} : vector<2x16xi32>
    %408 = arith.cmpi eq, %406, %407 : vector<2x16xi32>
    %cst_235 = arith.constant 1.000000e+00 : f32
    %cst_236 = arith.constant 0.000000e+00 : f32
    %409 = vector.broadcast %cst_235 : f32 to vector<2x16xf32>
    %410 = vector.broadcast %cst_236 : f32 to vector<2x16xf32>
    %411 = arith.select %408, %409, %410 : vector<2x16xi1>, vector<2x16xf32>
    %412 = arith.truncf %411 : vector<2x16xf32> to vector<2x16xbf16>
    %413 = arith.truncf %403 : vector<16x128xf32> to vector<16x128xbf16>
    %cst_237 = arith.constant dense<0.000000e+00> : vector<2x128xf32>
    %414 = tpu.matmul %412, %413, %cst_237 {dimension_numbers = #tpu.dot_dimension_numbers<[1], [0], [0], [1], [0, 0, 1, 1], [], []>} : vector<2x16xbf16>, vector<16x128xbf16>, vector<2x128xf32> -> vector<2x128xf32>
    %415 = arith.truncf %414 : vector<2x128xf32> to vector<2x128xbf16>
    %c0_238 = arith.constant 0 : index
    %c0_239 = arith.constant 0 : index
    %c0_240 = arith.constant 0 : index
    %416 = vector.load %arg10[%c0_238, %c0_239, %c0_240] : memref<2x128x128xbf16, #tpu.memory_space<vmem>>, vector<1x128x128xbf16>
    %417 = vector.shape_cast %416 : vector<1x128x128xbf16> to vector<128x128xbf16>
    %cst_241 = arith.constant dense<0.000000e+00> : vector<2x128xf32>
    %418 = tpu.matmul %415, %417, %cst_241 {dimension_numbers = #tpu.dot_dimension_numbers<[1], [0], [0], [1], [0, 0, 1, 1], [], []>} : vector<2x128xbf16>, vector<128x128xbf16>, vector<2x128xf32> -> vector<2x128xf32>
    %c14 = arith.constant 14 : index
    %c0_242 = arith.constant 0 : index
    %419 = vector.load %arg11[%c14, %c0_242] : memref<16x128xf32, #tpu.memory_space<vmem>>, vector<1x128xf32>
    %420 = vector.broadcast %419 : vector<1x128xf32> to vector<2x128xf32>
    %421 = arith.addf %418, %420 : vector<2x128xf32>
    %422 = math.tanh %421 : vector<2x128xf32>
    %423 = arith.truncf %422 : vector<2x128xf32> to vector<2x128xbf16>
    %c1_243 = arith.constant 1 : index
    %c0_244 = arith.constant 0 : index
    %c0_245 = arith.constant 0 : index
    %424 = vector.load %arg10[%c1_243, %c0_244, %c0_245] : memref<2x128x128xbf16, #tpu.memory_space<vmem>>, vector<1x128x128xbf16>
    %425 = vector.shape_cast %424 : vector<1x128x128xbf16> to vector<128x128xbf16>
    %cst_246 = arith.constant dense<0.000000e+00> : vector<2x128xf32>
    %426 = tpu.matmul %423, %425, %cst_246 {dimension_numbers = #tpu.dot_dimension_numbers<[1], [0], [0], [1], [0, 0, 1, 1], [], []>} : vector<2x128xbf16>, vector<128x128xbf16>, vector<2x128xf32> -> vector<2x128xf32>
    %c15 = arith.constant 15 : index
    %c0_247 = arith.constant 0 : index
    %427 = vector.load %arg11[%c15, %c0_247] : memref<16x128xf32, #tpu.memory_space<vmem>>, vector<1x128xf32>
    %428 = vector.broadcast %427 : vector<1x128xf32> to vector<2x128xf32>
    %429 = arith.addf %426, %428 : vector<2x128xf32>
    %c0_248 = arith.constant 0 : index
    %c0_249 = arith.constant 0 : index
    %430 = vector.load %arg12[%c0_248, %c0_249] : memref<2x128xf32, #tpu.memory_space<vmem>>, vector<2x128xf32>
    tpu.vector_store %arg12[%c0_248, %c0_249], %429 {strides = array<i32>} : memref<2x128xf32, #tpu.memory_space<vmem>>, vector<2x128xf32>,
    return
  }
  func.func @transform_0(%arg0: i32) -> (i32, i32) {
    %c0_i32 = arith.constant 0 : i32
    %c0_i32_0 = arith.constant 0 : i32
    %c0_i32_1 = arith.constant 0 : i32
    return %c0_i32, %c0_i32_0 : i32, i32
  }
  func.func @transform_1(%arg0: i32) -> (i32, i32) {
    %c0_i32 = arith.constant 0 : i32
    %c0_i32_0 = arith.constant 0 : i32
    %c0_i32_1 = arith.constant 0 : i32
    return %c0_i32, %c0_i32_0 : i32, i32
  }
  func.func @transform_2(%arg0: i32) -> (i32, i32) {
    %c0_i32 = arith.constant 0 : i32
    %c0_i32_0 = arith.constant 0 : i32
    %c0_i32_1 = arith.constant 0 : i32
    return %c0_i32, %c0_i32_0 : i32, i32
  }
  func.func @transform_3(%arg0: i32) -> (i32, i32, i32, i32) {
    %c0_i32 = arith.constant 0 : i32
    %c0_i32_0 = arith.constant 0 : i32
    %c0_i32_1 = arith.constant 0 : i32
    %c0_i32_2 = arith.constant 0 : i32
    %c0_i32_3 = arith.constant 0 : i32
    return %c0_i32, %c0_i32_0, %c0_i32_1, %c0_i32_2 : i32, i32, i32, i32
  }
  func.func @transform_4(%arg0: i32) -> (i32, i32, i32, i32) {
    %c0_i32 = arith.constant 0 : i32
    %c0_i32_0 = arith.constant 0 : i32
    %c0_i32_1 = arith.constant 0 : i32
    %c0_i32_2 = arith.constant 0 : i32
    %c0_i32_3 = arith.constant 0 : i32
    return %c0_i32, %c0_i32_0, %c0_i32_1, %c0_i32_2 : i32, i32, i32, i32
  }
  func.func @transform_5(%arg0: i32) -> (i32, i32, i32, i32) {
    %c0_i32 = arith.constant 0 : i32
    %c0_i32_0 = arith.constant 0 : i32
    %c0_i32_1 = arith.constant 0 : i32
    %c0_i32_2 = arith.constant 0 : i32
    %c0_i32_3 = arith.constant 0 : i32
    return %c0_i32, %c0_i32_0, %c0_i32_1, %c0_i32_2 : i32, i32, i32, i32
  }
  func.func @transform_6(%arg0: i32) -> (i32, i32, i32) {
    %c0_i32 = arith.constant 0 : i32
    %c0_i32_0 = arith.constant 0 : i32
    %c0_i32_1 = arith.constant 0 : i32
    %c0_i32_2 = arith.constant 0 : i32
    return %c0_i32, %c0_i32_0, %c0_i32_1 : i32, i32, i32
  }
  func.func @transform_7(%arg0: i32) -> (i32, i32, i32) {
    %c0_i32 = arith.constant 0 : i32
    %c0_i32_0 = arith.constant 0 : i32
    %c0_i32_1 = arith.constant 0 : i32
    %c0_i32_2 = arith.constant 0 : i32
    return %c0_i32, %c0_i32_0, %c0_i32_1 : i32, i32, i32
  }
  func.func @transform_8(%arg0: i32) -> (i32, i32, i32) {
    %c0_i32 = arith.constant 0 : i32
    %c0_i32_0 = arith.constant 0 : i32
    %c0_i32_1 = arith.constant 0 : i32
    %c0_i32_2 = arith.constant 0 : i32
    return %c0_i32, %c0_i32_0, %c0_i32_1 : i32, i32, i32
  }
  func.func @transform_9(%arg0: i32) -> (i32, i32, i32) {
    %c0_i32 = arith.constant 0 : i32
    %c0_i32_0 = arith.constant 0 : i32
    %c0_i32_1 = arith.constant 0 : i32
    %c0_i32_2 = arith.constant 0 : i32
    return %c0_i32, %c0_i32_0, %c0_i32_1 : i32, i32, i32
  }
  func.func @transform_10(%arg0: i32) -> (i32, i32) {
    %c0_i32 = arith.constant 0 : i32
    %c0_i32_0 = arith.constant 0 : i32
    %c0_i32_1 = arith.constant 0 : i32
    return %c0_i32, %c0_i32_0 : i32, i32
  }
  func.func @transform_11(%arg0: i32) -> (i32, i32) {
    %c0_i32 = arith.constant 0 : i32
    %c0_i32_0 = arith.constant 0 : i32
    %c0_i32_1 = arith.constant 0 : i32
    return %c0_i32, %c0_i32_0 : i32, i32
  }
}

</mosaic_0001>

<llo_original>
// kernel: tpu_custom_call.1
$region0: #{tpu_custom_call.1}
  #allocation0 [shape = 'u32[]', space=smem, size = 0x4, offset = 0x4, fixed_abs, tag = 'smem constant byte address 0x4 - core index']
  #allocation1 [shape = 'u32[144,128]{1,0:T(1,128)}', space=vmem, size = 0x12000, scoped, tag = 'internal scratch']
  %s0 = inlined_call_operand.vmem [shape: s32[16,4], index: 0, kind: input, shape index: {}]
  %s1 = inlined_call_operand.vmem [shape: s32[1,16], index: 1, kind: input, shape index: {}]
  %s2 = inlined_call_operand.vmem [shape: bf16[64,128], index: 2, kind: input, shape index: {}]
  %s3 = inlined_call_operand.vmem [shape: bf16[2,6,128,64], index: 3, kind: input, shape index: {}]
  %s4 = inlined_call_operand.vmem [shape: f32[2,6,1,64], index: 4, kind: input, shape index: {}]
  %s5 = inlined_call_operand.vmem [shape: bf16[2,2,64,128], index: 5, kind: input, shape index: {}]
  %s6 = inlined_call_operand.vmem [shape: bf16[2,128,256], index: 6, kind: input, shape index: {}]
  %s7 = inlined_call_operand.vmem [shape: f32[2,1,256], index: 7, kind: input, shape index: {}]
  %s8 = inlined_call_operand.vmem [shape: bf16[2,256,128], index: 8, kind: input, shape index: {}]
  %s9 = inlined_call_operand.vmem [shape: bf16[2,128,128], index: 9, kind: input, shape index: {}]
  %s10 = inlined_call_operand.vmem [shape: f32[16,128], index: 10, kind: input, shape index: {}]
  %s11 = inlined_call_operand.hbm [shape: f32[2,128], index: 11, kind: output, shape index: {}]
  %s12 = sld [smem:[#allocation0]]
  $region54: #{tpu_custom_call.1} parent=0
    _
  %s14 = ssub.s32 1, %s12
  %s15 = scalar_select 0, %s14, %s12
  $region1: #{tpu_custom_call.1} parent=0
    #allocation2 [shape = 'u8[1024]{0}', space=vmem, size = 0x400, scoped, tag = 'output window, operand 0, single buffered']
    #allocation3 [shape = 's32[1]{0}', space=sflag, size = 0x4, scoped, tag = 'scoped memory for tpu_custom_call.1']
    %16 = vsyncpa [#allocation3], 0
    // Predicated region
    $region2: #{tpu_custom_call.1} parent=1 // pred_check
      _
    $region3: #{tpu_custom_call.1} parent=1 // pred_check_branch
      %18 = sbr.rel (0) target = $region5
    $region4: #{tpu_custom_call.1} parent=1 // pred_region
      _
    $region5: #{tpu_custom_call.1} parent=1 // pred_fallthru
      _
    // Predicated region
    $region6: #{tpu_custom_call.1} parent=1 // pred_check
      _
    $region7: #{tpu_custom_call.1} parent=1 // pred_check_branch
      %20 = sbr.rel (0) target = $region9
    $region8: #{tpu_custom_call.1} parent=1 // pred_region
      _
    $region9: #{tpu_custom_call.1} parent=1 // pred_fallthru
      _
    // Predicated region
    $region10: #{tpu_custom_call.1} parent=1 // pred_check
      _
    $region11: #{tpu_custom_call.1} parent=1 // pred_check_branch
      %22 = sbr.rel (0) target = $region13
    $region12: #{tpu_custom_call.1} parent=1 // pred_region
      _
    $region13: #{tpu_custom_call.1} parent=1 // pred_fallthru
      _
    // Predicated region
    $region14: #{tpu_custom_call.1} parent=1 // pred_check
      _
    $region15: #{tpu_custom_call.1} parent=1 // pred_check_branch
      %24 = sbr.rel (0) target = $region17
    $region16: #{tpu_custom_call.1} parent=1 // pred_region
      _
    $region17: #{tpu_custom_call.1} parent=1 // pred_fallthru
      _
    // Predicated region
    $region18: #{tpu_custom_call.1} parent=1 // pred_check
      _
    $region19: #{tpu_custom_call.1} parent=1 // pred_check_branch
      %26 = sbr.rel (0) target = $region21
    $region20: #{tpu_custom_call.1} parent=1 // pred_region
      _
    $region21: #{tpu_custom_call.1} parent=1 // pred_fallthru
      _
    // Predicated region
    $region22: #{tpu_custom_call.1} parent=1 // pred_check
      _
    $region23: #{tpu_custom_call.1} parent=1 // pred_check_branch
      %28 = sbr.rel (0) target = $region25
    $region24: #{tpu_custom_call.1} parent=1 // pred_region
      _
    $region25: #{tpu_custom_call.1} parent=1 // pred_fallthru
      _
    // Predicated region
    $region26: #{tpu_custom_call.1} parent=1 // pred_check
      _
    $region27: #{tpu_custom_call.1} parent=1 // pred_check_branch
      %30 = sbr.rel (0) target = $region29
    $region28: #{tpu_custom_call.1} parent=1 // pred_region
      _
    $region29: #{tpu_custom_call.1} parent=1 // pred_fallthru
      _
    // Predicated region
    $region30: #{tpu_custom_call.1} parent=1 // pred_check
      _
    $region31: #{tpu_custom_call.1} parent=1 // pred_check_branch
      %32 = sbr.rel (0) target = $region33
    $region32: #{tpu_custom_call.1} parent=1 // pred_region
      _
    $region33: #{tpu_custom_call.1} parent=1 // pred_fallthru
      _
    // Predicated region
    $region34: #{tpu_custom_call.1} parent=1 // pred_check
      _
    $region35: #{tpu_custom_call.1} parent=1 // pred_check_branch
      %34 = sbr.rel (0) target = $region37
    $region36: #{tpu_custom_call.1} parent=1 // pred_region
      _
    $region37: #{tpu_custom_call.1} parent=1 // pred_fallthru
      _
    // Predicated region
    $region38: #{tpu_custom_call.1} parent=1 // pred_check
      _
    $region39: #{tpu_custom_call.1} parent=1 // pred_check_branch
      %36 = sbr.rel (0) target = $region41
    $region40: #{tpu_custom_call.1} parent=1 // pred_region
      _
    $region41: #{tpu_custom_call.1} parent=1 // pred_fallthru
      _
    // Predicated region
    $region42: #{tpu_custom_call.1} parent=1 // pred_check
      _
    $region43: #{tpu_custom_call.1} parent=1 // pred_check_branch
      %38 = sbr.rel (0) target = $region45
    $region44: #{tpu_custom_call.1} parent=1 // pred_region
      _
    $region45: #{tpu_custom_call.1} parent=1 // pred_fallthru
      _
    %v40 = vld [vmem:[%s0] sm:$0xff]
    %v41 = vld [vmem:[%s0 + $0x8] sm:$0xff]
    %v42 = vlaneseq
    %v43 = vand.u32 %v42, 127
    %44 = vset.pattern.permute.xlu0 0
    %45 = vperm.xlu0 %44, %v40
    %v46 = vpop.permute.xlu0 %45
    %47 = vset.pattern.permute.xlu0 0
    %48 = vperm.xlu0 %47, %v41
    %v49 = vpop.permute.xlu0 %48
    %vm50 = vcmp.eq.s32.totalorder %v43, %v46
    %vm51 = vcmp.eq.s32.totalorder %v43, %v49
    %v52 = vadd.s32 %v40, 32
    %v53 = vadd.s32 %v41, 32
    %54 = vset.pattern.permute.xlu0 2
    %55 = vperm.xlu0 %54, %v52
    %v56 = vpop.permute.xlu0 %55
    %57 = vset.pattern.permute.xlu0 2
    %58 = vperm.xlu0 %57, %v53
    %v59 = vpop.permute.xlu0 %58
    %vm60 = vcmp.eq.s32.totalorder %v43, %v56
    %vm61 = vcmp.eq.s32.totalorder %v43, %v59
    %vm62 = vmor %vm50, %vm60
    %vm63 = vmor %vm51, %vm61
    %v64 = vadd.s32 %v40, 48
    %v65 = vadd.s32 %v41, 48
    %66 = vset.pattern.permute.xlu0 1
    %67 = vperm.xlu0 %66, %v64
    %v68 = vpop.permute.xlu0 %67
    %69 = vset.pattern.permute.xlu0 1
    %70 = vperm.xlu0 %69, %v65
    %v71 = vpop.permute.xlu0 %70
    %vm72 = vcmp.eq.s32.totalorder %v43, %v68
    %vm73 = vcmp.eq.s32.totalorder %v43, %v71
    %vm74 = vmor %vm62, %vm72
    %vm75 = vmor %vm63, %vm73
    %v76 = vsel %vm74, 1.0, 0.0
    %v77 = vsel %vm75, 1.0, 0.0
    %v78 = vpack.c.bf16 %v77, %v76
    %v79 = vld [vmem:[%s2] sm:$0xf]
    %v80 = vld [vmem:[%s2 + $0x4] sm:$0xf]
    %v81 = vld [vmem:[%s2 + $0x8] sm:$0xf]
    %v82 = vld [vmem:[%s2 + $0xc] sm:$0xf]
    %v83 = vld [vmem:[%s2 + $0x10] sm:$0xf]
    %v84 = vld [vmem:[%s2 + $0x14] sm:$0xf]
    %v85 = vld [vmem:[%s2 + $0x18] sm:$0xf]
    %v86 = vld [vmem:[%s2 + $0x1c] sm:$0xf]
    %v95 = vunpack.c.l.b16 %v79
    %v96 = vunpack.c.l.b16 %v80
    %v97 = vunpack.c.l.b16 %v81
    %v98 = vunpack.c.l.b16 %v82
    %v99 = vunpack.c.l.b16 %v83
    %v100 = vunpack.c.l.b16 %v84
    %v101 = vunpack.c.l.b16 %v85
    %v102 = vunpack.c.l.b16 %v86
    %v103 = vpack.c.b16 %v96, %v95
    %v104 = vpack.c.b16 %v98, %v97
    %v105 = vpack.c.b16 %v100, %v99
    %v106 = vpack.c.b16 %v102, %v101
    %vm111 = vcmask 523264
    %v113 = vsel %vm111, %v78, 0
    %115 = vmatprep.subr.bf16.mxu0 0
    %116 = vmatpush1.bf16.msra.mxu0 %v103
    %117 = vmatprep.subr.bf16.mxu0 0
    %118 = vmatpush1.bf16.msra.mxu0 %v104
    %119 = vmatprep.subr.bf16.mxu0 0
    %120 = vmatpush1.bf16.msra.mxu0 %v105
    %121 = vmatprep.subr.bf16.mxu0 0
    %122 = vmatpush1.bf16.msra.mxu0 %v106
    %123 = vmatprep.subr.bf16.mxu0 0
    %124 = vmatpush1.bf16.msra.mxu0 0
    %125 = vmatprep.subr.bf16.mxu0 0
    %126 = vmatpush1.bf16.msra.mxu0 0
    %127 = vmatprep.subr.bf16.mxu0 0
    %128 = vmatpush1.bf16.msra.mxu0 0
    %129 = vmatprep.subr.bf16.mxu0 0
    %130 = vmatpush1.bf16.msra.mxu0 0
    %131 = vmatprep.subr.bf16.mxu0 0
    %132 = vmatpush1.bf16.msra.mxu0 0
    %133 = vmatprep.subr.bf16.mxu0 0
    %134 = vmatpush1.bf16.msra.mxu0 0
    %135 = vmatprep.subr.bf16.mxu0 0
    %136 = vmatpush1.bf16.msra.mxu0 0
    %137 = vmatprep.subr.bf16.mxu0 0
    %138 = vmatpush1.bf16.msra.mxu0 0
    %139 = vmatprep.subr.bf16.mxu0 0
    %140 = vmatpush1.bf16.msra.mxu0 0
    %141 = vmatprep.subr.bf16.mxu0 0
    %142 = vmatpush1.bf16.msra.mxu0 0
    %143 = vmatprep.subr.bf16.mxu0 0
    %144 = vmatpush1.bf16.msra.mxu0 0
    %145 = vmatprep.subr.bf16.mxu0 0
    %146 = vmatpush1.bf16.msra.mxu0 0
    %147 = vmatprep.mubr.bf16.mxu0 0
    %148 = vmatmul.mubr.bf16.gmra.mrb[0].mxu0 %v113
    %v149 = vpop.f32.mrb[0].mxu0
    %v150 = vadd.f32 0.0, %v149
    %v151 = vpop.f32.mrb[0].mxu0
    %v152 = vpop.f32.mrb[0].mxu0
    %v153 = vadd.f32 0.0, %v152
    %v154 = vpop.f32.mrb[0].mxu0
    %155 = vdwg.mxu0
    %v156 = vld [vmem:[%s10] sm:$0x1]
    %v157 = vld [vmem:[%s10 + $0x1] sm:$0x1]
    %158 = vadd.xlane.f32.xlu0 %v150
    %v159 = vpop.xlane.xlu0 %158
    %160 = vadd.xlane.f32.xlu0 %v153
    %v161 = vpop.xlane.xlu0 %160
    %v162 = vrcp.pop 128.0
    %v163 = vmul.f32 %v159, %v162
    %v164 = vmul.f32 %v161, %v162
    %v165 = vmul.f32 %v150, %v150
    %v166 = vmul.f32 %v153, %v153
    %167 = vadd.xlane.f32.xlu0 %v165
    %v168 = vpop.xlane.xlu0 %167
    %169 = vadd.xlane.f32.xlu0 %v166
    %v170 = vpop.xlane.xlu0 %169
    %v171 = vmul.f32 %v168, %v162
    %v172 = vmul.f32 %v170, %v162
    %v173 = vmul.f32 %v163, %v163
    %v174 = vmul.f32 %v164, %v164
    %v175 = vsub.f32 %v171, %v173
    %v176 = vsub.f32 %v172, %v174
    %v177 = vsub.f32 %v150, %v163
    %v178 = vsub.f32 %v153, %v164
    %v179 = vadd.f32 %v175, 1e-12
    %v180 = vadd.f32 %v176, 1e-12
    %v181 = vrsqrt.pop %v179
    %v182 = vrsqrt.pop %v180
    %v183 = vmul.f32 %v177, %v181
    %v184 = vmul.f32 %v178, %v182
    %v185 = vlaneseq
    %v186 = vshrl.u32 %v185, 7
    %v187 = vsub.s32 0, %v186
    %v188 = vrot.slane %v156, %v187
    %v189 = vmul.f32 %v183, %v188
    %v190 = vmul.f32 %v184, %v188
    %v191 = vlaneseq
    %v192 = vshrl.u32 %v191, 7
    %v193 = vsub.s32 0, %v192
    %v194 = vrot.slane %v157, %v193
    %v195 = vadd.f32 %v189, %v194
    %v196 = vadd.f32 %v190, %v194
    %v197 = vld [vmem:[%s1] sm:$0x1]
    %198 = vset.pattern.permute.xlu0 3
    %199 = vperm.xlu0 %198, %v40
    %v200 = vpop.permute.xlu0 %199
    %201 = vset.pattern.permute.xlu0 3
    %202 = vperm.xlu0 %201, %v41
    %v203 = vpop.permute.xlu0 %202
    %v204 = vlaneseq
    %v205 = vshrl.u32 %v204, 7
    %v206 = vsub.s32 0, %v205
    %v207 = vrot.slane %v197, %v206
    %vm208 = vcmp.eq.s32.totalorder %v200, %v207
    %vm209 = vcmp.eq.s32.totalorder %v203, %v207
    %v210 = vsel %vm208, 0.0, -1e+09
    %v211 = vsel %vm209, 0.0, -1e+09
    %v212 = vpack.c.bf16 %v196, %v195
    %v213 = vld [vmem:[%s3] sm:$0xf]
    %v214 = vld [vmem:[%s3 + $0x4] sm:$0xf]
    %v215 = vld [vmem:[%s3 + $0x8] sm:$0xf]
    %v216 = vld [vmem:[%s3 + $0xc] sm:$0xf]
    %v217 = vld [vmem:[%s3 + $0x10] sm:$0xf]
    %v218 = vld [vmem:[%s3 + $0x14] sm:$0xf]
    %v219 = vld [vmem:[%s3 + $0x18] sm:$0xf]
    %v220 = vld [vmem:[%s3 + $0x1c] sm:$0xf]
    %v221 = vld [vmem:[%s3 + $0x20] sm:$0xf]
    %v222 = vld [vmem:[%s3 + $0x24] sm:$0xf]
    %v223 = vld [vmem:[%s3 + $0x28] sm:$0xf]
    %v224 = vld [vmem:[%s3 + $0x2c] sm:$0xf]
    %v225 = vld [vmem:[%s3 + $0x30] sm:$0xf]
    %v226 = vld [vmem:[%s3 + $0x34] sm:$0xf]
    %v227 = vld [vmem:[%s3 + $0x38] sm:$0xf]
    %v228 = vld [vmem:[%s3 + $0x3c] sm:$0xf]
    %v229 = vld [vmem:[%s4] sm:$0x1]
    %v231 = vlaneseq
    %v232 = vshrl.u32 %v231, 7
    %v233 = vsub.s32 0, %v232
    %v234 = vrot.slane %v229, %v233
    %v252 = vunpack.c.l.b16 %v213
    %v253 = vunpack.c.l.b16 %v214
    %v254 = vunpack.c.l.b16 %v215
    %v255 = vunpack.c.l.b16 %v216
    %v256 = vunpack.c.l.b16 %v217
    %v257 = vunpack.c.l.b16 %v218
    %v258 = vunpack.c.l.b16 %v219
    %v259 = vunpack.c.l.b16 %v220
    %v260 = vunpack.c.l.b16 %v221
    %v261 = vunpack.c.l.b16 %v222
    %v262 = vunpack.c.l.b16 %v223
    %v263 = vunpack.c.l.b16 %v224
    %v264 = vunpack.c.l.b16 %v225
    %v265 = vunpack.c.l.b16 %v226
    %v266 = vunpack.c.l.b16 %v227
    %v267 = vunpack.c.l.b16 %v228
    %v268 = vpack.c.b16 %v253, %v252
    %v269 = vpack.c.b16 %v255, %v254
    %v270 = vpack.c.b16 %v257, %v256
    %v271 = vpack.c.b16 %v259, %v258
    %v272 = vpack.c.b16 %v261, %v260
    %v273 = vpack.c.b16 %v263, %v262
    %v274 = vpack.c.b16 %v265, %v264
    %v275 = vpack.c.b16 %v267, %v266
    %284 = vmatprep.subr.bf16.mxu0 0
    %285 = vmatpush1.bf16.msra.mxu0 %v268
    %286 = vmatprep.subr.bf16.mxu0 0
    %287 = vmatpush1.bf16.msra.mxu0 %v269
    %288 = vmatprep.subr.bf16.mxu0 0
    %289 = vmatpush1.bf16.msra.mxu0 %v270
    %290 = vmatprep.subr.bf16.mxu0 0
    %291 = vmatpush1.bf16.msra.mxu0 %v271
    %292 = vmatprep.subr.bf16.mxu0 0
    %293 = vmatpush1.bf16.msra.mxu0 %v272
    %294 = vmatprep.subr.bf16.mxu0 0
    %295 = vmatpush1.bf16.msra.mxu0 %v273
    %296 = vmatprep.subr.bf16.mxu0 0
    %297 = vmatpush1.bf16.msra.mxu0 %v274
    %298 = vmatprep.subr.bf16.mxu0 0
    %299 = vmatpush1.bf16.msra.mxu0 %v275
    %300 = vmatprep.subr.bf16.mxu0 0
    %301 = vmatpush1.bf16.msra.mxu0 0
    %302 = vmatprep.subr.bf16.mxu0 0
    %303 = vmatpush1.bf16.msra.mxu0 0
    %304 = vmatprep.subr.bf16.mxu0 0
    %305 = vmatpush1.bf16.msra.mxu0 0
    %306 = vmatprep.subr.bf16.mxu0 0
    %307 = vmatpush1.bf16.msra.mxu0 0
    %308 = vmatprep.subr.bf16.mxu0 0
    %309 = vmatpush1.bf16.msra.mxu0 0
    %310 = vmatprep.subr.bf16.mxu0 0
    %311 = vmatpush1.bf16.msra.mxu0 0
    %312 = vmatprep.subr.bf16.mxu0 0
    %313 = vmatpush1.bf16.msra.mxu0 0
    %314 = vmatprep.subr.bf16.mxu0 0
    %315 = vmatpush1.bf16.msra.mxu0 0
    %316 = vmatprep.mubr.bf16.mxu0 0
    %317 = vmatmul.mubr.bf16.gmra.mrb[0].mxu0 %v212
    %v318 = vpop.f32.mrb[0].mxu0
    %v319 = vadd.f32 %v234, %v318
    %v320 = vpop.f32.mrb[0].mxu0
    %v321 = vpop.f32.mrb[0].mxu0
    %v322 = vadd.f32 %v234, %v321
    %v323 = vpop.f32.mrb[0].mxu0
    %324 = vdwg.mxu0
    %s325 = scalar_lea.vmem %s3, 64
    %v326 = vld [vmem:[%s325] sm:$0xf]
    %v327 = vld [vmem:[%s325 + $0x4] sm:$0xf]
    %v328 = vld [vmem:[%s325 + $0x8] sm:$0xf]
    %v329 = vld [vmem:[%s325 + $0xc] sm:$0xf]
    %v330 = vld [vmem:[%s325 + $0x10] sm:$0xf]
    %v331 = vld [vmem:[%s325 + $0x14] sm:$0xf]
    %v332 = vld [vmem:[%s325 + $0x18] sm:$0xf]
    %v333 = vld [vmem:[%s325 + $0x1c] sm:$0xf]
    %v334 = vld [vmem:[%s325 + $0x20] sm:$0xf]
    %v335 = vld [vmem:[%s325 + $0x24] sm:$0xf]
    %v336 = vld [vmem:[%s325 + $0x28] sm:$0xf]
    %v337 = vld [vmem:[%s325 + $0x2c] sm:$0xf]
    %v338 = vld [vmem:[%s325 + $0x30] sm:$0xf]
    %v339 = vld [vmem:[%s325 + $0x34] sm:$0xf]
    %v340 = vld [vmem:[%s325 + $0x38] sm:$0xf]
    %v341 = vld [vmem:[%s325 + $0x3c] sm:$0xf]
    %s342 = scalar_lea.vmem %s4, 1
    %v343 = vld [vmem:[%s342] sm:$0x1]
    %v345 = vlaneseq
    %v346 = vshrl.u32 %v345, 7
    %v347 = vsub.s32 0, %v346
    %v348 = vrot.slane %v343, %v347
    %v366 = vunpack.c.l.b16 %v326
    %v367 = vunpack.c.l.b16 %v327
    %v368 = vunpack.c.l.b16 %v328
    %v369 = vunpack.c.l.b16 %v329
    %v370 = vunpack.c.l.b16 %v330
    %v371 = vunpack.c.l.b16 %v331
    %v372 = vunpack.c.l.b16 %v332
    %v373 = vunpack.c.l.b16 %v333
    %v374 = vunpack.c.l.b16 %v334
    %v375 = vunpack.c.l.b16 %v335
    %v376 = vunpack.c.l.b16 %v336
    %v377 = vunpack.c.l.b16 %v337
    %v378 = vunpack.c.l.b16 %v338
    %v379 = vunpack.c.l.b16 %v339
    %v380 = vunpack.c.l.b16 %v340
    %v381 = vunpack.c.l.b16 %v341
    %v382 = vpack.c.b16 %v367, %v366
    %v383 = vpack.c.b16 %v369, %v368
    %v384 = vpack.c.b16 %v371, %v370
    %v385 = vpack.c.b16 %v373, %v372
    %v386 = vpack.c.b16 %v375, %v374
    %v387 = vpack.c.b16 %v377, %v376
    %v388 = vpack.c.b16 %v379, %v378
    %v389 = vpack.c.b16 %v381, %v380
    %398 = vmatprep.subr.bf16.mxu0 0
    %399 = vmatpush1.bf16.msra.mxu0 %v382
    %400 = vmatprep.subr.bf16.mxu0 0
    %401 = vmatpush1.bf16.msra.mxu0 %v383
    %402 = vmatprep.subr.bf16.mxu0 0
    %403 = vmatpush1.bf16.msra.mxu0 %v384
    %404 = vmatprep.subr.bf16.mxu0 0
    %405 = vmatpush1.bf16.msra.mxu0 %v385
    %406 = vmatprep.subr.bf16.mxu0 0
    %407 = vmatpush1.bf16.msra.mxu0 %v386
    %408 = vmatprep.subr.bf16.mxu0 0
    %409 = vmatpush1.bf16.msra.mxu0 %v387
    %410 = vmatprep.subr.bf16.mxu0 0
    %411 = vmatpush1.bf16.msra.mxu0 %v388
    %412 = vmatprep.subr.bf16.mxu0 0
    %413 = vmatpush1.bf16.msra.mxu0 %v389
    %414 = vmatprep.subr.bf16.mxu0 0
    %415 = vmatpush1.bf16.msra.mxu0 0
    %416 = vmatprep.subr.bf16.mxu0 0
    %417 = vmatpush1.bf16.msra.mxu0 0
    %418 = vmatprep.subr.bf16.mxu0 0
    %419 = vmatpush1.bf16.msra.mxu0 0
    %420 = vmatprep.subr.bf16.mxu0 0
    %421 = vmatpush1.bf16.msra.mxu0 0
    %422 = vmatprep.subr.bf16.mxu0 0
    %423 = vmatpush1.bf16.msra.mxu0 0
    %424 = vmatprep.subr.bf16.mxu0 0
    %425 = vmatpush1.bf16.msra.mxu0 0
    %426 = vmatprep.subr.bf16.mxu0 0
    %427 = vmatpush1.bf16.msra.mxu0 0
    %428 = vmatprep.subr.bf16.mxu0 0
    %429 = vmatpush1.bf16.msra.mxu0 0
    %430 = vmatprep.mubr.bf16.mxu0 0
    %431 = vmatmul.mubr.bf16.gmra.mrb[0].mxu0 %v212
    %v432 = vpop.f32.mrb[0].mxu0
    %v433 = vadd.f32 %v348, %v432
    %v434 = vpop.f32.mrb[0].mxu0
    %v435 = vpop.f32.mrb[0].mxu0
    %v436 = vadd.f32 %v348, %v435
    %v437 = vpop.f32.mrb[0].mxu0
    %438 = vdwg.mxu0
    %s439 = scalar_lea.vmem %s3, 128
    %v440 = vld [vmem:[%s439] sm:$0xf]
    %v441 = vld [vmem:[%s439 + $0x4] sm:$0xf]
    %v442 = vld [vmem:[%s439 + $0x8] sm:$0xf]
    %v443 = vld [vmem:[%s439 + $0xc] sm:$0xf]
    %v444 = vld [vmem:[%s439 + $0x10] sm:$0xf]
    %v445 = vld [vmem:[%s439 + $0x14] sm:$0xf]
    %v446 = vld [vmem:[%s439 + $0x18] sm:$0xf]
    %v447 = vld [vmem:[%s439 + $0x1c] sm:$0xf]
    %v448 = vld [vmem:[%s439 + $0x20] sm:$0xf]
    %v449 = vld [vmem:[%s439 + $0x24] sm:$0xf]
    %v450 = vld [vmem:[%s439 + $0x28] sm:$0xf]
    %v451 = vld [vmem:[%s439 + $0x2c] sm:$0xf]
    %v452 = vld [vmem:[%s439 + $0x30] sm:$0xf]
    %v453 = vld [vmem:[%s439 + $0x34] sm:$0xf]
    %v454 = vld [vmem:[%s439 + $0x38] sm:$0xf]
    %v455 = vld [vmem:[%s439 + $0x3c] sm:$0xf]
    %s456 = scalar_lea.vmem %s4, 2
    %v457 = vld [vmem:[%s456] sm:$0x1]
    %v459 = vlaneseq
    %v460 = vshrl.u32 %v459, 7
    %v461 = vsub.s32 0, %v460
    %v462 = vrot.slane %v457, %v461
    %v480 = vunpack.c.l.b16 %v440
    %v481 = vunpack.c.l.b16 %v441
    %v482 = vunpack.c.l.b16 %v442
    %v483 = vunpack.c.l.b16 %v443
    %v484 = vunpack.c.l.b16 %v444
    %v485 = vunpack.c.l.b16 %v445
    %v486 = vunpack.c.l.b16 %v446
    %v487 = vunpack.c.l.b16 %v447
    %v488 = vunpack.c.l.b16 %v448
    %v489 = vunpack.c.l.b16 %v449
    %v490 = vunpack.c.l.b16 %v450
    %v491 = vunpack.c.l.b16 %v451
    %v492 = vunpack.c.l.b16 %v452
    %v493 = vunpack.c.l.b16 %v453
    %v494 = vunpack.c.l.b16 %v454
    %v495 = vunpack.c.l.b16 %v455
    %v496 = vpack.c.b16 %v481, %v480
    %v497 = vpack.c.b16 %v483, %v482
    %v498 = vpack.c.b16 %v485, %v484
    %v499 = vpack.c.b16 %v487, %v486
    %v500 = vpack.c.b16 %v489, %v488
    %v501 = vpack.c.b16 %v491, %v490
    %v502 = vpack.c.b16 %v493, %v492
    %v503 = vpack.c.b16 %v495, %v494
    %512 = vmatprep.subr.bf16.mxu0 0
    %513 = vmatpush1.bf16.msra.mxu0 %v496
    %514 = vmatprep.subr.bf16.mxu0 0
    %515 = vmatpush1.bf16.msra.mxu0 %v497
    %516 = vmatprep.subr.bf16.mxu0 0
    %517 = vmatpush1.bf16.msra.mxu0 %v498
    %518 = vmatprep.subr.bf16.mxu0 0
    %519 = vmatpush1.bf16.msra.mxu0 %v499
    %520 = vmatprep.subr.bf16.mxu0 0
    %521 = vmatpush1.bf16.msra.mxu0 %v500
    %522 = vmatprep.subr.bf16.mxu0 0
    %523 = vmatpush1.bf16.msra.mxu0 %v501
    %524 = vmatprep.subr.bf16.mxu0 0
    %525 = vmatpush1.bf16.msra.mxu0 %v502
    %526 = vmatprep.subr.bf16.mxu0 0
    %527 = vmatpush1.bf16.msra.mxu0 %v503
    %528 = vmatprep.subr.bf16.mxu0 0
    %529 = vmatpush1.bf16.msra.mxu0 0
    %530 = vmatprep.subr.bf16.mxu0 0
    %531 = vmatpush1.bf16.msra.mxu0 0
    %532 = vmatprep.subr.bf16.mxu0 0
    %533 = vmatpush1.bf16.msra.mxu0 0
    %534 = vmatprep.subr.bf16.mxu0 0
    %535 = vmatpush1.bf16.msra.mxu0 0
    %536 = vmatprep.subr.bf16.mxu0 0
    %537 = vmatpush1.bf16.msra.mxu0 0
    %538 = vmatprep.subr.bf16.mxu0 0
    %539 = vmatpush1.bf16.msra.mxu0 0
    %540 = vmatprep.subr.bf16.mxu0 0
    %541 = vmatpush1.bf16.msra.mxu0 0
    %542 = vmatprep.subr.bf16.mxu0 0
    %543 = vmatpush1.bf16.msra.mxu0 0
    %544 = vmatprep.mubr.bf16.mxu0 0
    %545 = vmatmul.mubr.bf16.gmra.mrb[0].mxu0 %v212
    %v546 = vpop.f32.mrb[0].mxu0
    %v547 = vadd.f32 %v462, %v546
    %v548 = vpop.f32.mrb[0].mxu0
    %v549 = vpop.f32.mrb[0].mxu0
    %v550 = vadd.f32 %v462, %v549
    %v551 = vpop.f32.mrb[0].mxu0
    %552 = vdwg.mxu0
    %v553 = vpack.c.bf16 %v322, %v319
    %554 = vxpose.xlu0.b32.start [1/16] %v433, 128
    %555 = vxpose.xlu0.b32.cont [2/16] %v436, 128
    %556 = vxpose.xlu0.b32.cont [3/16] 0.0, 128
    %557 = vxpose.xlu0.b32.cont [4/16] 0.0, 128
    %558 = vxpose.xlu0.b32.cont [5/16] 0.0, 128
    %559 = vxpose.xlu0.b32.cont [6/16] 0.0, 128
    %560 = vxpose.xlu0.b32.cont [7/16] 0.0, 128
    %561 = vxpose.xlu0.b32.cont [8/16] 0.0, 128
    %562 = vxpose.xlu0.b32.cont [9/16] 0.0, 128
    %563 = vxpose.xlu0.b32.cont [10/16] 0.0, 128
    %564 = vxpose.xlu0.b32.cont [11/16] 0.0, 128
    %565 = vxpose.xlu0.b32.cont [12/16] 0.0, 128
    %566 = vxpose.xlu0.b32.cont [13/16] 0.0, 128
    %567 = vxpose.xlu0.b32.cont [14/16] 0.0, 128
    %568 = vxpose.xlu0.b32.cont [15/16] 0.0, 128
    %569 = vxpose.xlu0.b32.end [16/16] 0.0, 128
    %v570 = vpop.trf.xlu0
    %v571 = vpop.trf.xlu0
    %v572 = vpop.trf.xlu0
    %v573 = vpop.trf.xlu0
    %v574 = vpop.trf.xlu0
    %v575 = vpop.trf.xlu0
    %v576 = vpop.trf.xlu0
    %v577 = vpop.trf.xlu0
    %v578 = vpop.trf.xlu0
    %v579 = vpop.trf.xlu0
    %v580 = vpop.trf.xlu0
    %v581 = vpop.trf.xlu0
    %v582 = vpop.trf.xlu0
    %v583 = vpop.trf.xlu0
    %v584 = vpop.trf.xlu0
    %v585 = vpop.trf.xlu0
    %v586 = vpack.c.bf16 %v571, %v570
    %v587 = vpack.c.bf16 %v573, %v572
    %v588 = vpack.c.bf16 %v575, %v574
    %v589 = vpack.c.bf16 %v577, %v576
    %v591 = vsel %vm111, %v553, 0
    %593 = vmatprep.subr.bf16.mxu0 0
    %594 = vmatpush1.bf16.msra.mxu0 %v586
    %595 = vmatprep.subr.bf16.mxu0 0
    %596 = vmatpush1.bf16.msra.mxu0 %v587
    %597 = vmatprep.subr.bf16.mxu0 0
    %598 = vmatpush1.bf16.msra.mxu0 %v588
    %599 = vmatprep.subr.bf16.mxu0 0
    %600 = vmatpush1.bf16.msra.mxu0 %v589
    %601 = vmatprep.subr.bf16.mxu0 0
    %602 = vmatpush1.bf16.msra.mxu0 0
    %603 = vmatprep.subr.bf16.mxu0 0
    %604 = vmatpush1.bf16.msra.mxu0 0
    %605 = vmatprep.subr.bf16.mxu0 0
    %606 = vmatpush1.bf16.msra.mxu0 0
    %607 = vmatprep.subr.bf16.mxu0 0
    %608 = vmatpush1.bf16.msra.mxu0 0
    %609 = vmatprep.subr.bf16.mxu0 0
    %610 = vmatpush1.bf16.msra.mxu0 0
    %611 = vmatprep.subr.bf16.mxu0 0
    %612 = vmatpush1.bf16.msra.mxu0 0
    %613 = vmatprep.subr.bf16.mxu0 0
    %614 = vmatpush1.bf16.msra.mxu0 0
    %615 = vmatprep.subr.bf16.mxu0 0
    %616 = vmatpush1.bf16.msra.mxu0 0
    %617 = vmatprep.subr.bf16.mxu0 0
    %618 = vmatpush1.bf16.msra.mxu0 0
    %619 = vmatprep.subr.bf16.mxu0 0
    %620 = vmatpush1.bf16.msra.mxu0 0
    %621 = vmatprep.subr.bf16.mxu0 0
    %622 = vmatpush1.bf16.msra.mxu0 0
    %623 = vmatprep.subr.bf16.mxu0 0
    %624 = vmatpush1.bf16.msra.mxu0 0
    %625 = vmatprep.mubr.bf16.mxu0 0
    %626 = vmatmul.mubr.bf16.gmra.mrb[0].mxu0 %v591
    %v627 = vpop.f32.mrb[0].mxu0
    %v628 = vadd.f32 0.0, %v627
    %v629 = vpop.f32.mrb[0].mxu0
    %v630 = vpop.f32.mrb[0].mxu0
    %v631 = vadd.f32 0.0, %v630
    %v632 = vpop.f32.mrb[0].mxu0
    %633 = vdwg.mxu0
    %v634 = vmul.f32 %v628, 0.125
    %v635 = vmul.f32 %v631, 0.125
    %v636 = vadd.f32 %v634, %v210
    %v637 = vadd.f32 %v635, %v211
    %vm638 = vcmask 130048
    %v639 = vsel %vm638, %v636, -inf
    %640 = vmax.xlane.f32.xlu0 %v639
    %v641 = vpop.xlane.xlu0 %640
    %v642 = vsel %vm638, %v637, -inf
    %643 = vmax.xlane.f32.xlu0 %v642
    %v644 = vpop.xlane.xlu0 %643
    %v645 = vsub.f32 %v636, %v641
    %v646 = vsub.f32 %v637, %v644
    %v647 = vmul.f32 %v645, 1.442695
    %v648 = vpow.pop %v647
    %v649 = vmul.f32 %v646, 1.442695
    %v650 = vpow.pop %v649
    %v651 = vsel %vm638, %v648, 0.0
    %652 = vadd.xlane.f32.xlu0 %v651
    %v653 = vpop.xlane.xlu0 %652
    %v654 = vsel %vm638, %v650, 0.0
    %655 = vadd.xlane.f32.xlu0 %v654
    %v656 = vpop.xlane.xlu0 %655
    %v657 = vrcp.pop %v653
    %v658 = vrcp.pop %v656
    %v659 = vmul.f32 %v648, %v657
    %v660 = vmul.f32 %v650, %v658
    %v661 = vpack.c.bf16 %v660, %v659
    %v662 = vpack.c.bf16 %v550, %v547
    %v664 = vsel %vm638, %v661, 0
    %666 = vmatprep.subr.bf16.mxu0 0
    %667 = vmatpush1.bf16.msra.mxu0 %v662
    %668 = vmatprep.subr.bf16.mxu0 0
    %669 = vmatpush1.bf16.msra.mxu0 0
    %670 = vmatprep.subr.bf16.mxu0 0
    %671 = vmatpush1.bf16.msra.mxu0 0
    %672 = vmatprep.subr.bf16.mxu0 0
    %673 = vmatpush1.bf16.msra.mxu0 0
    %674 = vmatprep.subr.bf16.mxu0 0
    %675 = vmatpush1.bf16.msra.mxu0 0
    %676 = vmatprep.subr.bf16.mxu0 0
    %677 = vmatpush1.bf16.msra.mxu0 0
    %678 = vmatprep.subr.bf16.mxu0 0
    %679 = vmatpush1.bf16.msra.mxu0 0
    %680 = vmatprep.subr.bf16.mxu0 0
    %681 = vmatpush1.bf16.msra.mxu0 0
    %682 = vmatprep.subr.bf16.mxu0 0
    %683 = vmatpush1.bf16.msra.mxu0 0
    %684 = vmatprep.subr.bf16.mxu0 0
    %685 = vmatpush1.bf16.msra.mxu0 0
    %686 = vmatprep.subr.bf16.mxu0 0
    %687 = vmatpush1.bf16.msra.mxu0 0
    %688 = vmatprep.subr.bf16.mxu0 0
    %689 = vmatpush1.bf16.msra.mxu0 0
    %690 = vmatprep.subr.bf16.mxu0 0
    %691 = vmatpush1.bf16.msra.mxu0 0
    %692 = vmatprep.subr.bf16.mxu0 0
    %693 = vmatpush1.bf16.msra.mxu0 0
    %694 = vmatprep.subr.bf16.mxu0 0
    %695 = vmatpush1.bf16.msra.mxu0 0
    %696 = vmatprep.subr.bf16.mxu0 0
    %697 = vmatpush1.bf16.msra.mxu0 0
    %698 = vmatprep.mubr.bf16.mxu0 0
    %699 = vmatmul.mubr.bf16.gmra.mrb[0].mxu0 %v664
    %v700 = vpop.f32.mrb[0].mxu0
    %v701 = vadd.f32 0.0, %v700
    %v702 = vpop.f32.mrb[0].mxu0
    %v703 = vpop.f32.mrb[0].mxu0
    %v704 = vadd.f32 0.0, %v703
    %v705 = vpop.f32.mrb[0].mxu0
    %706 = vdwg.mxu0
    %v707 = vpack.c.bf16 %v704, %v701
    %v708 = vld [vmem:[%s5] sm:$0xf]
    %v709 = vld [vmem:[%s5 + $0x4] sm:$0xf]
    %v710 = vld [vmem:[%s5 + $0x8] sm:$0xf]
    %v711 = vld [vmem:[%s5 + $0xc] sm:$0xf]
    %v712 = vld [vmem:[%s5 + $0x10] sm:$0xf]
    %v713 = vld [vmem:[%s5 + $0x14] sm:$0xf]
    %v714 = vld [vmem:[%s5 + $0x18] sm:$0xf]
    %v715 = vld [vmem:[%s5 + $0x1c] sm:$0xf]
    %s716 = scalar_lea.vmem %s3, 192
    %v717 = vld [vmem:[%s716] sm:$0xf]
    %v718 = vld [vmem:[%s716 + $0x4] sm:$0xf]
    %v719 = vld [vmem:[%s716 + $0x8] sm:$0xf]
    %v720 = vld [vmem:[%s716 + $0xc] sm:$0xf]
    %v721 = vld [vmem:[%s716 + $0x10] sm:$0xf]
    %v722 = vld [vmem:[%s716 + $0x14] sm:$0xf]
    %v723 = vld [vmem:[%s716 + $0x18] sm:$0xf]
    %v724 = vld [vmem:[%s716 + $0x1c] sm:$0xf]
    %v725 = vld [vmem:[%s716 + $0x20] sm:$0xf]
    %v726 = vld [vmem:[%s716 + $0x24] sm:$0xf]
    %v727 = vld [vmem:[%s716 + $0x28] sm:$0xf]
    %v728 = vld [vmem:[%s716 + $0x2c] sm:$0xf]
    %v729 = vld [vmem:[%s716 + $0x30] sm:$0xf]
    %v730 = vld [vmem:[%s716 + $0x34] sm:$0xf]
    %v731 = vld [vmem:[%s716 + $0x38] sm:$0xf]
    %v732 = vld [vmem:[%s716 + $0x3c] sm:$0xf]
    %s733 = scalar_lea.vmem %s4, 3
    %v734 = vld [vmem:[%s733] sm:$0x1]
    %v736 = vlaneseq
    %v737 = vshrl.u32 %v736, 7
    %v738 = vsub.s32 0, %v737
    %v739 = vrot.slane %v734, %v738
    %v757 = vunpack.c.l.b16 %v717
    %v758 = vunpack.c.l.b16 %v718
    %v759 = vunpack.c.l.b16 %v719
    %v760 = vunpack.c.l.b16 %v720
    %v761 = vunpack.c.l.b16 %v721
    %v762 = vunpack.c.l.b16 %v722
    %v763 = vunpack.c.l.b16 %v723
    %v764 = vunpack.c.l.b16 %v724
    %v765 = vunpack.c.l.b16 %v725
    %v766 = vunpack.c.l.b16 %v726
    %v767 = vunpack.c.l.b16 %v727
    %v768 = vunpack.c.l.b16 %v728
    %v769 = vunpack.c.l.b16 %v729
    %v770 = vunpack.c.l.b16 %v730
    %v771 = vunpack.c.l.b16 %v731
    %v772 = vunpack.c.l.b16 %v732
    %v773 = vpack.c.b16 %v758, %v757
    %v774 = vpack.c.b16 %v760, %v759
    %v775 = vpack.c.b16 %v762, %v761
    %v776 = vpack.c.b16 %v764, %v763
    %v777 = vpack.c.b16 %v766, %v765
    %v778 = vpack.c.b16 %v768, %v767
    %v779 = vpack.c.b16 %v770, %v769
    %v780 = vpack.c.b16 %v772, %v771
    %789 = vmatprep.subr.bf16.mxu0 0
    %790 = vmatpush1.bf16.msra.mxu0 %v773
    %791 = vmatprep.subr.bf16.mxu0 0
    %792 = vmatpush1.bf16.msra.mxu0 %v774
    %793 = vmatprep.subr.bf16.mxu0 0
    %794 = vmatpush1.bf16.msra.mxu0 %v775
    %795 = vmatprep.subr.bf16.mxu0 0
    %796 = vmatpush1.bf16.msra.mxu0 %v776
    %797 = vmatprep.subr.bf16.mxu0 0
    %798 = vmatpush1.bf16.msra.mxu0 %v777
    %799 = vmatprep.subr.bf16.mxu0 0
    %800 = vmatpush1.bf16.msra.mxu0 %v778
    %801 = vmatprep.subr.bf16.mxu0 0
    %802 = vmatpush1.bf16.msra.mxu0 %v779
    %803 = vmatprep.subr.bf16.mxu0 0
    %804 = vmatpush1.bf16.msra.mxu0 %v780
    %805 = vmatprep.subr.bf16.mxu0 0
    %806 = vmatpush1.bf16.msra.mxu0 0
    %807 = vmatprep.subr.bf16.mxu0 0
    %808 = vmatpush1.bf16.msra.mxu0 0
    %809 = vmatprep.subr.bf16.mxu0 0
    %810 = vmatpush1.bf16.msra.mxu0 0
    %811 = vmatprep.subr.bf16.mxu0 0
    %812 = vmatpush1.bf16.msra.mxu0 0
    %813 = vmatprep.subr.bf16.mxu0 0
    %814 = vmatpush1.bf16.msra.mxu0 0
    %815 = vmatprep.subr.bf16.mxu0 0
    %816 = vmatpush1.bf16.msra.mxu0 0
    %817 = vmatprep.subr.bf16.mxu0 0
    %818 = vmatpush1.bf16.msra.mxu0 0
    %819 = vmatprep.subr.bf16.mxu0 0
    %820 = vmatpush1.bf16.msra.mxu0 0
    %821 = vmatprep.mubr.bf16.mxu0 0
    %822 = vmatmul.mubr.bf16.gmra.mrb[0].mxu0 %v212
    %v823 = vpop.f32.mrb[0].mxu0
    %v824 = vadd.f32 %v739, %v823
    %v825 = vpop.f32.mrb[0].mxu0
    %v826 = vpop.f32.mrb[0].mxu0
    %v827 = vadd.f32 %v739, %v826
    %v828 = vpop.f32.mrb[0].mxu0
    %829 = vdwg.mxu0
    %s830 = scalar_lea.vmem %s3, 256
    %v831 = vld [vmem:[%s830] sm:$0xf]
    %v832 = vld [vmem:[%s830 + $0x4] sm:$0xf]
    %v833 = vld [vmem:[%s830 + $0x8] sm:$0xf]
    %v834 = vld [vmem:[%s830 + $0xc] sm:$0xf]
    %v835 = vld [vmem:[%s830 + $0x10] sm:$0xf]
    %v836 = vld [vmem:[%s830 + $0x14] sm:$0xf]
    %v837 = vld [vmem:[%s830 + $0x18] sm:$0xf]
    %v838 = vld [vmem:[%s830 + $0x1c] sm:$0xf]
    %v839 = vld [vmem:[%s830 + $0x20] sm:$0xf]
    %v840 = vld [vmem:[%s830 + $0x24] sm:$0xf]
    %v841 = vld [vmem:[%s830 + $0x28] sm:$0xf]
    %v842 = vld [vmem:[%s830 + $0x2c] sm:$0xf]
    %v843 = vld [vmem:[%s830 + $0x30] sm:$0xf]
    %v844 = vld [vmem:[%s830 + $0x34] sm:$0xf]
    %v845 = vld [vmem:[%s830 + $0x38] sm:$0xf]
    %v846 = vld [vmem:[%s830 + $0x3c] sm:$0xf]
    %s847 = scalar_lea.vmem %s4, 4
    %v848 = vld [vmem:[%s847] sm:$0x1]
    %v850 = vlaneseq
    %v851 = vshrl.u32 %v850, 7
    %v852 = vsub.s32 0, %v851
    %v853 = vrot.slane %v848, %v852
    %v871 = vunpack.c.l.b16 %v831
    %v872 = vunpack.c.l.b16 %v832
    %v873 = vunpack.c.l.b16 %v833
    %v874 = vunpack.c.l.b16 %v834
    %v875 = vunpack.c.l.b16 %v835
    %v876 = vunpack.c.l.b16 %v836
    %v877 = vunpack.c.l.b16 %v837
    %v878 = vunpack.c.l.b16 %v838
    %v879 = vunpack.c.l.b16 %v839
    %v880 = vunpack.c.l.b16 %v840
    %v881 = vunpack.c.l.b16 %v841
    %v882 = vunpack.c.l.b16 %v842
    %v883 = vunpack.c.l.b16 %v843
    %v884 = vunpack.c.l.b16 %v844
    %v885 = vunpack.c.l.b16 %v845
    %v886 = vunpack.c.l.b16 %v846
    %v887 = vpack.c.b16 %v872, %v871
    %v888 = vpack.c.b16 %v874, %v873
    %v889 = vpack.c.b16 %v876, %v875
    %v890 = vpack.c.b16 %v878, %v877
    %v891 = vpack.c.b16 %v880, %v879
    %v892 = vpack.c.b16 %v882, %v881
    %v893 = vpack.c.b16 %v884, %v883
    %v894 = vpack.c.b16 %v886, %v885
    %903 = vmatprep.subr.bf16.mxu0 0
    %904 = vmatpush1.bf16.msra.mxu0 %v887
    %905 = vmatprep.subr.bf16.mxu0 0
    %906 = vmatpush1.bf16.msra.mxu0 %v888
    %907 = vmatprep.subr.bf16.mxu0 0
    %908 = vmatpush1.bf16.msra.mxu0 %v889
    %909 = vmatprep.subr.bf16.mxu0 0
    %910 = vmatpush1.bf16.msra.mxu0 %v890
    %911 = vmatprep.subr.bf16.mxu0 0
    %912 = vmatpush1.bf16.msra.mxu0 %v891
    %913 = vmatprep.subr.bf16.mxu0 0
    %914 = vmatpush1.bf16.msra.mxu0 %v892
    %915 = vmatprep.subr.bf16.mxu0 0
    %916 = vmatpush1.bf16.msra.mxu0 %v893
    %917 = vmatprep.subr.bf16.mxu0 0
    %918 = vmatpush1.bf16.msra.mxu0 %v894
    %919 = vmatprep.subr.bf16.mxu0 0
    %920 = vmatpush1.bf16.msra.mxu0 0
    %921 = vmatprep.subr.bf16.mxu0 0
    %922 = vmatpush1.bf16.msra.mxu0 0
    %923 = vmatprep.subr.bf16.mxu0 0
    %924 = vmatpush1.bf16.msra.mxu0 0
    %925 = vmatprep.subr.bf16.mxu0 0
    %926 = vmatpush1.bf16.msra.mxu0 0
    %927 = vmatprep.subr.bf16.mxu0 0
    %928 = vmatpush1.bf16.msra.mxu0 0
    %929 = vmatprep.subr.bf16.mxu0 0
    %930 = vmatpush1.bf16.msra.mxu0 0
    %931 = vmatprep.subr.bf16.mxu0 0
    %932 = vmatpush1.bf16.msra.mxu0 0
    %933 = vmatprep.subr.bf16.mxu0 0
    %934 = vmatpush1.bf16.msra.mxu0 0
    %935 = vmatprep.mubr.bf16.mxu0 0
    %936 = vmatmul.mubr.bf16.gmra.mrb[0].mxu0 %v212
    %v937 = vpop.f32.mrb[0].mxu0
    %v938 = vadd.f32 %v853, %v937
    %v939 = vpop.f32.mrb[0].mxu0
    %v940 = vpop.f32.mrb[0].mxu0
    %v941 = vadd.f32 %v853, %v940
    %v942 = vpop.f32.mrb[0].mxu0
    %943 = vdwg.mxu0
    %s944 = scalar_lea.vmem %s3, 320
    %v945 = vld [vmem:[%s944] sm:$0xf]
    %v946 = vld [vmem:[%s944 + $0x4] sm:$0xf]
    %v947 = vld [vmem:[%s944 + $0x8] sm:$0xf]
    %v948 = vld [vmem:[%s944 + $0xc] sm:$0xf]
    %v949 = vld [vmem:[%s944 + $0x10] sm:$0xf]
    %v950 = vld [vmem:[%s944 + $0x14] sm:$0xf]
    %v951 = vld [vmem:[%s944 + $0x18] sm:$0xf]
    %v952 = vld [vmem:[%s944 + $0x1c] sm:$0xf]
    %v953 = vld [vmem:[%s944 + $0x20] sm:$0xf]
    %v954 = vld [vmem:[%s944 + $0x24] sm:$0xf]
    %v955 = vld [vmem:[%s944 + $0x28] sm:$0xf]
    %v956 = vld [vmem:[%s944 + $0x2c] sm:$0xf]
    %v957 = vld [vmem:[%s944 + $0x30] sm:$0xf]
    %v958 = vld [vmem:[%s944 + $0x34] sm:$0xf]
    %v959 = vld [vmem:[%s944 + $0x38] sm:$0xf]
    %v960 = vld [vmem:[%s944 + $0x3c] sm:$0xf]
    %s961 = scalar_lea.vmem %s4, 5
    %v962 = vld [vmem:[%s961] sm:$0x1]
    %v964 = vlaneseq
    %v965 = vshrl.u32 %v964, 7
    %v966 = vsub.s32 0, %v965
    %v967 = vrot.slane %v962, %v966
    %v985 = vunpack.c.l.b16 %v945
    %v986 = vunpack.c.l.b16 %v946
    %v987 = vunpack.c.l.b16 %v947
    %v988 = vunpack.c.l.b16 %v948
    %v989 = vunpack.c.l.b16 %v949
    %v990 = vunpack.c.l.b16 %v950
    %v991 = vunpack.c.l.b16 %v951
    %v992 = vunpack.c.l.b16 %v952
    %v993 = vunpack.c.l.b16 %v953
    %v994 = vunpack.c.l.b16 %v954
    %v995 = vunpack.c.l.b16 %v955
    %v996 = vunpack.c.l.b16 %v956
    %v997 = vunpack.c.l.b16 %v957
    %v998 = vunpack.c.l.b16 %v958
    %v999 = vunpack.c.l.b16 %v959
    %v1000 = vunpack.c.l.b16 %v960
    %v1001 = vpack.c.b16 %v986, %v985
    %v1002 = vpack.c.b16 %v988, %v987
    %v1003 = vpack.c.b16 %v990, %v989
    %v1004 = vpack.c.b16 %v992, %v991
    %v1005 = vpack.c.b16 %v994, %v993
    %v1006 = vpack.c.b16 %v996, %v995
    %v1007 = vpack.c.b16 %v998, %v997
    %v1008 = vpack.c.b16 %v1000, %v999
    %1017 = vmatprep.subr.bf16.mxu0 0
    %1018 = vmatpush1.bf16.msra.mxu0 %v1001
    %1019 = vmatprep.subr.bf16.mxu0 0
    %1020 = vmatpush1.bf16.msra.mxu0 %v1002
    %1021 = vmatprep.subr.bf16.mxu0 0
    %1022 = vmatpush1.bf16.msra.mxu0 %v1003
    %1023 = vmatprep.subr.bf16.mxu0 0
    %1024 = vmatpush1.bf16.msra.mxu0 %v1004
    %1025 = vmatprep.subr.bf16.mxu0 0
    %1026 = vmatpush1.bf16.msra.mxu0 %v1005
    %1027 = vmatprep.subr.bf16.mxu0 0
    %1028 = vmatpush1.bf16.msra.mxu0 %v1006
    %1029 = vmatprep.subr.bf16.mxu0 0
    %1030 = vmatpush1.bf16.msra.mxu0 %v1007
    %1031 = vmatprep.subr.bf16.mxu0 0
    %1032 = vmatpush1.bf16.msra.mxu0 %v1008
    %1033 = vmatprep.subr.bf16.mxu0 0
    %1034 = vmatpush1.bf16.msra.mxu0 0
    %1035 = vmatprep.subr.bf16.mxu0 0
    %1036 = vmatpush1.bf16.msra.mxu0 0
    %1037 = vmatprep.subr.bf16.mxu0 0
    %1038 = vmatpush1.bf16.msra.mxu0 0
    %1039 = vmatprep.subr.bf16.mxu0 0
    %1040 = vmatpush1.bf16.msra.mxu0 0
    %1041 = vmatprep.subr.bf16.mxu0 0
    %1042 = vmatpush1.bf16.msra.mxu0 0
    %1043 = vmatprep.subr.bf16.mxu0 0
    %1044 = vmatpush1.bf16.msra.mxu0 0
    %1045 = vmatprep.subr.bf16.mxu0 0
    %1046 = vmatpush1.bf16.msra.mxu0 0
    %1047 = vmatprep.subr.bf16.mxu0 0
    %1048 = vmatpush1.bf16.msra.mxu0 0
    %1049 = vmatprep.mubr.bf16.mxu0 0
    %1050 = vmatmul.mubr.bf16.gmra.mrb[0].mxu0 %v212
    %v1051 = vpop.f32.mrb[0].mxu0
    %v1052 = vadd.f32 %v967, %v1051
    %v1053 = vpop.f32.mrb[0].mxu0
    %v1054 = vpop.f32.mrb[0].mxu0
    %v1055 = vadd.f32 %v967, %v1054
    %v1056 = vpop.f32.mrb[0].mxu0
    %1057 = vdwg.mxu0
    %v1058 = vpack.c.bf16 %v827, %v824
    %1059 = vxpose.xlu0.b32.start [1/16] %v938, 128
    %1060 = vxpose.xlu0.b32.cont [2/16] %v941, 128
    %1061 = vxpose.xlu0.b32.cont [3/16] 0.0, 128
    %1062 = vxpose.xlu0.b32.cont [4/16] 0.0, 128
    %1063 = vxpose.xlu0.b32.cont [5/16] 0.0, 128
    %1064 = vxpose.xlu0.b32.cont [6/16] 0.0, 128
    %1065 = vxpose.xlu0.b32.cont [7/16] 0.0, 128
    %1066 = vxpose.xlu0.b32.cont [8/16] 0.0, 128
    %1067 = vxpose.xlu0.b32.cont [9/16] 0.0, 128
    %1068 = vxpose.xlu0.b32.cont [10/16] 0.0, 128
    %1069 = vxpose.xlu0.b32.cont [11/16] 0.0, 128
    %1070 = vxpose.xlu0.b32.cont [12/16] 0.0, 128
    %1071 = vxpose.xlu0.b32.cont [13/16] 0.0, 128
    %1072 = vxpose.xlu0.b32.cont [14/16] 0.0, 128
    %1073 = vxpose.xlu0.b32.cont [15/16] 0.0, 128
    %1074 = vxpose.xlu0.b32.end [16/16] 0.0, 128
    %v1075 = vpop.trf.xlu0
    %v1076 = vpop.trf.xlu0
    %v1077 = vpop.trf.xlu0
    %v1078 = vpop.trf.xlu0
    %v1079 = vpop.trf.xlu0
    %v1080 = vpop.trf.xlu0
    %v1081 = vpop.trf.xlu0
    %v1082 = vpop.trf.xlu0
    %v1083 = vpop.trf.xlu0
    %v1084 = vpop.trf.xlu0
    %v1085 = vpop.trf.xlu0
    %v1086 = vpop.trf.xlu0
    %v1087 = vpop.trf.xlu0
    %v1088 = vpop.trf.xlu0
    %v1089 = vpop.trf.xlu0
    %v1090 = vpop.trf.xlu0
    %v1091 = vpack.c.bf16 %v1076, %v1075
    %v1092 = vpack.c.bf16 %v1078, %v1077
    %v1093 = vpack.c.bf16 %v1080, %v1079
    %v1094 = vpack.c.bf16 %v1082, %v1081
    %v1096 = vsel %vm111, %v1058, 0
    %1098 = vmatprep.subr.bf16.mxu0 0
    %1099 = vmatpush1.bf16.msra.mxu0 %v1091
    %1100 = vmatprep.subr.bf16.mxu0 0
    %1101 = vmatpush1.bf16.msra.mxu0 %v1092
    %1102 = vmatprep.subr.bf16.mxu0 0
    %1103 = vmatpush1.bf16.msra.mxu0 %v1093
    %1104 = vmatprep.subr.bf16.mxu0 0
    %1105 = vmatpush1.bf16.msra.mxu0 %v1094
    %1106 = vmatprep.subr.bf16.mxu0 0
    %1107 = vmatpush1.bf16.msra.mxu0 0
    %1108 = vmatprep.subr.bf16.mxu0 0
    %1109 = vmatpush1.bf16.msra.mxu0 0
    %1110 = vmatprep.subr.bf16.mxu0 0
    %1111 = vmatpush1.bf16.msra.mxu0 0
    %1112 = vmatprep.subr.bf16.mxu0 0
    %1113 = vmatpush1.bf16.msra.mxu0 0
    %1114 = vmatprep.subr.bf16.mxu0 0
    %1115 = vmatpush1.bf16.msra.mxu0 0
    %1116 = vmatprep.subr.bf16.mxu0 0
    %1117 = vmatpush1.bf16.msra.mxu0 0
    %1118 = vmatprep.subr.bf16.mxu0 0
    %1119 = vmatpush1.bf16.msra.mxu0 0
    %1120 = vmatprep.subr.bf16.mxu0 0
    %1121 = vmatpush1.bf16.msra.mxu0 0
    %1122 = vmatprep.subr.bf16.mxu0 0
    %1123 = vmatpush1.bf16.msra.mxu0 0
    %1124 = vmatprep.subr.bf16.mxu0 0
    %1125 = vmatpush1.bf16.msra.mxu0 0
    %1126 = vmatprep.subr.bf16.mxu0 0
    %1127 = vmatpush1.bf16.msra.mxu0 0
    %1128 = vmatprep.subr.bf16.mxu0 0
    %1129 = vmatpush1.bf16.msra.mxu0 0
    %1130 = vmatprep.mubr.bf16.mxu0 0
    %1131 = vmatmul.mubr.bf16.gmra.mrb[0].mxu0 %v1096
    %v1132 = vpop.f32.mrb[0].mxu0
    %v1133 = vadd.f32 0.0, %v1132
    %v1134 = vpop.f32.mrb[0].mxu0
    %v1135 = vpop.f32.mrb[0].mxu0
    %v1136 = vadd.f32 0.0, %v1135
    %v1137 = vpop.f32.mrb[0].mxu0
    %1138 = vdwg.mxu0
    %v1139 = vmul.f32 %v1133, 0.125
    %v1140 = vmul.f32 %v1136, 0.125
    %v1141 = vadd.f32 %v1139, %v210
    %v1142 = vadd.f32 %v1140, %v211
    %v1143 = vsel %vm638, %v1141, -inf
    %1144 = vmax.xlane.f32.xlu0 %v1143
    %v1145 = vpop.xlane.xlu0 %1144
    %v1146 = vsel %vm638, %v1142, -inf
    %1147 = vmax.xlane.f32.xlu0 %v1146
    %v1148 = vpop.xlane.xlu0 %1147
    %v1149 = vsub.f32 %v1141, %v1145
    %v1150 = vsub.f32 %v1142, %v1148
    %v1151 = vmul.f32 %v1149, 1.442695
    %v1152 = vpow.pop %v1151
    %v1153 = vmul.f32 %v1150, 1.442695
    %v1154 = vpow.pop %v1153
    %v1155 = vsel %vm638, %v1152, 0.0
    %1156 = vadd.xlane.f32.xlu0 %v1155
    %v1157 = vpop.xlane.xlu0 %1156
    %v1158 = vsel %vm638, %v1154, 0.0
    %1159 = vadd.xlane.f32.xlu0 %v1158
    %v1160 = vpop.xlane.xlu0 %1159
    %v1161 = vrcp.pop %v1157
    %v1162 = vrcp.pop %v1160
    %v1163 = vmul.f32 %v1152, %v1161
    %v1164 = vmul.f32 %v1154, %v1162
    %v1165 = vpack.c.bf16 %v1164, %v1163
    %v1166 = vpack.c.bf16 %v1055, %v1052
    %v1168 = vsel %vm638, %v1165, 0
    %1170 = vmatprep.subr.bf16.mxu0 0
    %1171 = vmatpush1.bf16.msra.mxu0 %v1166
    %1172 = vmatprep.subr.bf16.mxu0 0
    %1173 = vmatpush1.bf16.msra.mxu0 0
    %1174 = vmatprep.subr.bf16.mxu0 0
    %1175 = vmatpush1.bf16.msra.mxu0 0
    %1176 = vmatprep.subr.bf16.mxu0 0
    %1177 = vmatpush1.bf16.msra.mxu0 0
    %1178 = vmatprep.subr.bf16.mxu0 0
    %1179 = vmatpush1.bf16.msra.mxu0 0
    %1180 = vmatprep.subr.bf16.mxu0 0
    %1181 = vmatpush1.bf16.msra.mxu0 0
    %1182 = vmatprep.subr.bf16.mxu0 0
    %1183 = vmatpush1.bf16.msra.mxu0 0
    %1184 = vmatprep.subr.bf16.mxu0 0
    %1185 = vmatpush1.bf16.msra.mxu0 0
    %1186 = vmatprep.subr.bf16.mxu0 0
    %1187 = vmatpush1.bf16.msra.mxu0 0
    %1188 = vmatprep.subr.bf16.mxu0 0
    %1189 = vmatpush1.bf16.msra.mxu0 0
    %1190 = vmatprep.subr.bf16.mxu0 0
    %1191 = vmatpush1.bf16.msra.mxu0 0
    %1192 = vmatprep.subr.bf16.mxu0 0
    %1193 = vmatpush1.bf16.msra.mxu0 0
    %1194 = vmatprep.subr.bf16.mxu0 0
    %1195 = vmatpush1.bf16.msra.mxu0 0
    %1196 = vmatprep.subr.bf16.mxu0 0
    %1197 = vmatpush1.bf16.msra.mxu0 0
    %1198 = vmatprep.subr.bf16.mxu0 0
    %1199 = vmatpush1.bf16.msra.mxu0 0
    %1200 = vmatprep.subr.bf16.mxu0 0
    %1201 = vmatpush1.bf16.msra.mxu0 0
    %1202 = vmatprep.mubr.bf16.mxu0 0
    %1203 = vmatmul.mubr.bf16.gmra.mrb[0].mxu0 %v1168
    %v1204 = vpop.f32.mrb[0].mxu0
    %v1205 = vadd.f32 0.0, %v1204
    %v1206 = vpop.f32.mrb[0].mxu0
    %v1207 = vpop.f32.mrb[0].mxu0
    %v1208 = vadd.f32 0.0, %v1207
    %v1209 = vpop.f32.mrb[0].mxu0
    %1210 = vdwg.mxu0
    %v1211 = vpack.c.bf16 %v1208, %v1205
    %s1212 = scalar_lea.vmem %s5, 32
    %v1213 = vld [vmem:[%s1212] sm:$0xf]
    %v1214 = vld [vmem:[%s1212 + $0x4] sm:$0xf]
    %v1215 = vld [vmem:[%s1212 + $0x8] sm:$0xf]
    %v1216 = vld [vmem:[%s1212 + $0xc] sm:$0xf]
    %v1217 = vld [vmem:[%s1212 + $0x10] sm:$0xf]
    %v1218 = vld [vmem:[%s1212 + $0x14] sm:$0xf]
    %v1219 = vld [vmem:[%s1212 + $0x18] sm:$0xf]
    %v1220 = vld [vmem:[%s1212 + $0x1c] sm:$0xf]
    %v1229 = vunpack.c.l.b16 %v1213
    %v1230 = vunpack.c.l.b16 %v1214
    %v1231 = vunpack.c.l.b16 %v1215
    %v1232 = vunpack.c.l.b16 %v1216
    %v1233 = vunpack.c.l.b16 %v1217
    %v1234 = vunpack.c.l.b16 %v1218
    %v1235 = vunpack.c.l.b16 %v1219
    %v1236 = vunpack.c.l.b16 %v1220
    %v1237 = vpack.c.b16 %v1230, %v1229
    %v1238 = vpack.c.b16 %v1232, %v1231
    %v1239 = vpack.c.b16 %v1234, %v1233
    %v1240 = vpack.c.b16 %v1236, %v1235
    %v1246 = vsel %vm111, %v1211, 0
    %1248 = vmatprep.subr.bf16.mxu0 0
    %1249 = vmatpush1.bf16.msra.mxu0 %v1237
    %1250 = vmatprep.subr.bf16.mxu0 0
    %1251 = vmatpush1.bf16.msra.mxu0 %v1238
    %1252 = vmatprep.subr.bf16.mxu0 0
    %1253 = vmatpush1.bf16.msra.mxu0 %v1239
    %1254 = vmatprep.subr.bf16.mxu0 0
    %1255 = vmatpush1.bf16.msra.mxu0 %v1240
    %1256 = vmatprep.subr.bf16.mxu0 0
    %1257 = vmatpush1.bf16.msra.mxu0 0
    %1258 = vmatprep.subr.bf16.mxu0 0
    %1259 = vmatpush1.bf16.msra.mxu0 0
    %1260 = vmatprep.subr.bf16.mxu0 0
    %1261 = vmatpush1.bf16.msra.mxu0 0
    %1262 = vmatprep.subr.bf16.mxu0 0
    %1263 = vmatpush1.bf16.msra.mxu0 0
    %1264 = vmatprep.subr.bf16.mxu0 0
    %1265 = vmatpush1.bf16.msra.mxu0 0
    %1266 = vmatprep.subr.bf16.mxu0 0
    %1267 = vmatpush1.bf16.msra.mxu0 0
    %1268 = vmatprep.subr.bf16.mxu0 0
    %1269 = vmatpush1.bf16.msra.mxu0 0
    %1270 = vmatprep.subr.bf16.mxu0 0
    %1271 = vmatpush1.bf16.msra.mxu0 0
    %1272 = vmatprep.subr.bf16.mxu0 0
    %1273 = vmatpush1.bf16.msra.mxu0 0
    %1274 = vmatprep.subr.bf16.mxu0 0
    %1275 = vmatpush1.bf16.msra.mxu0 0
    %1276 = vmatprep.subr.bf16.mxu0 0
    %1277 = vmatpush1.bf16.msra.mxu0 0
    %1278 = vmatprep.subr.bf16.mxu0 0
    %1279 = vmatpush1.bf16.msra.mxu0 0
    %1280 = vmatprep.mubr.bf16.mxu0 0
    %1281 = vmatmul.mubr.bf16.gmra.mrb[0].mxu0 %v1246
    %v1282 = vpop.f32.mrb[0].mxu0
    %v1283 = vadd.f32 0.0, %v1282
    %v1284 = vpop.f32.mrb[0].mxu0
    %v1285 = vpop.f32.mrb[0].mxu0
    %v1286 = vadd.f32 0.0, %v1285
    %v1287 = vpop.f32.mrb[0].mxu0
    %1288 = vdwg.mxu0
    %v1297 = vunpack.c.l.b16 %v708
    %v1298 = vunpack.c.l.b16 %v709
    %v1299 = vunpack.c.l.b16 %v710
    %v1300 = vunpack.c.l.b16 %v711
    %v1301 = vunpack.c.l.b16 %v712
    %v1302 = vunpack.c.l.b16 %v713
    %v1303 = vunpack.c.l.b16 %v714
    %v1304 = vunpack.c.l.b16 %v715
    %v1305 = vpack.c.b16 %v1298, %v1297
    %v1306 = vpack.c.b16 %v1300, %v1299
    %v1307 = vpack.c.b16 %v1302, %v1301
    %v1308 = vpack.c.b16 %v1304, %v1303
    %v1314 = vsel %vm111, %v707, 0
    %1316 = vmatprep.subr.bf16.mxu0 0
    %1317 = vmatpush1.bf16.msra.mxu0 %v1305
    %1318 = vmatprep.subr.bf16.mxu0 0
    %1319 = vmatpush1.bf16.msra.mxu0 %v1306
    %1320 = vmatprep.subr.bf16.mxu0 0
    %1321 = vmatpush1.bf16.msra.mxu0 %v1307
    %1322 = vmatprep.subr.bf16.mxu0 0
    %1323 = vmatpush1.bf16.msra.mxu0 %v1308
    %1324 = vmatprep.subr.bf16.mxu0 0
    %1325 = vmatpush1.bf16.msra.mxu0 0
    %1326 = vmatprep.subr.bf16.mxu0 0
    %1327 = vmatpush1.bf16.msra.mxu0 0
    %1328 = vmatprep.subr.bf16.mxu0 0
    %1329 = vmatpush1.bf16.msra.mxu0 0
    %1330 = vmatprep.subr.bf16.mxu0 0
    %1331 = vmatpush1.bf16.msra.mxu0 0
    %1332 = vmatprep.subr.bf16.mxu0 0
    %1333 = vmatpush1.bf16.msra.mxu0 0
    %1334 = vmatprep.subr.bf16.mxu0 0
    %1335 = vmatpush1.bf16.msra.mxu0 0
    %1336 = vmatprep.subr.bf16.mxu0 0
    %1337 = vmatpush1.bf16.msra.mxu0 0
    %1338 = vmatprep.subr.bf16.mxu0 0
    %1339 = vmatpush1.bf16.msra.mxu0 0
    %1340 = vmatprep.subr.bf16.mxu0 0
    %1341 = vmatpush1.bf16.msra.mxu0 0
    %1342 = vmatprep.subr.bf16.mxu0 0
    %1343 = vmatpush1.bf16.msra.mxu0 0
    %1344 = vmatprep.subr.bf16.mxu0 0
    %1345 = vmatpush1.bf16.msra.mxu0 0
    %1346 = vmatprep.subr.bf16.mxu0 0
    %1347 = vmatpush1.bf16.msra.mxu0 0
    %1348 = vmatprep.mubr.bf16.mxu0 0
    %1349 = vmatmul.mubr.bf16.gmra.mrb[0].mxu0 %v1314
    %v1350 = vpop.f32.mrb[0].mxu0
    %v1351 = vadd.f32 %v1283, %v1350
    %v1352 = vpop.f32.mrb[0].mxu0
    %v1353 = vpop.f32.mrb[0].mxu0
    %v1354 = vadd.f32 %v1286, %v1353
    %v1355 = vpop.f32.mrb[0].mxu0
    %1356 = vdwg.mxu0
    %v1357 = vld [vmem:[%s10 + $0x2] sm:$0x1]
    %v1358 = vlaneseq
    %v1359 = vshrl.u32 %v1358, 7
    %v1360 = vsub.s32 0, %v1359
    %v1361 = vrot.slane %v1357, %v1360
    %v1362 = vadd.f32 %v1351, %v1361
    %v1363 = vadd.f32 %v1354, %v1361
    %v1364 = vadd.f32 %v1362, %v195
    %v1365 = vadd.f32 %v1363, %v196
    %v1366 = vld [vmem:[%s10 + $0x3] sm:$0x1]
    %v1367 = vld [vmem:[%s10 + $0x4] sm:$0x1]
    %1368 = vadd.xlane.f32.xlu0 %v1364
    %v1369 = vpop.xlane.xlu0 %1368
    %1370 = vadd.xlane.f32.xlu0 %v1365
    %v1371 = vpop.xlane.xlu0 %1370
    %v1372 = vmul.f32 %v1369, %v162
    %v1373 = vmul.f32 %v1371, %v162
    %v1374 = vmul.f32 %v1364, %v1364
    %v1375 = vmul.f32 %v1365, %v1365
    %1376 = vadd.xlane.f32.xlu0 %v1374
    %v1377 = vpop.xlane.xlu0 %1376
    %1378 = vadd.xlane.f32.xlu0 %v1375
    %v1379 = vpop.xlane.xlu0 %1378
    %v1380 = vmul.f32 %v1377, %v162
    %v1381 = vmul.f32 %v1379, %v162
    %v1382 = vmul.f32 %v1372, %v1372
    %v1383 = vmul.f32 %v1373, %v1373
    %v1384 = vsub.f32 %v1380, %v1382
    %v1385 = vsub.f32 %v1381, %v1383
    %v1386 = vsub.f32 %v1364, %v1372
    %v1387 = vsub.f32 %v1365, %v1373
    %v1388 = vadd.f32 %v1384, 1e-12
    %v1389 = vadd.f32 %v1385, 1e-12
    %v1390 = vrsqrt.pop %v1388
    %v1391 = vrsqrt.pop %v1389
    %v1392 = vmul.f32 %v1386, %v1390
    %v1393 = vmul.f32 %v1387, %v1391
    %v1394 = vlaneseq
    %v1395 = vshrl.u32 %v1394, 7
    %v1396 = vsub.s32 0, %v1395
    %v1397 = vrot.slane %v1366, %v1396
    %v1398 = vmul.f32 %v1392, %v1397
    %v1399 = vmul.f32 %v1393, %v1397
    %v1400 = vlaneseq
    %v1401 = vshrl.u32 %v1400, 7
    %v1402 = vsub.s32 0, %v1401
    %v1403 = vrot.slane %v1367, %v1402
    %v1404 = vadd.f32 %v1398, %v1403
    %v1405 = vadd.f32 %v1399, %v1403
    %v1406 = vpack.c.bf16 %v1405, %v1404
    %v1407 = vld [vmem:[%s6] sm:$0xff]
    %v1408 = vld [vmem:[%s6 + $0x8] sm:$0xff]
    %v1409 = vld [vmem:[%s6 + $0x10] sm:$0xff]
    %v1410 = vld [vmem:[%s6 + $0x18] sm:$0xff]
    %v1411 = vld [vmem:[%s6 + $0x20] sm:$0xff]
    %v1412 = vld [vmem:[%s6 + $0x28] sm:$0xff]
    %v1413 = vld [vmem:[%s6 + $0x30] sm:$0xff]
    %v1414 = vld [vmem:[%s6 + $0x38] sm:$0xff]
    %v1415 = vld [vmem:[%s6 + $0x40] sm:$0xff]
    %v1416 = vld [vmem:[%s6 + $0x48] sm:$0xff]
    %v1417 = vld [vmem:[%s6 + $0x50] sm:$0xff]
    %v1418 = vld [vmem:[%s6 + $0x58] sm:$0xff]
    %v1419 = vld [vmem:[%s6 + $0x60] sm:$0xff]
    %v1420 = vld [vmem:[%s6 + $0x68] sm:$0xff]
    %v1421 = vld [vmem:[%s6 + $0x70] sm:$0xff]
    %v1422 = vld [vmem:[%s6 + $0x78] sm:$0xff]
    %v1423 = vld [vmem:[%s7] sm:$0x3]
    %v1425 = vlaneseq
    %v1426 = vshrl.u32 %v1425, 7
    %v1427 = vsub.s32 0, %v1426
    %v1428 = vrot.slane %v1423, %v1427
    %v1429 = vlaneseq
    %v1430 = vshrl.u32 %v1429, 7
    %v1431 = vsub.s32 1, %v1430
    %v1432 = vrot.slane %v1423, %v1431
    %v1451 = vunpack.c.l.b16 %v1407
    %v1452 = vunpack.c.h.b16 %v1407
    %v1453 = vunpack.c.l.b16 %v1408
    %v1454 = vunpack.c.h.b16 %v1408
    %v1455 = vunpack.c.l.b16 %v1409
    %v1456 = vunpack.c.h.b16 %v1409
    %v1457 = vunpack.c.l.b16 %v1410
    %v1458 = vunpack.c.h.b16 %v1410
    %v1459 = vunpack.c.l.b16 %v1411
    %v1460 = vunpack.c.h.b16 %v1411
    %v1461 = vunpack.c.l.b16 %v1412
    %v1462 = vunpack.c.h.b16 %v1412
    %v1463 = vunpack.c.l.b16 %v1413
    %v1464 = vunpack.c.h.b16 %v1413
    %v1465 = vunpack.c.l.b16 %v1414
    %v1466 = vunpack.c.h.b16 %v1414
    %v1467 = vunpack.c.l.b16 %v1415
    %v1468 = vunpack.c.h.b16 %v1415
    %v1469 = vunpack.c.l.b16 %v1416
    %v1470 = vunpack.c.h.b16 %v1416
    %v1471 = vunpack.c.l.b16 %v1417
    %v1472 = vunpack.c.h.b16 %v1417
    %v1473 = vunpack.c.l.b16 %v1418
    %v1474 = vunpack.c.h.b16 %v1418
    %v1475 = vunpack.c.l.b16 %v1419
    %v1476 = vunpack.c.h.b16 %v1419
    %v1477 = vunpack.c.l.b16 %v1420
    %v1478 = vunpack.c.h.b16 %v1420
    %v1479 = vunpack.c.l.b16 %v1421
    %v1480 = vunpack.c.h.b16 %v1421
    %v1481 = vunpack.c.l.b16 %v1422
    %v1482 = vunpack.c.h.b16 %v1422
    %v1483 = vpack.c.b16 %v1453, %v1451
    %v1484 = vpack.c.b16 %v1454, %v1452
    %v1485 = vpack.c.b16 %v1457, %v1455
    %v1486 = vpack.c.b16 %v1458, %v1456
    %v1487 = vpack.c.b16 %v1461, %v1459
    %v1488 = vpack.c.b16 %v1462, %v1460
    %v1489 = vpack.c.b16 %v1465, %v1463
    %v1490 = vpack.c.b16 %v1466, %v1464
    %v1491 = vpack.c.b16 %v1469, %v1467
    %v1492 = vpack.c.b16 %v1470, %v1468
    %v1493 = vpack.c.b16 %v1473, %v1471
    %v1494 = vpack.c.b16 %v1474, %v1472
    %v1495 = vpack.c.b16 %v1477, %v1475
    %v1496 = vpack.c.b16 %v1478, %v1476
    %v1497 = vpack.c.b16 %v1481, %v1479
    %v1498 = vpack.c.b16 %v1482, %v1480
    %1515 = vmatprep.subr.bf16.mxu0 %v1484
    %1516 = vmatpush1.bf16.msra.mxu0 %v1483
    %1517 = vmatprep.subr.bf16.mxu0 %v1486
    %1518 = vmatpush1.bf16.msra.mxu0 %v1485
    %1519 = vmatprep.subr.bf16.mxu0 %v1488
    %1520 = vmatpush1.bf16.msra.mxu0 %v1487
    %1521 = vmatprep.subr.bf16.mxu0 %v1490
    %1522 = vmatpush1.bf16.msra.mxu0 %v1489
    %1523 = vmatprep.subr.bf16.mxu0 %v1492
    %1524 = vmatpush1.bf16.msra.mxu0 %v1491
    %1525 = vmatprep.subr.bf16.mxu0 %v1494
    %1526 = vmatpush1.bf16.msra.mxu0 %v1493
    %1527 = vmatprep.subr.bf16.mxu0 %v1496
    %1528 = vmatpush1.bf16.msra.mxu0 %v1495
    %1529 = vmatprep.subr.bf16.mxu0 %v1498
    %1530 = vmatpush1.bf16.msra.mxu0 %v1497
    %1531 = vmatprep.subr.bf16.mxu0 0
    %1532 = vmatpush1.bf16.msra.mxu0 0
    %1533 = vmatprep.subr.bf16.mxu0 0
    %1534 = vmatpush1.bf16.msra.mxu0 0
    %1535 = vmatprep.subr.bf16.mxu0 0
    %1536 = vmatpush1.bf16.msra.mxu0 0
    %1537 = vmatprep.subr.bf16.mxu0 0
    %1538 = vmatpush1.bf16.msra.mxu0 0
    %1539 = vmatprep.subr.bf16.mxu0 0
    %1540 = vmatpush1.bf16.msra.mxu0 0
    %1541 = vmatprep.subr.bf16.mxu0 0
    %1542 = vmatpush1.bf16.msra.mxu0 0
    %1543 = vmatprep.subr.bf16.mxu0 0
    %1544 = vmatpush1.bf16.msra.mxu0 0
    %1545 = vmatprep.subr.bf16.mxu0 0
    %1546 = vmatpush1.bf16.msra.mxu0 0
    %1547 = vmatprep.mubr.bf16.mxu0 0
    %1548 = vmatmul.mubr.bf16.gmra.mrb[0].mxu0 %v1406
    %v1549 = vpop.f32.mrb[0].mxu0
    %v1550 = vadd.f32 %v1428, %v1549
    %v1551 = vpop.f32.mrb[0].mxu0
    %v1552 = vadd.f32 %v1432, %v1551
    %v1553 = vpop.f32.mrb[0].mxu0
    %v1554 = vadd.f32 %v1428, %v1553
    %v1555 = vpop.f32.mrb[0].mxu0
    %v1556 = vadd.f32 %v1432, %v1555
    %1557 = vdwg.mxu0
    %v1558 = vmul.f32 %v1550, %v1550
    %v1559 = vmul.f32 %v1552, %v1552
    %v1560 = vmul.f32 %v1554, %v1554
    %v1561 = vmul.f32 %v1556, %v1556
    %v1562 = vmul.f32 %v1550, %v1558
    %v1563 = vmul.f32 %v1552, %v1559
    %v1564 = vmul.f32 %v1554, %v1560
    %v1565 = vmul.f32 %v1556, %v1561
    %v1566 = vmul.f32 %v1562, 0.044715
    %v1567 = vmul.f32 %v1563, 0.044715
    %v1568 = vmul.f32 %v1564, 0.044715
    %v1569 = vmul.f32 %v1565, 0.044715
    %v1570 = vadd.f32 %v1550, %v1566
    %v1571 = vadd.f32 %v1552, %v1567
    %v1572 = vadd.f32 %v1554, %v1568
    %v1573 = vadd.f32 %v1556, %v1569
    %v1574 = vmul.f32 %v1570, 0.7978846
    %v1575 = vmul.f32 %v1571, 0.7978846
    %v1576 = vmul.f32 %v1572, 0.7978846
    %v1577 = vmul.f32 %v1573, 0.7978846
    %v1578 = vtanh.pop %v1574
    %v1579 = vtanh.pop %v1575
    %v1580 = vtanh.pop %v1576
    %v1581 = vtanh.pop %v1577
    %v1582 = vadd.f32 %v1578, 1.0
    %v1583 = vadd.f32 %v1579, 1.0
    %v1584 = vadd.f32 %v1580, 1.0
    %v1585 = vadd.f32 %v1581, 1.0
    %v1586 = vmul.f32 %v1582, 0.5
    %v1587 = vmul.f32 %v1583, 0.5
    %v1588 = vmul.f32 %v1584, 0.5
    %v1589 = vmul.f32 %v1585, 0.5
    %v1590 = vmul.f32 %v1550, %v1586
    %v1591 = vmul.f32 %v1552, %v1587
    %v1592 = vmul.f32 %v1554, %v1588
    %v1593 = vmul.f32 %v1556, %v1589
    %v1594 = vpack.c.bf16 %v1592, %v1590
    %v1595 = vpack.c.bf16 %v1593, %v1591
    %v1596 = vld [vmem:[%s8] sm:$0xf]
    %v1597 = vld [vmem:[%s8 + $0x4] sm:$0xf]
    %v1598 = vld [vmem:[%s8 + $0x8] sm:$0xf]
    %v1599 = vld [vmem:[%s8 + $0xc] sm:$0xf]
    %v1600 = vld [vmem:[%s8 + $0x10] sm:$0xf]
    %v1601 = vld [vmem:[%s8 + $0x14] sm:$0xf]
    %v1602 = vld [vmem:[%s8 + $0x18] sm:$0xf]
    %v1603 = vld [vmem:[%s8 + $0x1c] sm:$0xf]
    %v1604 = vld [vmem:[%s8 + $0x20] sm:$0xf]
    %v1605 = vld [vmem:[%s8 + $0x24] sm:$0xf]
    %v1606 = vld [vmem:[%s8 + $0x28] sm:$0xf]
    %v1607 = vld [vmem:[%s8 + $0x2c] sm:$0xf]
    %v1608 = vld [vmem:[%s8 + $0x30] sm:$0xf]
    %v1609 = vld [vmem:[%s8 + $0x34] sm:$0xf]
    %v1610 = vld [vmem:[%s8 + $0x38] sm:$0xf]
    %v1611 = vld [vmem:[%s8 + $0x3c] sm:$0xf]
    %v1612 = vld [vmem:[%s8 + $0x40] sm:$0xf]
    %v1613 = vld [vmem:[%s8 + $0x44] sm:$0xf]
    %v1614 = vld [vmem:[%s8 + $0x48] sm:$0xf]
    %v1615 = vld [vmem:[%s8 + $0x4c] sm:$0xf]
    %v1616 = vld [vmem:[%s8 + $0x50] sm:$0xf]
    %v1617 = vld [vmem:[%s8 + $0x54] sm:$0xf]
    %v1618 = vld [vmem:[%s8 + $0x58] sm:$0xf]
    %v1619 = vld [vmem:[%s8 + $0x5c] sm:$0xf]
    %v1620 = vld [vmem:[%s8 + $0x60] sm:$0xf]
    %v1621 = vld [vmem:[%s8 + $0x64] sm:$0xf]
    %v1622 = vld [vmem:[%s8 + $0x68] sm:$0xf]
    %v1623 = vld [vmem:[%s8 + $0x6c] sm:$0xf]
    %v1624 = vld [vmem:[%s8 + $0x70] sm:$0xf]
    %v1625 = vld [vmem:[%s8 + $0x74] sm:$0xf]
    %v1626 = vld [vmem:[%s8 + $0x78] sm:$0xf]
    %v1627 = vld [vmem:[%s8 + $0x7c] sm:$0xf]
    %v1628 = vld [vmem:[%s10 + $0x5] sm:$0x1]
    %v1629 = vlaneseq
    %v1630 = vshrl.u32 %v1629, 7
    %v1631 = vsub.s32 0, %v1630
    %v1632 = vrot.slane %v1628, %v1631
    %v1665 = vunpack.c.l.b16 %v1596
    %v1666 = vunpack.c.l.b16 %v1597
    %v1667 = vunpack.c.l.b16 %v1598
    %v1668 = vunpack.c.l.b16 %v1599
    %v1669 = vunpack.c.l.b16 %v1600
    %v1670 = vunpack.c.l.b16 %v1601
    %v1671 = vunpack.c.l.b16 %v1602
    %v1672 = vunpack.c.l.b16 %v1603
    %v1673 = vunpack.c.l.b16 %v1604
    %v1674 = vunpack.c.l.b16 %v1605
    %v1675 = vunpack.c.l.b16 %v1606
    %v1676 = vunpack.c.l.b16 %v1607
    %v1677 = vunpack.c.l.b16 %v1608
    %v1678 = vunpack.c.l.b16 %v1609
    %v1679 = vunpack.c.l.b16 %v1610
    %v1680 = vunpack.c.l.b16 %v1611
    %v1681 = vunpack.c.l.b16 %v1612
    %v1682 = vunpack.c.l.b16 %v1613
    %v1683 = vunpack.c.l.b16 %v1614
    %v1684 = vunpack.c.l.b16 %v1615
    %v1685 = vunpack.c.l.b16 %v1616
    %v1686 = vunpack.c.l.b16 %v1617
    %v1687 = vunpack.c.l.b16 %v1618
    %v1688 = vunpack.c.l.b16 %v1619
    %v1689 = vunpack.c.l.b16 %v1620
    %v1690 = vunpack.c.l.b16 %v1621
    %v1691 = vunpack.c.l.b16 %v1622
    %v1692 = vunpack.c.l.b16 %v1623
    %v1693 = vunpack.c.l.b16 %v1624
    %v1694 = vunpack.c.l.b16 %v1625
    %v1695 = vunpack.c.l.b16 %v1626
    %v1696 = vunpack.c.l.b16 %v1627
    %v1697 = vpack.c.b16 %v1666, %v1665
    %v1698 = vpack.c.b16 %v1668, %v1667
    %v1699 = vpack.c.b16 %v1670, %v1669
    %v1700 = vpack.c.b16 %v1672, %v1671
    %v1701 = vpack.c.b16 %v1674, %v1673
    %v1702 = vpack.c.b16 %v1676, %v1675
    %v1703 = vpack.c.b16 %v1678, %v1677
    %v1704 = vpack.c.b16 %v1680, %v1679
    %v1705 = vpack.c.b16 %v1682, %v1681
    %v1706 = vpack.c.b16 %v1684, %v1683
    %v1707 = vpack.c.b16 %v1686, %v1685
    %v1708 = vpack.c.b16 %v1688, %v1687
    %v1709 = vpack.c.b16 %v1690, %v1689
    %v1710 = vpack.c.b16 %v1692, %v1691
    %v1711 = vpack.c.b16 %v1694, %v1693
    %v1712 = vpack.c.b16 %v1696, %v1695
    %1729 = vmatprep.subr.bf16.mxu0 0
    %1730 = vmatpush1.bf16.msra.mxu0 %v1697
    %1731 = vmatprep.subr.bf16.mxu0 0
    %1732 = vmatpush1.bf16.msra.mxu0 %v1698
    %1733 = vmatprep.subr.bf16.mxu0 0
    %1734 = vmatpush1.bf16.msra.mxu0 %v1699
    %1735 = vmatprep.subr.bf16.mxu0 0
    %1736 = vmatpush1.bf16.msra.mxu0 %v1700
    %1737 = vmatprep.subr.bf16.mxu0 0
    %1738 = vmatpush1.bf16.msra.mxu0 %v1701
    %1739 = vmatprep.subr.bf16.mxu0 0
    %1740 = vmatpush1.bf16.msra.mxu0 %v1702
    %1741 = vmatprep.subr.bf16.mxu0 0
    %1742 = vmatpush1.bf16.msra.mxu0 %v1703
    %1743 = vmatprep.subr.bf16.mxu0 0
    %1744 = vmatpush1.bf16.msra.mxu0 %v1704
    %1745 = vmatprep.subr.bf16.mxu0 0
    %1746 = vmatpush1.bf16.msra.mxu0 %v1705
    %1747 = vmatprep.subr.bf16.mxu0 0
    %1748 = vmatpush1.bf16.msra.mxu0 %v1706
    %1749 = vmatprep.subr.bf16.mxu0 0
    %1750 = vmatpush1.bf16.msra.mxu0 %v1707
    %1751 = vmatprep.subr.bf16.mxu0 0
    %1752 = vmatpush1.bf16.msra.mxu0 %v1708
    %1753 = vmatprep.subr.bf16.mxu0 0
    %1754 = vmatpush1.bf16.msra.mxu0 %v1709
    %1755 = vmatprep.subr.bf16.mxu0 0
    %1756 = vmatpush1.bf16.msra.mxu0 %v1710
    %1757 = vmatprep.subr.bf16.mxu0 0
    %1758 = vmatpush1.bf16.msra.mxu0 %v1711
    %1759 = vmatprep.subr.bf16.mxu0 0
    %1760 = vmatpush1.bf16.msra.mxu0 %v1712
    %1761 = vmatprep.mubr.bf16.mxu0 %v1595
    %1762 = vmatmul.mubr.bf16.gmra.mrb[0].mxu0 %v1594
    %v1763 = vpop.f32.mrb[0].mxu0
    %v1764 = vadd.f32 %v1632, %v1763
    %v1765 = vpop.f32.mrb[0].mxu0
    %v1766 = vpop.f32.mrb[0].mxu0
    %v1767 = vadd.f32 %v1632, %v1766
    %v1768 = vpop.f32.mrb[0].mxu0
    %1769 = vdwg.mxu0
    %v1770 = vadd.f32 %v1764, %v1404
    %v1771 = vadd.f32 %v1767, %v1405
    %v1772 = vld [vmem:[%s10 + $0x6] sm:$0x1]
    %v1773 = vld [vmem:[%s10 + $0x7] sm:$0x1]
    %1774 = vadd.xlane.f32.xlu0 %v1770
    %v1775 = vpop.xlane.xlu0 %1774
    %1776 = vadd.xlane.f32.xlu0 %v1771
    %v1777 = vpop.xlane.xlu0 %1776
    %v1778 = vmul.f32 %v1775, %v162
    %v1779 = vmul.f32 %v1777, %v162
    %v1780 = vmul.f32 %v1770, %v1770
    %v1781 = vmul.f32 %v1771, %v1771
    %1782 = vadd.xlane.f32.xlu0 %v1780
    %v1783 = vpop.xlane.xlu0 %1782
    %1784 = vadd.xlane.f32.xlu0 %v1781
    %v1785 = vpop.xlane.xlu0 %1784
    %v1786 = vmul.f32 %v1783, %v162
    %v1787 = vmul.f32 %v1785, %v162
    %v1788 = vmul.f32 %v1778, %v1778
    %v1789 = vmul.f32 %v1779, %v1779
    %v1790 = vsub.f32 %v1786, %v1788
    %v1791 = vsub.f32 %v1787, %v1789
    %v1792 = vsub.f32 %v1770, %v1778
    %v1793 = vsub.f32 %v1771, %v1779
    %v1794 = vadd.f32 %v1790, 1e-12
    %v1795 = vadd.f32 %v1791, 1e-12
    %v1796 = vrsqrt.pop %v1794
    %v1797 = vrsqrt.pop %v1795
    %v1798 = vmul.f32 %v1792, %v1796
    %v1799 = vmul.f32 %v1793, %v1797
    %v1800 = vlaneseq
    %v1801 = vshrl.u32 %v1800, 7
    %v1802 = vsub.s32 0, %v1801
    %v1803 = vrot.slane %v1772, %v1802
    %v1804 = vmul.f32 %v1798, %v1803
    %v1805 = vmul.f32 %v1799, %v1803
    %v1806 = vlaneseq
    %v1807 = vshrl.u32 %v1806, 7
    %v1808 = vsub.s32 0, %v1807
    %v1809 = vrot.slane %v1773, %v1808
    %v1810 = vadd.f32 %v1804, %v1809
    %v1811 = vadd.f32 %v1805, %v1809
    %v1812 = vpack.c.bf16 %v1811, %v1810
    %s1813 = scalar_lea.vmem %s3, 384
    %v1814 = vld [vmem:[%s1813] sm:$0xf]
    %v1815 = vld [vmem:[%s1813 + $0x4] sm:$0xf]
    %v1816 = vld [vmem:[%s1813 + $0x8] sm:$0xf]
    %v1817 = vld [vmem:[%s1813 + $0xc] sm:$0xf]
    %v1818 = vld [vmem:[%s1813 + $0x10] sm:$0xf]
    %v1819 = vld [vmem:[%s1813 + $0x14] sm:$0xf]
    %v1820 = vld [vmem:[%s1813 + $0x18] sm:$0xf]
    %v1821 = vld [vmem:[%s1813 + $0x1c] sm:$0xf]
    %v1822 = vld [vmem:[%s1813 + $0x20] sm:$0xf]
    %v1823 = vld [vmem:[%s1813 + $0x24] sm:$0xf]
    %v1824 = vld [vmem:[%s1813 + $0x28] sm:$0xf]
    %v1825 = vld [vmem:[%s1813 + $0x2c] sm:$0xf]
    %v1826 = vld [vmem:[%s1813 + $0x30] sm:$0xf]
    %v1827 = vld [vmem:[%s1813 + $0x34] sm:$0xf]
    %v1828 = vld [vmem:[%s1813 + $0x38] sm:$0xf]
    %v1829 = vld [vmem:[%s1813 + $0x3c] sm:$0xf]
    %s1830 = scalar_lea.vmem %s4, 6
    %v1831 = vld [vmem:[%s1830] sm:$0x1]
    %v1833 = vlaneseq
    %v1834 = vshrl.u32 %v1833, 7
    %v1835 = vsub.s32 0, %v1834
    %v1836 = vrot.slane %v1831, %v1835
    %v1854 = vunpack.c.l.b16 %v1814
    %v1855 = vunpack.c.l.b16 %v1815
    %v1856 = vunpack.c.l.b16 %v1816
    %v1857 = vunpack.c.l.b16 %v1817
    %v1858 = vunpack.c.l.b16 %v1818
    %v1859 = vunpack.c.l.b16 %v1819
    %v1860 = vunpack.c.l.b16 %v1820
    %v1861 = vunpack.c.l.b16 %v1821
    %v1862 = vunpack.c.l.b16 %v1822
    %v1863 = vunpack.c.l.b16 %v1823
    %v1864 = vunpack.c.l.b16 %v1824
    %v1865 = vunpack.c.l.b16 %v1825
    %v1866 = vunpack.c.l.b16 %v1826
    %v1867 = vunpack.c.l.b16 %v1827
    %v1868 = vunpack.c.l.b16 %v1828
    %v1869 = vunpack.c.l.b16 %v1829
    %v1870 = vpack.c.b16 %v1855, %v1854
    %v1871 = vpack.c.b16 %v1857, %v1856
    %v1872 = vpack.c.b16 %v1859, %v1858
    %v1873 = vpack.c.b16 %v1861, %v1860
    %v1874 = vpack.c.b16 %v1863, %v1862
    %v1875 = vpack.c.b16 %v1865, %v1864
    %v1876 = vpack.c.b16 %v1867, %v1866
    %v1877 = vpack.c.b16 %v1869, %v1868
    %1886 = vmatprep.subr.bf16.mxu0 0
    %1887 = vmatpush1.bf16.msra.mxu0 %v1870
    %1888 = vmatprep.subr.bf16.mxu0 0
    %1889 = vmatpush1.bf16.msra.mxu0 %v1871
    %1890 = vmatprep.subr.bf16.mxu0 0
    %1891 = vmatpush1.bf16.msra.mxu0 %v1872
    %1892 = vmatprep.subr.bf16.mxu0 0
    %1893 = vmatpush1.bf16.msra.mxu0 %v1873
    %1894 = vmatprep.subr.bf16.mxu0 0
    %1895 = vmatpush1.bf16.msra.mxu0 %v1874
    %1896 = vmatprep.subr.bf16.mxu0 0
    %1897 = vmatpush1.bf16.msra.mxu0 %v1875
    %1898 = vmatprep.subr.bf16.mxu0 0
    %1899 = vmatpush1.bf16.msra.mxu0 %v1876
    %1900 = vmatprep.subr.bf16.mxu0 0
    %1901 = vmatpush1.bf16.msra.mxu0 %v1877
    %1902 = vmatprep.subr.bf16.mxu0 0
    %1903 = vmatpush1.bf16.msra.mxu0 0
    %1904 = vmatprep.subr.bf16.mxu0 0
    %1905 = vmatpush1.bf16.msra.mxu0 0
    %1906 = vmatprep.subr.bf16.mxu0 0
    %1907 = vmatpush1.bf16.msra.mxu0 0
    %1908 = vmatprep.subr.bf16.mxu0 0
    %1909 = vmatpush1.bf16.msra.mxu0 0
    %1910 = vmatprep.subr.bf16.mxu0 0
    %1911 = vmatpush1.bf16.msra.mxu0 0
    %1912 = vmatprep.subr.bf16.mxu0 0
    %1913 = vmatpush1.bf16.msra.mxu0 0
    %1914 = vmatprep.subr.bf16.mxu0 0
    %1915 = vmatpush1.bf16.msra.mxu0 0
    %1916 = vmatprep.subr.bf16.mxu0 0
    %1917 = vmatpush1.bf16.msra.mxu0 0
    %1918 = vmatprep.mubr.bf16.mxu0 0
    %1919 = vmatmul.mubr.bf16.gmra.mrb[0].mxu0 %v1812
    %v1920 = vpop.f32.mrb[0].mxu0
    %v1921 = vadd.f32 %v1836, %v1920
    %v1922 = vpop.f32.mrb[0].mxu0
    %v1923 = vpop.f32.mrb[0].mxu0
    %v1924 = vadd.f32 %v1836, %v1923
    %v1925 = vpop.f32.mrb[0].mxu0
    %1926 = vdwg.mxu0
    %s1927 = scalar_lea.vmem %s3, 448
    %v1928 = vld [vmem:[%s1927] sm:$0xf]
    %v1929 = vld [vmem:[%s1927 + $0x4] sm:$0xf]
    %v1930 = vld [vmem:[%s1927 + $0x8] sm:$0xf]
    %v1931 = vld [vmem:[%s1927 + $0xc] sm:$0xf]
    %v1932 = vld [vmem:[%s1927 + $0x10] sm:$0xf]
    %v1933 = vld [vmem:[%s1927 + $0x14] sm:$0xf]
    %v1934 = vld [vmem:[%s1927 + $0x18] sm:$0xf]
    %v1935 = vld [vmem:[%s1927 + $0x1c] sm:$0xf]
    %v1936 = vld [vmem:[%s1927 + $0x20] sm:$0xf]
    %v1937 = vld [vmem:[%s1927 + $0x24] sm:$0xf]
    %v1938 = vld [vmem:[%s1927 + $0x28] sm:$0xf]
    %v1939 = vld [vmem:[%s1927 + $0x2c] sm:$0xf]
    %v1940 = vld [vmem:[%s1927 + $0x30] sm:$0xf]
    %v1941 = vld [vmem:[%s1927 + $0x34] sm:$0xf]
    %v1942 = vld [vmem:[%s1927 + $0x38] sm:$0xf]
    %v1943 = vld [vmem:[%s1927 + $0x3c] sm:$0xf]
    %s1944 = scalar_lea.vmem %s4, 7
    %v1945 = vld [vmem:[%s1944] sm:$0x1]
    %v1947 = vlaneseq
    %v1948 = vshrl.u32 %v1947, 7
    %v1949 = vsub.s32 0, %v1948
    %v1950 = vrot.slane %v1945, %v1949
    %v1968 = vunpack.c.l.b16 %v1928
    %v1969 = vunpack.c.l.b16 %v1929
    %v1970 = vunpack.c.l.b16 %v1930
    %v1971 = vunpack.c.l.b16 %v1931
    %v1972 = vunpack.c.l.b16 %v1932
    %v1973 = vunpack.c.l.b16 %v1933
    %v1974 = vunpack.c.l.b16 %v1934
    %v1975 = vunpack.c.l.b16 %v1935
    %v1976 = vunpack.c.l.b16 %v1936
    %v1977 = vunpack.c.l.b16 %v1937
    %v1978 = vunpack.c.l.b16 %v1938
    %v1979 = vunpack.c.l.b16 %v1939
    %v1980 = vunpack.c.l.b16 %v1940
    %v1981 = vunpack.c.l.b16 %v1941
    %v1982 = vunpack.c.l.b16 %v1942
    %v1983 = vunpack.c.l.b16 %v1943
    %v1984 = vpack.c.b16 %v1969, %v1968
    %v1985 = vpack.c.b16 %v1971, %v1970
    %v1986 = vpack.c.b16 %v1973, %v1972
    %v1987 = vpack.c.b16 %v1975, %v1974
    %v1988 = vpack.c.b16 %v1977, %v1976
    %v1989 = vpack.c.b16 %v1979, %v1978
    %v1990 = vpack.c.b16 %v1981, %v1980
    %v1991 = vpack.c.b16 %v1983, %v1982
    %2000 = vmatprep.subr.bf16.mxu0 0
    %2001 = vmatpush1.bf16.msra.mxu0 %v1984
    %2002 = vmatprep.subr.bf16.mxu0 0
    %2003 = vmatpush1.bf16.msra.mxu0 %v1985
    %2004 = vmatprep.subr.bf16.mxu0 0
    %2005 = vmatpush1.bf16.msra.mxu0 %v1986
    %2006 = vmatprep.subr.bf16.mxu0 0
    %2007 = vmatpush1.bf16.msra.mxu0 %v1987
    %2008 = vmatprep.subr.bf16.mxu0 0
    %2009 = vmatpush1.bf16.msra.mxu0 %v1988
    %2010 = vmatprep.subr.bf16.mxu0 0
    %2011 = vmatpush1.bf16.msra.mxu0 %v1989
    %2012 = vmatprep.subr.bf16.mxu0 0
    %2013 = vmatpush1.bf16.msra.mxu0 %v1990
    %2014 = vmatprep.subr.bf16.mxu0 0
    %2015 = vmatpush1.bf16.msra.mxu0 %v1991
    %2016 = vmatprep.subr.bf16.mxu0 0
    %2017 = vmatpush1.bf16.msra.mxu0 0
    %2018 = vmatprep.subr.bf16.mxu0 0
    %2019 = vmatpush1.bf16.msra.mxu0 0
    %2020 = vmatprep.subr.bf16.mxu0 0
    %2021 = vmatpush1.bf16.msra.mxu0 0
    %2022 = vmatprep.subr.bf16.mxu0 0
    %2023 = vmatpush1.bf16.msra.mxu0 0
    %2024 = vmatprep.subr.bf16.mxu0 0
    %2025 = vmatpush1.bf16.msra.mxu0 0
    %2026 = vmatprep.subr.bf16.mxu0 0
    %2027 = vmatpush1.bf16.msra.mxu0 0
    %2028 = vmatprep.subr.bf16.mxu0 0
    %2029 = vmatpush1.bf16.msra.mxu0 0
    %2030 = vmatprep.subr.bf16.mxu0 0
    %2031 = vmatpush1.bf16.msra.mxu0 0
    %2032 = vmatprep.mubr.bf16.mxu0 0
    %2033 = vmatmul.mubr.bf16.gmra.mrb[0].mxu0 %v1812
    %v2034 = vpop.f32.mrb[0].mxu0
    %v2035 = vadd.f32 %v1950, %v2034
    %v2036 = vpop.f32.mrb[0].mxu0
    %v2037 = vpop.f32.mrb[0].mxu0
    %v2038 = vadd.f32 %v1950, %v2037
    %v2039 = vpop.f32.mrb[0].mxu0
    %2040 = vdwg.mxu0
    %s2041 = scalar_lea.vmem %s3, 512
    %v2042 = vld [vmem:[%s2041] sm:$0xf]
    %v2043 = vld [vmem:[%s2041 + $0x4] sm:$0xf]
    %v2044 = vld [vmem:[%s2041 + $0x8] sm:$0xf]
    %v2045 = vld [vmem:[%s2041 + $0xc] sm:$0xf]
    %v2046 = vld [vmem:[%s2041 + $0x10] sm:$0xf]
    %v2047 = vld [vmem:[%s2041 + $0x14] sm:$0xf]
    %v2048 = vld [vmem:[%s2041 + $0x18] sm:$0xf]
    %v2049 = vld [vmem:[%s2041 + $0x1c] sm:$0xf]
    %v2050 = vld [vmem:[%s2041 + $0x20] sm:$0xf]
    %v2051 = vld [vmem:[%s2041 + $0x24] sm:$0xf]
    %v2052 = vld [vmem:[%s2041 + $0x28] sm:$0xf]
    %v2053 = vld [vmem:[%s2041 + $0x2c] sm:$0xf]
    %v2054 = vld [vmem:[%s2041 + $0x30] sm:$0xf]
    %v2055 = vld [vmem:[%s2041 + $0x34] sm:$0xf]
    %v2056 = vld [vmem:[%s2041 + $0x38] sm:$0xf]
    %v2057 = vld [vmem:[%s2041 + $0x3c] sm:$0xf]
    %s2058 = scalar_lea.vmem %s4, 8
    %v2059 = vld [vmem:[%s2058] sm:$0x1]
    %v2061 = vlaneseq
    %v2062 = vshrl.u32 %v2061, 7
    %v2063 = vsub.s32 0, %v2062
    %v2064 = vrot.slane %v2059, %v2063
    %v2082 = vunpack.c.l.b16 %v2042
    %v2083 = vunpack.c.l.b16 %v2043
    %v2084 = vunpack.c.l.b16 %v2044
    %v2085 = vunpack.c.l.b16 %v2045
    %v2086 = vunpack.c.l.b16 %v2046
    %v2087 = vunpack.c.l.b16 %v2047
    %v2088 = vunpack.c.l.b16 %v2048
    %v2089 = vunpack.c.l.b16 %v2049
    %v2090 = vunpack.c.l.b16 %v2050
    %v2091 = vunpack.c.l.b16 %v2051
    %v2092 = vunpack.c.l.b16 %v2052
    %v2093 = vunpack.c.l.b16 %v2053
    %v2094 = vunpack.c.l.b16 %v2054
    %v2095 = vunpack.c.l.b16 %v2055
    %v2096 = vunpack.c.l.b16 %v2056
    %v2097 = vunpack.c.l.b16 %v2057
    %v2098 = vpack.c.b16 %v2083, %v2082
    %v2099 = vpack.c.b16 %v2085, %v2084
    %v2100 = vpack.c.b16 %v2087, %v2086
    %v2101 = vpack.c.b16 %v2089, %v2088
    %v2102 = vpack.c.b16 %v2091, %v2090
    %v2103 = vpack.c.b16 %v2093, %v2092
    %v2104 = vpack.c.b16 %v2095, %v2094
    %v2105 = vpack.c.b16 %v2097, %v2096
    %2114 = vmatprep.subr.bf16.mxu0 0
    %2115 = vmatpush1.bf16.msra.mxu0 %v2098
    %2116 = vmatprep.subr.bf16.mxu0 0
    %2117 = vmatpush1.bf16.msra.mxu0 %v2099
    %2118 = vmatprep.subr.bf16.mxu0 0
    %2119 = vmatpush1.bf16.msra.mxu0 %v2100
    %2120 = vmatprep.subr.bf16.mxu0 0
    %2121 = vmatpush1.bf16.msra.mxu0 %v2101
    %2122 = vmatprep.subr.bf16.mxu0 0
    %2123 = vmatpush1.bf16.msra.mxu0 %v2102
    %2124 = vmatprep.subr.bf16.mxu0 0
    %2125 = vmatpush1.bf16.msra.mxu0 %v2103
    %2126 = vmatprep.subr.bf16.mxu0 0
    %2127 = vmatpush1.bf16.msra.mxu0 %v2104
    %2128 = vmatprep.subr.bf16.mxu0 0
    %2129 = vmatpush1.bf16.msra.mxu0 %v2105
    %2130 = vmatprep.subr.bf16.mxu0 0
    %2131 = vmatpush1.bf16.msra.mxu0 0
    %2132 = vmatprep.subr.bf16.mxu0 0
    %2133 = vmatpush1.bf16.msra.mxu0 0
    %2134 = vmatprep.subr.bf16.mxu0 0
    %2135 = vmatpush1.bf16.msra.mxu0 0
    %2136 = vmatprep.subr.bf16.mxu0 0
    %2137 = vmatpush1.bf16.msra.mxu0 0
    %2138 = vmatprep.subr.bf16.mxu0 0
    %2139 = vmatpush1.bf16.msra.mxu0 0
    %2140 = vmatprep.subr.bf16.mxu0 0
    %2141 = vmatpush1.bf16.msra.mxu0 0
    %2142 = vmatprep.subr.bf16.mxu0 0
    %2143 = vmatpush1.bf16.msra.mxu0 0
    %2144 = vmatprep.subr.bf16.mxu0 0
    %2145 = vmatpush1.bf16.msra.mxu0 0
    %2146 = vmatprep.mubr.bf16.mxu0 0
    %2147 = vmatmul.mubr.bf16.gmra.mrb[0].mxu0 %v1812
    %v2148 = vpop.f32.mrb[0].mxu0
    %v2149 = vadd.f32 %v2064, %v2148
    %v2150 = vpop.f32.mrb[0].mxu0
    %v2151 = vpop.f32.mrb[0].mxu0
    %v2152 = vadd.f32 %v2064, %v2151
    %v2153 = vpop.f32.mrb[0].mxu0
    %2154 = vdwg.mxu0
    %v2155 = vpack.c.bf16 %v1924, %v1921
    %2156 = vxpose.xlu0.b32.start [1/16] %v2035, 128
    %2157 = vxpose.xlu0.b32.cont [2/16] %v2038, 128
    %2158 = vxpose.xlu0.b32.cont [3/16] 0.0, 128
    %2159 = vxpose.xlu0.b32.cont [4/16] 0.0, 128
    %2160 = vxpose.xlu0.b32.cont [5/16] 0.0, 128
    %2161 = vxpose.xlu0.b32.cont [6/16] 0.0, 128
    %2162 = vxpose.xlu0.b32.cont [7/16] 0.0, 128
    %2163 = vxpose.xlu0.b32.cont [8/16] 0.0, 128
    %2164 = vxpose.xlu0.b32.cont [9/16] 0.0, 128
    %2165 = vxpose.xlu0.b32.cont [10/16] 0.0, 128
    %2166 = vxpose.xlu0.b32.cont [11/16] 0.0, 128
    %2167 = vxpose.xlu0.b32.cont [12/16] 0.0, 128
    %2168 = vxpose.xlu0.b32.cont [13/16] 0.0, 128
    %2169 = vxpose.xlu0.b32.cont [14/16] 0.0, 128
    %2170 = vxpose.xlu0.b32.cont [15/16] 0.0, 128
    %2171 = vxpose.xlu0.b32.end [16/16] 0.0, 128
    %v2172 = vpop.trf.xlu0
    %v2173 = vpop.trf.xlu0
    %v2174 = vpop.trf.xlu0
    %v2175 = vpop.trf.xlu0
    %v2176 = vpop.trf.xlu0
    %v2177 = vpop.trf.xlu0
    %v2178 = vpop.trf.xlu0
    %v2179 = vpop.trf.xlu0
    %v2180 = vpop.trf.xlu0
    %v2181 = vpop.trf.xlu0
    %v2182 = vpop.trf.xlu0
    %v2183 = vpop.trf.xlu0
    %v2184 = vpop.trf.xlu0
    %v2185 = vpop.trf.xlu0
    %v2186 = vpop.trf.xlu0
    %v2187 = vpop.trf.xlu0
    %v2188 = vpack.c.bf16 %v2173, %v2172
    %v2189 = vpack.c.bf16 %v2175, %v2174
    %v2190 = vpack.c.bf16 %v2177, %v2176
    %v2191 = vpack.c.bf16 %v2179, %v2178
    %v2193 = vsel %vm111, %v2155, 0
    %2195 = vmatprep.subr.bf16.mxu0 0
    %2196 = vmatpush1.bf16.msra.mxu0 %v2188
    %2197 = vmatprep.subr.bf16.mxu0 0
    %2198 = vmatpush1.bf16.msra.mxu0 %v2189
    %2199 = vmatprep.subr.bf16.mxu0 0
    %2200 = vmatpush1.bf16.msra.mxu0 %v2190
    %2201 = vmatprep.subr.bf16.mxu0 0
    %2202 = vmatpush1.bf16.msra.mxu0 %v2191
    %2203 = vmatprep.subr.bf16.mxu0 0
    %2204 = vmatpush1.bf16.msra.mxu0 0
    %2205 = vmatprep.subr.bf16.mxu0 0
    %2206 = vmatpush1.bf16.msra.mxu0 0
    %2207 = vmatprep.subr.bf16.mxu0 0
    %2208 = vmatpush1.bf16.msra.mxu0 0
    %2209 = vmatprep.subr.bf16.mxu0 0
    %2210 = vmatpush1.bf16.msra.mxu0 0
    %2211 = vmatprep.subr.bf16.mxu0 0
    %2212 = vmatpush1.bf16.msra.mxu0 0
    %2213 = vmatprep.subr.bf16.mxu0 0
    %2214 = vmatpush1.bf16.msra.mxu0 0
    %2215 = vmatprep.subr.bf16.mxu0 0
    %2216 = vmatpush1.bf16.msra.mxu0 0
    %2217 = vmatprep.subr.bf16.mxu0 0
    %2218 = vmatpush1.bf16.msra.mxu0 0
    %2219 = vmatprep.subr.bf16.mxu0 0
    %2220 = vmatpush1.bf16.msra.mxu0 0
    %2221 = vmatprep.subr.bf16.mxu0 0
    %2222 = vmatpush1.bf16.msra.mxu0 0
    %2223 = vmatprep.subr.bf16.mxu0 0
    %2224 = vmatpush1.bf16.msra.mxu0 0
    %2225 = vmatprep.subr.bf16.mxu0 0
    %2226 = vmatpush1.bf16.msra.mxu0 0
    %2227 = vmatprep.mubr.bf16.mxu0 0
    %2228 = vmatmul.mubr.bf16.gmra.mrb[0].mxu0 %v2193
    %v2229 = vpop.f32.mrb[0].mxu0
    %v2230 = vadd.f32 0.0, %v2229
    %v2231 = vpop.f32.mrb[0].mxu0
    %v2232 = vpop.f32.mrb[0].mxu0
    %v2233 = vadd.f32 0.0, %v2232
    %v2234 = vpop.f32.mrb[0].mxu0
    %2235 = vdwg.mxu0
    %v2236 = vmul.f32 %v2230, 0.125
    %v2237 = vmul.f32 %v2233, 0.125
    %v2238 = vadd.f32 %v2236, %v210
    %v2239 = vadd.f32 %v2237, %v211
    %v2240 = vsel %vm638, %v2238, -inf
    %2241 = vmax.xlane.f32.xlu0 %v2240
    %v2242 = vpop.xlane.xlu0 %2241
    %v2243 = vsel %vm638, %v2239, -inf
    %2244 = vmax.xlane.f32.xlu0 %v2243
    %v2245 = vpop.xlane.xlu0 %2244
    %v2246 = vsub.f32 %v2238, %v2242
    %v2247 = vsub.f32 %v2239, %v2245
    %v2248 = vmul.f32 %v2246, 1.442695
    %v2249 = vpow.pop %v2248
    %v2250 = vmul.f32 %v2247, 1.442695
    %v2251 = vpow.pop %v2250
    %v2252 = vsel %vm638, %v2249, 0.0
    %2253 = vadd.xlane.f32.xlu0 %v2252
    %v2254 = vpop.xlane.xlu0 %2253
    %v2255 = vsel %vm638, %v2251, 0.0
    %2256 = vadd.xlane.f32.xlu0 %v2255
    %v2257 = vpop.xlane.xlu0 %2256
    %v2258 = vrcp.pop %v2254
    %v2259 = vrcp.pop %v2257
    %v2260 = vmul.f32 %v2249, %v2258
    %v2261 = vmul.f32 %v2251, %v2259
    %v2262 = vpack.c.bf16 %v2261, %v2260
    %v2263 = vpack.c.bf16 %v2152, %v2149
    %v2265 = vsel %vm638, %v2262, 0
    %2267 = vmatprep.subr.bf16.mxu0 0
    %2268 = vmatpush1.bf16.msra.mxu0 %v2263
    %2269 = vmatprep.subr.bf16.mxu0 0
    %2270 = vmatpush1.bf16.msra.mxu0 0
    %2271 = vmatprep.subr.bf16.mxu0 0
    %2272 = vmatpush1.bf16.msra.mxu0 0
    %2273 = vmatprep.subr.bf16.mxu0 0
    %2274 = vmatpush1.bf16.msra.mxu0 0
    %2275 = vmatprep.subr.bf16.mxu0 0
    %2276 = vmatpush1.bf16.msra.mxu0 0
    %2277 = vmatprep.subr.bf16.mxu0 0
    %2278 = vmatpush1.bf16.msra.mxu0 0
    %2279 = vmatprep.subr.bf16.mxu0 0
    %2280 = vmatpush1.bf16.msra.mxu0 0
    %2281 = vmatprep.subr.bf16.mxu0 0
    %2282 = vmatpush1.bf16.msra.mxu0 0
    %2283 = vmatprep.subr.bf16.mxu0 0
    %2284 = vmatpush1.bf16.msra.mxu0 0
    %2285 = vmatprep.subr.bf16.mxu0 0
    %2286 = vmatpush1.bf16.msra.mxu0 0
    %2287 = vmatprep.subr.bf16.mxu0 0
    %2288 = vmatpush1.bf16.msra.mxu0 0
    %2289 = vmatprep.subr.bf16.mxu0 0
    %2290 = vmatpush1.bf16.msra.mxu0 0
    %2291 = vmatprep.subr.bf16.mxu0 0
    %2292 = vmatpush1.bf16.msra.mxu0 0
    %2293 = vmatprep.subr.bf16.mxu0 0
    %2294 = vmatpush1.bf16.msra.mxu0 0
    %2295 = vmatprep.subr.bf16.mxu0 0
    %2296 = vmatpush1.bf16.msra.mxu0 0
    %2297 = vmatprep.subr.bf16.mxu0 0
    %2298 = vmatpush1.bf16.msra.mxu0 0
    %2299 = vmatprep.mubr.bf16.mxu0 0
    %2300 = vmatmul.mubr.bf16.gmra.mrb[0].mxu0 %v2265
    %v2301 = vpop.f32.mrb[0].mxu0
    %v2302 = vadd.f32 0.0, %v2301
    %v2303 = vpop.f32.mrb[0].mxu0
    %v2304 = vpop.f32.mrb[0].mxu0
    %v2305 = vadd.f32 0.0, %v2304
    %v2306 = vpop.f32.mrb[0].mxu0
    %2307 = vdwg.mxu0
    %v2308 = vpack.c.bf16 %v2305, %v2302
    %s2309 = scalar_lea.vmem %s5, 64
    %v2310 = vld [vmem:[%s2309] sm:$0xf]
    %v2311 = vld [vmem:[%s2309 + $0x4] sm:$0xf]
    %v2312 = vld [vmem:[%s2309 + $0x8] sm:$0xf]
    %v2313 = vld [vmem:[%s2309 + $0xc] sm:$0xf]
    %v2314 = vld [vmem:[%s2309 + $0x10] sm:$0xf]
    %v2315 = vld [vmem:[%s2309 + $0x14] sm:$0xf]
    %v2316 = vld [vmem:[%s2309 + $0x18] sm:$0xf]
    %v2317 = vld [vmem:[%s2309 + $0x1c] sm:$0xf]
    %s2318 = scalar_lea.vmem %s3, 576
    %v2319 = vld [vmem:[%s2318] sm:$0xf]
    %v2320 = vld [vmem:[%s2318 + $0x4] sm:$0xf]
    %v2321 = vld [vmem:[%s2318 + $0x8] sm:$0xf]
    %v2322 = vld [vmem:[%s2318 + $0xc] sm:$0xf]
    %v2323 = vld [vmem:[%s2318 + $0x10] sm:$0xf]
    %v2324 = vld [vmem:[%s2318 + $0x14] sm:$0xf]
    %v2325 = vld [vmem:[%s2318 + $0x18] sm:$0xf]
    %v2326 = vld [vmem:[%s2318 + $0x1c] sm:$0xf]
    %v2327 = vld [vmem:[%s2318 + $0x20] sm:$0xf]
    %v2328 = vld [vmem:[%s2318 + $0x24] sm:$0xf]
    %v2329 = vld [vmem:[%s2318 + $0x28] sm:$0xf]
    %v2330 = vld [vmem:[%s2318 + $0x2c] sm:$0xf]
    %v2331 = vld [vmem:[%s2318 + $0x30] sm:$0xf]
    %v2332 = vld [vmem:[%s2318 + $0x34] sm:$0xf]
    %v2333 = vld [vmem:[%s2318 + $0x38] sm:$0xf]
    %v2334 = vld [vmem:[%s2318 + $0x3c] sm:$0xf]
    %s2335 = scalar_lea.vmem %s4, 9
    %v2336 = vld [vmem:[%s2335] sm:$0x1]
    %v2338 = vlaneseq
    %v2339 = vshrl.u32 %v2338, 7
    %v2340 = vsub.s32 0, %v2339
    %v2341 = vrot.slane %v2336, %v2340
    %v2359 = vunpack.c.l.b16 %v2319
    %v2360 = vunpack.c.l.b16 %v2320
    %v2361 = vunpack.c.l.b16 %v2321
    %v2362 = vunpack.c.l.b16 %v2322
    %v2363 = vunpack.c.l.b16 %v2323
    %v2364 = vunpack.c.l.b16 %v2324
    %v2365 = vunpack.c.l.b16 %v2325
    %v2366 = vunpack.c.l.b16 %v2326
    %v2367 = vunpack.c.l.b16 %v2327
    %v2368 = vunpack.c.l.b16 %v2328
    %v2369 = vunpack.c.l.b16 %v2329
    %v2370 = vunpack.c.l.b16 %v2330
    %v2371 = vunpack.c.l.b16 %v2331
    %v2372 = vunpack.c.l.b16 %v2332
    %v2373 = vunpack.c.l.b16 %v2333
    %v2374 = vunpack.c.l.b16 %v2334
    %v2375 = vpack.c.b16 %v2360, %v2359
    %v2376 = vpack.c.b16 %v2362, %v2361
    %v2377 = vpack.c.b16 %v2364, %v2363
    %v2378 = vpack.c.b16 %v2366, %v2365
    %v2379 = vpack.c.b16 %v2368, %v2367
    %v2380 = vpack.c.b16 %v2370, %v2369
    %v2381 = vpack.c.b16 %v2372, %v2371
    %v2382 = vpack.c.b16 %v2374, %v2373
    %2391 = vmatprep.subr.bf16.mxu0 0
    %2392 = vmatpush1.bf16.msra.mxu0 %v2375
    %2393 = vmatprep.subr.bf16.mxu0 0
    %2394 = vmatpush1.bf16.msra.mxu0 %v2376
    %2395 = vmatprep.subr.bf16.mxu0 0
    %2396 = vmatpush1.bf16.msra.mxu0 %v2377
    %2397 = vmatprep.subr.bf16.mxu0 0
    %2398 = vmatpush1.bf16.msra.mxu0 %v2378
    %2399 = vmatprep.subr.bf16.mxu0 0
    %2400 = vmatpush1.bf16.msra.mxu0 %v2379
    %2401 = vmatprep.subr.bf16.mxu0 0
    %2402 = vmatpush1.bf16.msra.mxu0 %v2380
    %2403 = vmatprep.subr.bf16.mxu0 0
    %2404 = vmatpush1.bf16.msra.mxu0 %v2381
    %2405 = vmatprep.subr.bf16.mxu0 0
    %2406 = vmatpush1.bf16.msra.mxu0 %v2382
    %2407 = vmatprep.subr.bf16.mxu0 0
    %2408 = vmatpush1.bf16.msra.mxu0 0
    %2409 = vmatprep.subr.bf16.mxu0 0
    %2410 = vmatpush1.bf16.msra.mxu0 0
    %2411 = vmatprep.subr.bf16.mxu0 0
    %2412 = vmatpush1.bf16.msra.mxu0 0
    %2413 = vmatprep.subr.bf16.mxu0 0
    %2414 = vmatpush1.bf16.msra.mxu0 0
    %2415 = vmatprep.subr.bf16.mxu0 0
    %2416 = vmatpush1.bf16.msra.mxu0 0
    %2417 = vmatprep.subr.bf16.mxu0 0
    %2418 = vmatpush1.bf16.msra.mxu0 0
    %2419 = vmatprep.subr.bf16.mxu0 0
    %2420 = vmatpush1.bf16.msra.mxu0 0
    %2421 = vmatprep.subr.bf16.mxu0 0
    %2422 = vmatpush1.bf16.msra.mxu0 0
    %2423 = vmatprep.mubr.bf16.mxu0 0
    %2424 = vmatmul.mubr.bf16.gmra.mrb[0].mxu0 %v1812
    %v2425 = vpop.f32.mrb[0].mxu0
    %v2426 = vadd.f32 %v2341, %v2425
    %v2427 = vpop.f32.mrb[0].mxu0
    %v2428 = vpop.f32.mrb[0].mxu0
    %v2429 = vadd.f32 %v2341, %v2428
    %v2430 = vpop.f32.mrb[0].mxu0
    %2431 = vdwg.mxu0
    %s2432 = scalar_lea.vmem %s3, 640
    %v2433 = vld [vmem:[%s2432] sm:$0xf]
    %v2434 = vld [vmem:[%s2432 + $0x4] sm:$0xf]
    %v2435 = vld [vmem:[%s2432 + $0x8] sm:$0xf]
    %v2436 = vld [vmem:[%s2432 + $0xc] sm:$0xf]
    %v2437 = vld [vmem:[%s2432 + $0x10] sm:$0xf]
    %v2438 = vld [vmem:[%s2432 + $0x14] sm:$0xf]
    %v2439 = vld [vmem:[%s2432 + $0x18] sm:$0xf]
    %v2440 = vld [vmem:[%s2432 + $0x1c] sm:$0xf]
    %v2441 = vld [vmem:[%s2432 + $0x20] sm:$0xf]
    %v2442 = vld [vmem:[%s2432 + $0x24] sm:$0xf]
    %v2443 = vld [vmem:[%s2432 + $0x28] sm:$0xf]
    %v2444 = vld [vmem:[%s2432 + $0x2c] sm:$0xf]
    %v2445 = vld [vmem:[%s2432 + $0x30] sm:$0xf]
    %v2446 = vld [vmem:[%s2432 + $0x34] sm:$0xf]
    %v2447 = vld [vmem:[%s2432 + $0x38] sm:$0xf]
    %v2448 = vld [vmem:[%s2432 + $0x3c] sm:$0xf]
    %s2449 = scalar_lea.vmem %s4, 10
    %v2450 = vld [vmem:[%s2449] sm:$0x1]
    %v2452 = vlaneseq
    %v2453 = vshrl.u32 %v2452, 7
    %v2454 = vsub.s32 0, %v2453
    %v2455 = vrot.slane %v2450, %v2454
    %v2473 = vunpack.c.l.b16 %v2433
    %v2474 = vunpack.c.l.b16 %v2434
    %v2475 = vunpack.c.l.b16 %v2435
    %v2476 = vunpack.c.l.b16 %v2436
    %v2477 = vunpack.c.l.b16 %v2437
    %v2478 = vunpack.c.l.b16 %v2438
    %v2479 = vunpack.c.l.b16 %v2439
    %v2480 = vunpack.c.l.b16 %v2440
    %v2481 = vunpack.c.l.b16 %v2441
    %v2482 = vunpack.c.l.b16 %v2442
    %v2483 = vunpack.c.l.b16 %v2443
    %v2484 = vunpack.c.l.b16 %v2444
    %v2485 = vunpack.c.l.b16 %v2445
    %v2486 = vunpack.c.l.b16 %v2446
    %v2487 = vunpack.c.l.b16 %v2447
    %v2488 = vunpack.c.l.b16 %v2448
    %v2489 = vpack.c.b16 %v2474, %v2473
    %v2490 = vpack.c.b16 %v2476, %v2475
    %v2491 = vpack.c.b16 %v2478, %v2477
    %v2492 = vpack.c.b16 %v2480, %v2479
    %v2493 = vpack.c.b16 %v2482, %v2481
    %v2494 = vpack.c.b16 %v2484, %v2483
    %v2495 = vpack.c.b16 %v2486, %v2485
    %v2496 = vpack.c.b16 %v2488, %v2487
    %2505 = vmatprep.subr.bf16.mxu0 0
    %2506 = vmatpush1.bf16.msra.mxu0 %v2489
    %2507 = vmatprep.subr.bf16.mxu0 0
    %2508 = vmatpush1.bf16.msra.mxu0 %v2490
    %2509 = vmatprep.subr.bf16.mxu0 0
    %2510 = vmatpush1.bf16.msra.mxu0 %v2491
    %2511 = vmatprep.subr.bf16.mxu0 0
    %2512 = vmatpush1.bf16.msra.mxu0 %v2492
    %2513 = vmatprep.subr.bf16.mxu0 0
    %2514 = vmatpush1.bf16.msra.mxu0 %v2493
    %2515 = vmatprep.subr.bf16.mxu0 0
    %2516 = vmatpush1.bf16.msra.mxu0 %v2494
    %2517 = vmatprep.subr.bf16.mxu0 0
    %2518 = vmatpush1.bf16.msra.mxu0 %v2495
    %2519 = vmatprep.subr.bf16.mxu0 0
    %2520 = vmatpush1.bf16.msra.mxu0 %v2496
    %2521 = vmatprep.subr.bf16.mxu0 0
    %2522 = vmatpush1.bf16.msra.mxu0 0
    %2523 = vmatprep.subr.bf16.mxu0 0
    %2524 = vmatpush1.bf16.msra.mxu0 0
    %2525 = vmatprep.subr.bf16.mxu0 0
    %2526 = vmatpush1.bf16.msra.mxu0 0
    %2527 = vmatprep.subr.bf16.mxu0 0
    %2528 = vmatpush1.bf16.msra.mxu0 0
    %2529 = vmatprep.subr.bf16.mxu0 0
    %2530 = vmatpush1.bf16.msra.mxu0 0
    %2531 = vmatprep.subr.bf16.mxu0 0
    %2532 = vmatpush1.bf16.msra.mxu0 0
    %2533 = vmatprep.subr.bf16.mxu0 0
    %2534 = vmatpush1.bf16.msra.mxu0 0
    %2535 = vmatprep.subr.bf16.mxu0 0
    %2536 = vmatpush1.bf16.msra.mxu0 0
    %2537 = vmatprep.mubr.bf16.mxu0 0
    %2538 = vmatmul.mubr.bf16.gmra.mrb[0].mxu0 %v1812
    %v2539 = vpop.f32.mrb[0].mxu0
    %v2540 = vadd.f32 %v2455, %v2539
    %v2541 = vpop.f32.mrb[0].mxu0
    %v2542 = vpop.f32.mrb[0].mxu0
    %v2543 = vadd.f32 %v2455, %v2542
    %v2544 = vpop.f32.mrb[0].mxu0
    %2545 = vdwg.mxu0
    %s2546 = scalar_lea.vmem %s3, 704
    %v2547 = vld [vmem:[%s2546] sm:$0xf]
    %v2548 = vld [vmem:[%s2546 + $0x4] sm:$0xf]
    %v2549 = vld [vmem:[%s2546 + $0x8] sm:$0xf]
    %v2550 = vld [vmem:[%s2546 + $0xc] sm:$0xf]
    %v2551 = vld [vmem:[%s2546 + $0x10] sm:$0xf]
    %v2552 = vld [vmem:[%s2546 + $0x14] sm:$0xf]
    %v2553 = vld [vmem:[%s2546 + $0x18] sm:$0xf]
    %v2554 = vld [vmem:[%s2546 + $0x1c] sm:$0xf]
    %v2555 = vld [vmem:[%s2546 + $0x20] sm:$0xf]
    %v2556 = vld [vmem:[%s2546 + $0x24] sm:$0xf]
    %v2557 = vld [vmem:[%s2546 + $0x28] sm:$0xf]
    %v2558 = vld [vmem:[%s2546 + $0x2c] sm:$0xf]
    %v2559 = vld [vmem:[%s2546 + $0x30] sm:$0xf]
    %v2560 = vld [vmem:[%s2546 + $0x34] sm:$0xf]
    %v2561 = vld [vmem:[%s2546 + $0x38] sm:$0xf]
    %v2562 = vld [vmem:[%s2546 + $0x3c] sm:$0xf]
    %s2563 = scalar_lea.vmem %s4, 11
    %v2564 = vld [vmem:[%s2563] sm:$0x1]
    %v2566 = vlaneseq
    %v2567 = vshrl.u32 %v2566, 7
    %v2568 = vsub.s32 0, %v2567
    %v2569 = vrot.slane %v2564, %v2568
    %v2587 = vunpack.c.l.b16 %v2547
    %v2588 = vunpack.c.l.b16 %v2548
    %v2589 = vunpack.c.l.b16 %v2549
    %v2590 = vunpack.c.l.b16 %v2550
    %v2591 = vunpack.c.l.b16 %v2551
    %v2592 = vunpack.c.l.b16 %v2552
    %v2593 = vunpack.c.l.b16 %v2553
    %v2594 = vunpack.c.l.b16 %v2554
    %v2595 = vunpack.c.l.b16 %v2555
    %v2596 = vunpack.c.l.b16 %v2556
    %v2597 = vunpack.c.l.b16 %v2557
    %v2598 = vunpack.c.l.b16 %v2558
    %v2599 = vunpack.c.l.b16 %v2559
    %v2600 = vunpack.c.l.b16 %v2560
    %v2601 = vunpack.c.l.b16 %v2561
    %v2602 = vunpack.c.l.b16 %v2562
    %v2603 = vpack.c.b16 %v2588, %v2587
    %v2604 = vpack.c.b16 %v2590, %v2589
    %v2605 = vpack.c.b16 %v2592, %v2591
    %v2606 = vpack.c.b16 %v2594, %v2593
    %v2607 = vpack.c.b16 %v2596, %v2595
    %v2608 = vpack.c.b16 %v2598, %v2597
    %v2609 = vpack.c.b16 %v2600, %v2599
    %v2610 = vpack.c.b16 %v2602, %v2601
    %2619 = vmatprep.subr.bf16.mxu0 0
    %2620 = vmatpush1.bf16.msra.mxu0 %v2603
    %2621 = vmatprep.subr.bf16.mxu0 0
    %2622 = vmatpush1.bf16.msra.mxu0 %v2604
    %2623 = vmatprep.subr.bf16.mxu0 0
    %2624 = vmatpush1.bf16.msra.mxu0 %v2605
    %2625 = vmatprep.subr.bf16.mxu0 0
    %2626 = vmatpush1.bf16.msra.mxu0 %v2606
    %2627 = vmatprep.subr.bf16.mxu0 0
    %2628 = vmatpush1.bf16.msra.mxu0 %v2607
    %2629 = vmatprep.subr.bf16.mxu0 0
    %2630 = vmatpush1.bf16.msra.mxu0 %v2608
    %2631 = vmatprep.subr.bf16.mxu0 0
    %2632 = vmatpush1.bf16.msra.mxu0 %v2609
    %2633 = vmatprep.subr.bf16.mxu0 0
    %2634 = vmatpush1.bf16.msra.mxu0 %v2610
    %2635 = vmatprep.subr.bf16.mxu0 0
    %2636 = vmatpush1.bf16.msra.mxu0 0
    %2637 = vmatprep.subr.bf16.mxu0 0
    %2638 = vmatpush1.bf16.msra.mxu0 0
    %2639 = vmatprep.subr.bf16.mxu0 0
    %2640 = vmatpush1.bf16.msra.mxu0 0
    %2641 = vmatprep.subr.bf16.mxu0 0
    %2642 = vmatpush1.bf16.msra.mxu0 0
    %2643 = vmatprep.subr.bf16.mxu0 0
    %2644 = vmatpush1.bf16.msra.mxu0 0
    %2645 = vmatprep.subr.bf16.mxu0 0
    %2646 = vmatpush1.bf16.msra.mxu0 0
    %2647 = vmatprep.subr.bf16.mxu0 0
    %2648 = vmatpush1.bf16.msra.mxu0 0
    %2649 = vmatprep.subr.bf16.mxu0 0
    %2650 = vmatpush1.bf16.msra.mxu0 0
    %2651 = vmatprep.mubr.bf16.mxu0 0
    %2652 = vmatmul.mubr.bf16.gmra.mrb[0].mxu0 %v1812
    %v2653 = vpop.f32.mrb[0].mxu0
    %v2654 = vadd.f32 %v2569, %v2653
    %v2655 = vpop.f32.mrb[0].mxu0
    %v2656 = vpop.f32.mrb[0].mxu0
    %v2657 = vadd.f32 %v2569, %v2656
    %v2658 = vpop.f32.mrb[0].mxu0
    %2659 = vdwg.mxu0
    %v2660 = vpack.c.bf16 %v2429, %v2426
    %2661 = vxpose.xlu0.b32.start [1/16] %v2540, 128
    %2662 = vxpose.xlu0.b32.cont [2/16] %v2543, 128
    %2663 = vxpose.xlu0.b32.cont [3/16] 0.0, 128
    %2664 = vxpose.xlu0.b32.cont [4/16] 0.0, 128
    %2665 = vxpose.xlu0.b32.cont [5/16] 0.0, 128
    %2666 = vxpose.xlu0.b32.cont [6/16] 0.0, 128
    %2667 = vxpose.xlu0.b32.cont [7/16] 0.0, 128
    %2668 = vxpose.xlu0.b32.cont [8/16] 0.0, 128
    %2669 = vxpose.xlu0.b32.cont [9/16] 0.0, 128
    %2670 = vxpose.xlu0.b32.cont [10/16] 0.0, 128
    %2671 = vxpose.xlu0.b32.cont [11/16] 0.0, 128
    %2672 = vxpose.xlu0.b32.cont [12/16] 0.0, 128
    %2673 = vxpose.xlu0.b32.cont [13/16] 0.0, 128
    %2674 = vxpose.xlu0.b32.cont [14/16] 0.0, 128
    %2675 = vxpose.xlu0.b32.cont [15/16] 0.0, 128
    %2676 = vxpose.xlu0.b32.end [16/16] 0.0, 128
    %v2677 = vpop.trf.xlu0
    %v2678 = vpop.trf.xlu0
    %v2679 = vpop.trf.xlu0
    %v2680 = vpop.trf.xlu0
    %v2681 = vpop.trf.xlu0
    %v2682 = vpop.trf.xlu0
    %v2683 = vpop.trf.xlu0
    %v2684 = vpop.trf.xlu0
    %v2685 = vpop.trf.xlu0
    %v2686 = vpop.trf.xlu0
    %v2687 = vpop.trf.xlu0
    %v2688 = vpop.trf.xlu0
    %v2689 = vpop.trf.xlu0
    %v2690 = vpop.trf.xlu0
    %v2691 = vpop.trf.xlu0
    %v2692 = vpop.trf.xlu0
    %v2693 = vpack.c.bf16 %v2678, %v2677
    %v2694 = vpack.c.bf16 %v2680, %v2679
    %v2695 = vpack.c.bf16 %v2682, %v2681
    %v2696 = vpack.c.bf16 %v2684, %v2683
    %v2698 = vsel %vm111, %v2660, 0
    %2700 = vmatprep.subr.bf16.mxu0 0
    %2701 = vmatpush1.bf16.msra.mxu0 %v2693
    %2702 = vmatprep.subr.bf16.mxu0 0
    %2703 = vmatpush1.bf16.msra.mxu0 %v2694
    %2704 = vmatprep.subr.bf16.mxu0 0
    %2705 = vmatpush1.bf16.msra.mxu0 %v2695
    %2706 = vmatprep.subr.bf16.mxu0 0
    %2707 = vmatpush1.bf16.msra.mxu0 %v2696
    %2708 = vmatprep.subr.bf16.mxu0 0
    %2709 = vmatpush1.bf16.msra.mxu0 0
    %2710 = vmatprep.subr.bf16.mxu0 0
    %2711 = vmatpush1.bf16.msra.mxu0 0
    %2712 = vmatprep.subr.bf16.mxu0 0
    %2713 = vmatpush1.bf16.msra.mxu0 0
    %2714 = vmatprep.subr.bf16.mxu0 0
    %2715 = vmatpush1.bf16.msra.mxu0 0
    %2716 = vmatprep.subr.bf16.mxu0 0
    %2717 = vmatpush1.bf16.msra.mxu0 0
    %2718 = vmatprep.subr.bf16.mxu0 0
    %2719 = vmatpush1.bf16.msra.mxu0 0
    %2720 = vmatprep.subr.bf16.mxu0 0
    %2721 = vmatpush1.bf16.msra.mxu0 0
    %2722 = vmatprep.subr.bf16.mxu0 0
    %2723 = vmatpush1.bf16.msra.mxu0 0
    %2724 = vmatprep.subr.bf16.mxu0 0
    %2725 = vmatpush1.bf16.msra.mxu0 0
    %2726 = vmatprep.subr.bf16.mxu0 0
    %2727 = vmatpush1.bf16.msra.mxu0 0
    %2728 = vmatprep.subr.bf16.mxu0 0
    %2729 = vmatpush1.bf16.msra.mxu0 0
    %2730 = vmatprep.subr.bf16.mxu0 0
    %2731 = vmatpush1.bf16.msra.mxu0 0
    %2732 = vmatprep.mubr.bf16.mxu0 0
    %2733 = vmatmul.mubr.bf16.gmra.mrb[0].mxu0 %v2698
    %v2734 = vpop.f32.mrb[0].mxu0
    %v2735 = vadd.f32 0.0, %v2734
    %v2736 = vpop.f32.mrb[0].mxu0
    %v2737 = vpop.f32.mrb[0].mxu0
    %v2738 = vadd.f32 0.0, %v2737
    %v2739 = vpop.f32.mrb[0].mxu0
    %2740 = vdwg.mxu0
    %v2741 = vmul.f32 %v2735, 0.125
    %v2742 = vmul.f32 %v2738, 0.125
    %v2743 = vadd.f32 %v2741, %v210
    %v2744 = vadd.f32 %v2742, %v211
    %v2745 = vsel %vm638, %v2743, -inf
    %2746 = vmax.xlane.f32.xlu0 %v2745
    %v2747 = vpop.xlane.xlu0 %2746
    %v2748 = vsel %vm638, %v2744, -inf
    %2749 = vmax.xlane.f32.xlu0 %v2748
    %v2750 = vpop.xlane.xlu0 %2749
    %v2751 = vsub.f32 %v2743, %v2747
    %v2752 = vsub.f32 %v2744, %v2750
    %v2753 = vmul.f32 %v2751, 1.442695
    %v2754 = vpow.pop %v2753
    %v2755 = vmul.f32 %v2752, 1.442695
    %v2756 = vpow.pop %v2755
    %v2757 = vsel %vm638, %v2754, 0.0
    %2758 = vadd.xlane.f32.xlu0 %v2757
    %v2759 = vpop.xlane.xlu0 %2758
    %v2760 = vsel %vm638, %v2756, 0.0
    %2761 = vadd.xlane.f32.xlu0 %v2760
    %v2762 = vpop.xlane.xlu0 %2761
    %v2763 = vrcp.pop %v2759
    %v2764 = vrcp.pop %v2762
    %v2765 = vmul.f32 %v2754, %v2763
    %v2766 = vmul.f32 %v2756, %v2764
    %v2767 = vpack.c.bf16 %v2766, %v2765
    %v2768 = vpack.c.bf16 %v2657, %v2654
    %v2770 = vsel %vm638, %v2767, 0
    %2772 = vmatprep.subr.bf16.mxu0 0
    %2773 = vmatpush1.bf16.msra.mxu0 %v2768
    %2774 = vmatprep.subr.bf16.mxu0 0
    %2775 = vmatpush1.bf16.msra.mxu0 0
    %2776 = vmatprep.subr.bf16.mxu0 0
    %2777 = vmatpush1.bf16.msra.mxu0 0
    %2778 = vmatprep.subr.bf16.mxu0 0
    %2779 = vmatpush1.bf16.msra.mxu0 0
    %2780 = vmatprep.subr.bf16.mxu0 0
    %2781 = vmatpush1.bf16.msra.mxu0 0
    %2782 = vmatprep.subr.bf16.mxu0 0
    %2783 = vmatpush1.bf16.msra.mxu0 0
    %2784 = vmatprep.subr.bf16.mxu0 0
    %2785 = vmatpush1.bf16.msra.mxu0 0
    %2786 = vmatprep.subr.bf16.mxu0 0
    %2787 = vmatpush1.bf16.msra.mxu0 0
    %2788 = vmatprep.subr.bf16.mxu0 0
    %2789 = vmatpush1.bf16.msra.mxu0 0
    %2790 = vmatprep.subr.bf16.mxu0 0
    %2791 = vmatpush1.bf16.msra.mxu0 0
    %2792 = vmatprep.subr.bf16.mxu0 0
    %2793 = vmatpush1.bf16.msra.mxu0 0
    %2794 = vmatprep.subr.bf16.mxu0 0
    %2795 = vmatpush1.bf16.msra.mxu0 0
    %2796 = vmatprep.subr.bf16.mxu0 0
    %2797 = vmatpush1.bf16.msra.mxu0 0
    %2798 = vmatprep.subr.bf16.mxu0 0
    %2799 = vmatpush1.bf16.msra.mxu0 0
    %2800 = vmatprep.subr.bf16.mxu0 0
    %2801 = vmatpush1.bf16.msra.mxu0 0
    %2802 = vmatprep.subr.bf16.mxu0 0
    %2803 = vmatpush1.bf16.msra.mxu0 0
    %2804 = vmatprep.mubr.bf16.mxu0 0
    %2805 = vmatmul.mubr.bf16.gmra.mrb[0].mxu0 %v2770
    %v2806 = vpop.f32.mrb[0].mxu0
    %v2807 = vadd.f32 0.0, %v2806
    %v2808 = vpop.f32.mrb[0].mxu0
    %v2809 = vpop.f32.mrb[0].mxu0
    %v2810 = vadd.f32 0.0, %v2809
    %v2811 = vpop.f32.mrb[0].mxu0
    %2812 = vdwg.mxu0
    %v2813 = vpack.c.bf16 %v2810, %v2807
    %s2814 = scalar_lea.vmem %s5, 96
    %v2815 = vld [vmem:[%s2814] sm:$0xf]
    %v2816 = vld [vmem:[%s2814 + $0x4] sm:$0xf]
    %v2817 = vld [vmem:[%s2814 + $0x8] sm:$0xf]
    %v2818 = vld [vmem:[%s2814 + $0xc] sm:$0xf]
    %v2819 = vld [vmem:[%s2814 + $0x10] sm:$0xf]
    %v2820 = vld [vmem:[%s2814 + $0x14] sm:$0xf]
    %v2821 = vld [vmem:[%s2814 + $0x18] sm:$0xf]
    %v2822 = vld [vmem:[%s2814 + $0x1c] sm:$0xf]
    %v2831 = vunpack.c.l.b16 %v2815
    %v2832 = vunpack.c.l.b16 %v2816
    %v2833 = vunpack.c.l.b16 %v2817
    %v2834 = vunpack.c.l.b16 %v2818
    %v2835 = vunpack.c.l.b16 %v2819
    %v2836 = vunpack.c.l.b16 %v2820
    %v2837 = vunpack.c.l.b16 %v2821
    %v2838 = vunpack.c.l.b16 %v2822
    %v2839 = vpack.c.b16 %v2832, %v2831
    %v2840 = vpack.c.b16 %v2834, %v2833
    %v2841 = vpack.c.b16 %v2836, %v2835
    %v2842 = vpack.c.b16 %v2838, %v2837
    %v2848 = vsel %vm111, %v2813, 0
    %2850 = vmatprep.subr.bf16.mxu0 0
    %2851 = vmatpush1.bf16.msra.mxu0 %v2839
    %2852 = vmatprep.subr.bf16.mxu0 0
    %2853 = vmatpush1.bf16.msra.mxu0 %v2840
    %2854 = vmatprep.subr.bf16.mxu0 0
    %2855 = vmatpush1.bf16.msra.mxu0 %v2841
    %2856 = vmatprep.subr.bf16.mxu0 0
    %2857 = vmatpush1.bf16.msra.mxu0 %v2842
    %2858 = vmatprep.subr.bf16.mxu0 0
    %2859 = vmatpush1.bf16.msra.mxu0 0
    %2860 = vmatprep.subr.bf16.mxu0 0
    %2861 = vmatpush1.bf16.msra.mxu0 0
    %2862 = vmatprep.subr.bf16.mxu0 0
    %2863 = vmatpush1.bf16.msra.mxu0 0
    %2864 = vmatprep.subr.bf16.mxu0 0
    %2865 = vmatpush1.bf16.msra.mxu0 0
    %2866 = vmatprep.subr.bf16.mxu0 0
    %2867 = vmatpush1.bf16.msra.mxu0 0
    %2868 = vmatprep.subr.bf16.mxu0 0
    %2869 = vmatpush1.bf16.msra.mxu0 0
    %2870 = vmatprep.subr.bf16.mxu0 0
    %2871 = vmatpush1.bf16.msra.mxu0 0
    %2872 = vmatprep.subr.bf16.mxu0 0
    %2873 = vmatpush1.bf16.msra.mxu0 0
    %2874 = vmatprep.subr.bf16.mxu0 0
    %2875 = vmatpush1.bf16.msra.mxu0 0
    %2876 = vmatprep.subr.bf16.mxu0 0
    %2877 = vmatpush1.bf16.msra.mxu0 0
    %2878 = vmatprep.subr.bf16.mxu0 0
    %2879 = vmatpush1.bf16.msra.mxu0 0
    %2880 = vmatprep.subr.bf16.mxu0 0
    %2881 = vmatpush1.bf16.msra.mxu0 0
    %2882 = vmatprep.mubr.bf16.mxu0 0
    %2883 = vmatmul.mubr.bf16.gmra.mrb[0].mxu0 %v2848
    %v2884 = vpop.f32.mrb[0].mxu0
    %v2885 = vadd.f32 0.0, %v2884
    %v2886 = vpop.f32.mrb[0].mxu0
    %v2887 = vpop.f32.mrb[0].mxu0
    %v2888 = vadd.f32 0.0, %v2887
    %v2889 = vpop.f32.mrb[0].mxu0
    %2890 = vdwg.mxu0
    %v2899 = vunpack.c.l.b16 %v2310
    %v2900 = vunpack.c.l.b16 %v2311
    %v2901 = vunpack.c.l.b16 %v2312
    %v2902 = vunpack.c.l.b16 %v2313
    %v2903 = vunpack.c.l.b16 %v2314
    %v2904 = vunpack.c.l.b16 %v2315
    %v2905 = vunpack.c.l.b16 %v2316
    %v2906 = vunpack.c.l.b16 %v2317
    %v2907 = vpack.c.b16 %v2900, %v2899
    %v2908 = vpack.c.b16 %v2902, %v2901
    %v2909 = vpack.c.b16 %v2904, %v2903
    %v2910 = vpack.c.b16 %v2906, %v2905
    %v2916 = vsel %vm111, %v2308, 0
    %2918 = vmatprep.subr.bf16.mxu0 0
    %2919 = vmatpush1.bf16.msra.mxu0 %v2907
    %2920 = vmatprep.subr.bf16.mxu0 0
    %2921 = vmatpush1.bf16.msra.mxu0 %v2908
    %2922 = vmatprep.subr.bf16.mxu0 0
    %2923 = vmatpush1.bf16.msra.mxu0 %v2909
    %2924 = vmatprep.subr.bf16.mxu0 0
    %2925 = vmatpush1.bf16.msra.mxu0 %v2910
    %2926 = vmatprep.subr.bf16.mxu0 0
    %2927 = vmatpush1.bf16.msra.mxu0 0
    %2928 = vmatprep.subr.bf16.mxu0 0
    %2929 = vmatpush1.bf16.msra.mxu0 0
    %2930 = vmatprep.subr.bf16.mxu0 0
    %2931 = vmatpush1.bf16.msra.mxu0 0
    %2932 = vmatprep.subr.bf16.mxu0 0
    %2933 = vmatpush1.bf16.msra.mxu0 0
    %2934 = vmatprep.subr.bf16.mxu0 0
    %2935 = vmatpush1.bf16.msra.mxu0 0
    %2936 = vmatprep.subr.bf16.mxu0 0
    %2937 = vmatpush1.bf16.msra.mxu0 0
    %2938 = vmatprep.subr.bf16.mxu0 0
    %2939 = vmatpush1.bf16.msra.mxu0 0
    %2940 = vmatprep.subr.bf16.mxu0 0
    %2941 = vmatpush1.bf16.msra.mxu0 0
    %2942 = vmatprep.subr.bf16.mxu0 0
    %2943 = vmatpush1.bf16.msra.mxu0 0
    %2944 = vmatprep.subr.bf16.mxu0 0
    %2945 = vmatpush1.bf16.msra.mxu0 0
    %2946 = vmatprep.subr.bf16.mxu0 0
    %2947 = vmatpush1.bf16.msra.mxu0 0
    %2948 = vmatprep.subr.bf16.mxu0 0
    %2949 = vmatpush1.bf16.msra.mxu0 0
    %2950 = vmatprep.mubr.bf16.mxu0 0
    %2951 = vmatmul.mubr.bf16.gmra.mrb[0].mxu0 %v2916
    %v2952 = vpop.f32.mrb[0].mxu0
    %v2953 = vadd.f32 %v2885, %v2952
    %v2954 = vpop.f32.mrb[0].mxu0
    %v2955 = vpop.f32.mrb[0].mxu0
    %v2956 = vadd.f32 %v2888, %v2955
    %v2957 = vpop.f32.mrb[0].mxu0
    %2958 = vdwg.mxu0
    %v2959 = vld [vmem:[%s10 + $0x8] sm:$0x1]
    %v2960 = vlaneseq
    %v2961 = vshrl.u32 %v2960, 7
    %v2962 = vsub.s32 0, %v2961
    %v2963 = vrot.slane %v2959, %v2962
    %v2964 = vadd.f32 %v2953, %v2963
    %v2965 = vadd.f32 %v2956, %v2963
    %v2966 = vadd.f32 %v2964, %v1810
    %v2967 = vadd.f32 %v2965, %v1811
    %v2968 = vld [vmem:[%s10 + $0x9] sm:$0x1]
    %v2969 = vld [vmem:[%s10 + $0xa] sm:$0x1]
    %2970 = vadd.xlane.f32.xlu0 %v2966
    %v2971 = vpop.xlane.xlu0 %2970
    %2972 = vadd.xlane.f32.xlu0 %v2967
    %v2973 = vpop.xlane.xlu0 %2972
    %v2974 = vmul.f32 %v2971, %v162
    %v2975 = vmul.f32 %v2973, %v162
    %v2976 = vmul.f32 %v2966, %v2966
    %v2977 = vmul.f32 %v2967, %v2967
    %2978 = vadd.xlane.f32.xlu0 %v2976
    %v2979 = vpop.xlane.xlu0 %2978
    %2980 = vadd.xlane.f32.xlu0 %v2977
    %v2981 = vpop.xlane.xlu0 %2980
    %v2982 = vmul.f32 %v2979, %v162
    %v2983 = vmul.f32 %v2981, %v162
    %v2984 = vmul.f32 %v2974, %v2974
    %v2985 = vmul.f32 %v2975, %v2975
    %v2986 = vsub.f32 %v2982, %v2984
    %v2987 = vsub.f32 %v2983, %v2985
    %v2988 = vsub.f32 %v2966, %v2974
    %v2989 = vsub.f32 %v2967, %v2975
    %v2990 = vadd.f32 %v2986, 1e-12
    %v2991 = vadd.f32 %v2987, 1e-12
    %v2992 = vrsqrt.pop %v2990
    %v2993 = vrsqrt.pop %v2991
    %v2994 = vmul.f32 %v2988, %v2992
    %v2995 = vmul.f32 %v2989, %v2993
    %v2996 = vlaneseq
    %v2997 = vshrl.u32 %v2996, 7
    %v2998 = vsub.s32 0, %v2997
    %v2999 = vrot.slane %v2968, %v2998
    %v3000 = vmul.f32 %v2994, %v2999
    %v3001 = vmul.f32 %v2995, %v2999
    %v3002 = vlaneseq
    %v3003 = vshrl.u32 %v3002, 7
    %v3004 = vsub.s32 0, %v3003
    %v3005 = vrot.slane %v2969, %v3004
    %v3006 = vadd.f32 %v3000, %v3005
    %v3007 = vadd.f32 %v3001, %v3005
    %v3008 = vpack.c.bf16 %v3007, %v3006
    %s3009 = scalar_lea.vmem %s6, 128
    %v3010 = vld [vmem:[%s3009] sm:$0xff]
    %v3011 = vld [vmem:[%s3009 + $0x8] sm:$0xff]
    %v3012 = vld [vmem:[%s3009 + $0x10] sm:$0xff]
    %v3013 = vld [vmem:[%s3009 + $0x18] sm:$0xff]
    %v3014 = vld [vmem:[%s3009 + $0x20] sm:$0xff]
    %v3015 = vld [vmem:[%s3009 + $0x28] sm:$0xff]
    %v3016 = vld [vmem:[%s3009 + $0x30] sm:$0xff]
    %v3017 = vld [vmem:[%s3009 + $0x38] sm:$0xff]
    %v3018 = vld [vmem:[%s3009 + $0x40] sm:$0xff]
    %v3019 = vld [vmem:[%s3009 + $0x48] sm:$0xff]
    %v3020 = vld [vmem:[%s3009 + $0x50] sm:$0xff]
    %v3021 = vld [vmem:[%s3009 + $0x58] sm:$0xff]
    %v3022 = vld [vmem:[%s3009 + $0x60] sm:$0xff]
    %v3023 = vld [vmem:[%s3009 + $0x68] sm:$0xff]
    %v3024 = vld [vmem:[%s3009 + $0x70] sm:$0xff]
    %v3025 = vld [vmem:[%s3009 + $0x78] sm:$0xff]
    %s3026 = scalar_lea.vmem %s7, 2
    %v3027 = vld [vmem:[%s3026] sm:$0x3]
    %v3029 = vlaneseq
    %v3030 = vshrl.u32 %v3029, 7
    %v3031 = vsub.s32 0, %v3030
    %v3032 = vrot.slane %v3027, %v3031
    %v3033 = vlaneseq
    %v3034 = vshrl.u32 %v3033, 7
    %v3035 = vsub.s32 1, %v3034
    %v3036 = vrot.slane %v3027, %v3035
    %v3055 = vunpack.c.l.b16 %v3010
    %v3056 = vunpack.c.h.b16 %v3010
    %v3057 = vunpack.c.l.b16 %v3011
    %v3058 = vunpack.c.h.b16 %v3011
    %v3059 = vunpack.c.l.b16 %v3012
    %v3060 = vunpack.c.h.b16 %v3012
    %v3061 = vunpack.c.l.b16 %v3013
    %v3062 = vunpack.c.h.b16 %v3013
    %v3063 = vunpack.c.l.b16 %v3014
    %v3064 = vunpack.c.h.b16 %v3014
    %v3065 = vunpack.c.l.b16 %v3015
    %v3066 = vunpack.c.h.b16 %v3015
    %v3067 = vunpack.c.l.b16 %v3016
    %v3068 = vunpack.c.h.b16 %v3016
    %v3069 = vunpack.c.l.b16 %v3017
    %v3070 = vunpack.c.h.b16 %v3017
    %v3071 = vunpack.c.l.b16 %v3018
    %v3072 = vunpack.c.h.b16 %v3018
    %v3073 = vunpack.c.l.b16 %v3019
    %v3074 = vunpack.c.h.b16 %v3019
    %v3075 = vunpack.c.l.b16 %v3020
    %v3076 = vunpack.c.h.b16 %v3020
    %v3077 = vunpack.c.l.b16 %v3021
    %v3078 = vunpack.c.h.b16 %v3021
    %v3079 = vunpack.c.l.b16 %v3022
    %v3080 = vunpack.c.h.b16 %v3022
    %v3081 = vunpack.c.l.b16 %v3023
    %v3082 = vunpack.c.h.b16 %v3023
    %v3083 = vunpack.c.l.b16 %v3024
    %v3084 = vunpack.c.h.b16 %v3024
    %v3085 = vunpack.c.l.b16 %v3025
    %v3086 = vunpack.c.h.b16 %v3025
    %v3087 = vpack.c.b16 %v3057, %v3055
    %v3088 = vpack.c.b16 %v3058, %v3056
    %v3089 = vpack.c.b16 %v3061, %v3059
    %v3090 = vpack.c.b16 %v3062, %v3060
    %v3091 = vpack.c.b16 %v3065, %v3063
    %v3092 = vpack.c.b16 %v3066, %v3064
    %v3093 = vpack.c.b16 %v3069, %v3067
    %v3094 = vpack.c.b16 %v3070, %v3068
    %v3095 = vpack.c.b16 %v3073, %v3071
    %v3096 = vpack.c.b16 %v3074, %v3072
    %v3097 = vpack.c.b16 %v3077, %v3075
    %v3098 = vpack.c.b16 %v3078, %v3076
    %v3099 = vpack.c.b16 %v3081, %v3079
    %v3100 = vpack.c.b16 %v3082, %v3080
    %v3101 = vpack.c.b16 %v3085, %v3083
    %v3102 = vpack.c.b16 %v3086, %v3084
    %3119 = vmatprep.subr.bf16.mxu0 %v3088
    %3120 = vmatpush1.bf16.msra.mxu0 %v3087
    %3121 = vmatprep.subr.bf16.mxu0 %v3090
    %3122 = vmatpush1.bf16.msra.mxu0 %v3089
    %3123 = vmatprep.subr.bf16.mxu0 %v3092
    %3124 = vmatpush1.bf16.msra.mxu0 %v3091
    %3125 = vmatprep.subr.bf16.mxu0 %v3094
    %3126 = vmatpush1.bf16.msra.mxu0 %v3093
    %3127 = vmatprep.subr.bf16.mxu0 %v3096
    %3128 = vmatpush1.bf16.msra.mxu0 %v3095
    %3129 = vmatprep.subr.bf16.mxu0 %v3098
    %3130 = vmatpush1.bf16.msra.mxu0 %v3097
    %3131 = vmatprep.subr.bf16.mxu0 %v3100
    %3132 = vmatpush1.bf16.msra.mxu0 %v3099
    %3133 = vmatprep.subr.bf16.mxu0 %v3102
    %3134 = vmatpush1.bf16.msra.mxu0 %v3101
    %3135 = vmatprep.subr.bf16.mxu0 0
    %3136 = vmatpush1.bf16.msra.mxu0 0
    %3137 = vmatprep.subr.bf16.mxu0 0
    %3138 = vmatpush1.bf16.msra.mxu0 0
    %3139 = vmatprep.subr.bf16.mxu0 0
    %3140 = vmatpush1.bf16.msra.mxu0 0
    %3141 = vmatprep.subr.bf16.mxu0 0
    %3142 = vmatpush1.bf16.msra.mxu0 0
    %3143 = vmatprep.subr.bf16.mxu0 0
    %3144 = vmatpush1.bf16.msra.mxu0 0
    %3145 = vmatprep.subr.bf16.mxu0 0
    %3146 = vmatpush1.bf16.msra.mxu0 0
    %3147 = vmatprep.subr.bf16.mxu0 0
    %3148 = vmatpush1.bf16.msra.mxu0 0
    %3149 = vmatprep.subr.bf16.mxu0 0
    %3150 = vmatpush1.bf16.msra.mxu0 0
    %3151 = vmatprep.mubr.bf16.mxu0 0
    %3152 = vmatmul.mubr.bf16.gmra.mrb[0].mxu0 %v3008
    %v3153 = vpop.f32.mrb[0].mxu0
    %v3154 = vadd.f32 %v3032, %v3153
    %v3155 = vpop.f32.mrb[0].mxu0
    %v3156 = vadd.f32 %v3036, %v3155
    %v3157 = vpop.f32.mrb[0].mxu0
    %v3158 = vadd.f32 %v3032, %v3157
    %v3159 = vpop.f32.mrb[0].mxu0
    %v3160 = vadd.f32 %v3036, %v3159
    %3161 = vdwg.mxu0
    %v3162 = vmul.f32 %v3154, %v3154
    %v3163 = vmul.f32 %v3156, %v3156
    %v3164 = vmul.f32 %v3158, %v3158
    %v3165 = vmul.f32 %v3160, %v3160
    %v3166 = vmul.f32 %v3154, %v3162
    %v3167 = vmul.f32 %v3156, %v3163
    %v3168 = vmul.f32 %v3158, %v3164
    %v3169 = vmul.f32 %v3160, %v3165
    %v3170 = vmul.f32 %v3166, 0.044715
    %v3171 = vmul.f32 %v3167, 0.044715
    %v3172 = vmul.f32 %v3168, 0.044715
    %v3173 = vmul.f32 %v3169, 0.044715
    %v3174 = vadd.f32 %v3154, %v3170
    %v3175 = vadd.f32 %v3156, %v3171
    %v3176 = vadd.f32 %v3158, %v3172
    %v3177 = vadd.f32 %v3160, %v3173
    %v3178 = vmul.f32 %v3174, 0.7978846
    %v3179 = vmul.f32 %v3175, 0.7978846
    %v3180 = vmul.f32 %v3176, 0.7978846
    %v3181 = vmul.f32 %v3177, 0.7978846
    %v3182 = vtanh.pop %v3178
    %v3183 = vtanh.pop %v3179
    %v3184 = vtanh.pop %v3180
    %v3185 = vtanh.pop %v3181
    %v3186 = vadd.f32 %v3182, 1.0
    %v3187 = vadd.f32 %v3183, 1.0
    %v3188 = vadd.f32 %v3184, 1.0
    %v3189 = vadd.f32 %v3185, 1.0
    %v3190 = vmul.f32 %v3186, 0.5
    %v3191 = vmul.f32 %v3187, 0.5
    %v3192 = vmul.f32 %v3188, 0.5
    %v3193 = vmul.f32 %v3189, 0.5
    %v3194 = vmul.f32 %v3154, %v3190
    %v3195 = vmul.f32 %v3156, %v3191
    %v3196 = vmul.f32 %v3158, %v3192
    %v3197 = vmul.f32 %v3160, %v3193
    %v3198 = vpack.c.bf16 %v3196, %v3194
    %v3199 = vpack.c.bf16 %v3197, %v3195
    %s3200 = scalar_lea.vmem %s8, 128
    %v3201 = vld [vmem:[%s3200] sm:$0xf]
    %v3202 = vld [vmem:[%s3200 + $0x4] sm:$0xf]
    %v3203 = vld [vmem:[%s3200 + $0x8] sm:$0xf]
    %v3204 = vld [vmem:[%s3200 + $0xc] sm:$0xf]
    %v3205 = vld [vmem:[%s3200 + $0x10] sm:$0xf]
    %v3206 = vld [vmem:[%s3200 + $0x14] sm:$0xf]
    %v3207 = vld [vmem:[%s3200 + $0x18] sm:$0xf]
    %v3208 = vld [vmem:[%s3200 + $0x1c] sm:$0xf]
    %v3209 = vld [vmem:[%s3200 + $0x20] sm:$0xf]
    %v3210 = vld [vmem:[%s3200 + $0x24] sm:$0xf]
    %v3211 = vld [vmem:[%s3200 + $0x28] sm:$0xf]
    %v3212 = vld [vmem:[%s3200 + $0x2c] sm:$0xf]
    %v3213 = vld [vmem:[%s3200 + $0x30] sm:$0xf]
    %v3214 = vld [vmem:[%s3200 + $0x34] sm:$0xf]
    %v3215 = vld [vmem:[%s3200 + $0x38] sm:$0xf]
    %v3216 = vld [vmem:[%s3200 + $0x3c] sm:$0xf]
    %v3217 = vld [vmem:[%s3200 + $0x40] sm:$0xf]
    %v3218 = vld [vmem:[%s3200 + $0x44] sm:$0xf]
    %v3219 = vld [vmem:[%s3200 + $0x48] sm:$0xf]
    %v3220 = vld [vmem:[%s3200 + $0x4c] sm:$0xf]
    %v3221 = vld [vmem:[%s3200 + $0x50] sm:$0xf]
    %v3222 = vld [vmem:[%s3200 + $0x54] sm:$0xf]
    %v3223 = vld [vmem:[%s3200 + $0x58] sm:$0xf]
    %v3224 = vld [vmem:[%s3200 + $0x5c] sm:$0xf]
    %v3225 = vld [vmem:[%s3200 + $0x60] sm:$0xf]
    %v3226 = vld [vmem:[%s3200 + $0x64] sm:$0xf]
    %v3227 = vld [vmem:[%s3200 + $0x68] sm:$0xf]
    %v3228 = vld [vmem:[%s3200 + $0x6c] sm:$0xf]
    %v3229 = vld [vmem:[%s3200 + $0x70] sm:$0xf]
    %v3230 = vld [vmem:[%s3200 + $0x74] sm:$0xf]
    %v3231 = vld [vmem:[%s3200 + $0x78] sm:$0xf]
    %v3232 = vld [vmem:[%s3200 + $0x7c] sm:$0xf]
    %v3233 = vld [vmem:[%s10 + $0xb] sm:$0x1]
    %v3234 = vlaneseq
    %v3235 = vshrl.u32 %v3234, 7
    %v3236 = vsub.s32 0, %v3235
    %v3237 = vrot.slane %v3233, %v3236
    %v3270 = vunpack.c.l.b16 %v3201
    %v3271 = vunpack.c.l.b16 %v3202
    %v3272 = vunpack.c.l.b16 %v3203
    %v3273 = vunpack.c.l.b16 %v3204
    %v3274 = vunpack.c.l.b16 %v3205
    %v3275 = vunpack.c.l.b16 %v3206
    %v3276 = vunpack.c.l.b16 %v3207
    %v3277 = vunpack.c.l.b16 %v3208
    %v3278 = vunpack.c.l.b16 %v3209
    %v3279 = vunpack.c.l.b16 %v3210
    %v3280 = vunpack.c.l.b16 %v3211
    %v3281 = vunpack.c.l.b16 %v3212
    %v3282 = vunpack.c.l.b16 %v3213
    %v3283 = vunpack.c.l.b16 %v3214
    %v3284 = vunpack.c.l.b16 %v3215
    %v3285 = vunpack.c.l.b16 %v3216
    %v3286 = vunpack.c.l.b16 %v3217
    %v3287 = vunpack.c.l.b16 %v3218
    %v3288 = vunpack.c.l.b16 %v3219
    %v3289 = vunpack.c.l.b16 %v3220
    %v3290 = vunpack.c.l.b16 %v3221
    %v3291 = vunpack.c.l.b16 %v3222
    %v3292 = vunpack.c.l.b16 %v3223
    %v3293 = vunpack.c.l.b16 %v3224
    %v3294 = vunpack.c.l.b16 %v3225
    %v3295 = vunpack.c.l.b16 %v3226
    %v3296 = vunpack.c.l.b16 %v3227
    %v3297 = vunpack.c.l.b16 %v3228
    %v3298 = vunpack.c.l.b16 %v3229
    %v3299 = vunpack.c.l.b16 %v3230
    %v3300 = vunpack.c.l.b16 %v3231
    %v3301 = vunpack.c.l.b16 %v3232
    %v3302 = vpack.c.b16 %v3271, %v3270
    %v3303 = vpack.c.b16 %v3273, %v3272
    %v3304 = vpack.c.b16 %v3275, %v3274
    %v3305 = vpack.c.b16 %v3277, %v3276
    %v3306 = vpack.c.b16 %v3279, %v3278
    %v3307 = vpack.c.b16 %v3281, %v3280
    %v3308 = vpack.c.b16 %v3283, %v3282
    %v3309 = vpack.c.b16 %v3285, %v3284
    %v3310 = vpack.c.b16 %v3287, %v3286
    %v3311 = vpack.c.b16 %v3289, %v3288
    %v3312 = vpack.c.b16 %v3291, %v3290
    %v3313 = vpack.c.b16 %v3293, %v3292
    %v3314 = vpack.c.b16 %v3295, %v3294
    %v3315 = vpack.c.b16 %v3297, %v3296
    %v3316 = vpack.c.b16 %v3299, %v3298
    %v3317 = vpack.c.b16 %v3301, %v3300
    %3334 = vmatprep.subr.bf16.mxu0 0
    %3335 = vmatpush1.bf16.msra.mxu0 %v3302
    %3336 = vmatprep.subr.bf16.mxu0 0
    %3337 = vmatpush1.bf16.msra.mxu0 %v3303
    %3338 = vmatprep.subr.bf16.mxu0 0
    %3339 = vmatpush1.bf16.msra.mxu0 %v3304
    %3340 = vmatprep.subr.bf16.mxu0 0
    %3341 = vmatpush1.bf16.msra.mxu0 %v3305
    %3342 = vmatprep.subr.bf16.mxu0 0
    %3343 = vmatpush1.bf16.msra.mxu0 %v3306
    %3344 = vmatprep.subr.bf16.mxu0 0
    %3345 = vmatpush1.bf16.msra.mxu0 %v3307
    %3346 = vmatprep.subr.bf16.mxu0 0
    %3347 = vmatpush1.bf16.msra.mxu0 %v3308
    %3348 = vmatprep.subr.bf16.mxu0 0
    %3349 = vmatpush1.bf16.msra.mxu0 %v3309
    %3350 = vmatprep.subr.bf16.mxu0 0
    %3351 = vmatpush1.bf16.msra.mxu0 %v3310
    %3352 = vmatprep.subr.bf16.mxu0 0
    %3353 = vmatpush1.bf16.msra.mxu0 %v3311
    %3354 = vmatprep.subr.bf16.mxu0 0
    %3355 = vmatpush1.bf16.msra.mxu0 %v3312
    %3356 = vmatprep.subr.bf16.mxu0 0
    %3357 = vmatpush1.bf16.msra.mxu0 %v3313
    %3358 = vmatprep.subr.bf16.mxu0 0
    %3359 = vmatpush1.bf16.msra.mxu0 %v3314
    %3360 = vmatprep.subr.bf16.mxu0 0
    %3361 = vmatpush1.bf16.msra.mxu0 %v3315
    %3362 = vmatprep.subr.bf16.mxu0 0
    %3363 = vmatpush1.bf16.msra.mxu0 %v3316
    %3364 = vmatprep.subr.bf16.mxu0 0
    %3365 = vmatpush1.bf16.msra.mxu0 %v3317
    %3366 = vmatprep.mubr.bf16.mxu0 %v3199
    %3367 = vmatmul.mubr.bf16.gmra.mrb[0].mxu0 %v3198
    %v3368 = vpop.f32.mrb[0].mxu0
    %v3369 = vadd.f32 %v3237, %v3368
    %v3370 = vpop.f32.mrb[0].mxu0
    %v3371 = vpop.f32.mrb[0].mxu0
    %v3372 = vadd.f32 %v3237, %v3371
    %v3373 = vpop.f32.mrb[0].mxu0
    %3374 = vdwg.mxu0
    %v3375 = vadd.f32 %v3369, %v3006
    %v3376 = vadd.f32 %v3372, %v3007
    %v3377 = vld [vmem:[%s10 + $0xc] sm:$0x1]
    %v3378 = vld [vmem:[%s10 + $0xd] sm:$0x1]
    %3379 = vadd.xlane.f32.xlu0 %v3375
    %v3380 = vpop.xlane.xlu0 %3379
    %3381 = vadd.xlane.f32.xlu0 %v3376
    %v3382 = vpop.xlane.xlu0 %3381
    %v3383 = vmul.f32 %v3380, %v162
    %v3384 = vmul.f32 %v3382, %v162
    %v3385 = vmul.f32 %v3375, %v3375
    %v3386 = vmul.f32 %v3376, %v3376
    %3387 = vadd.xlane.f32.xlu0 %v3385
    %v3388 = vpop.xlane.xlu0 %3387
    %3389 = vadd.xlane.f32.xlu0 %v3386
    %v3390 = vpop.xlane.xlu0 %3389
    %v3391 = vmul.f32 %v3388, %v162
    %v3392 = vmul.f32 %v3390, %v162
    %v3393 = vmul.f32 %v3383, %v3383
    %v3394 = vmul.f32 %v3384, %v3384
    %v3395 = vsub.f32 %v3391, %v3393
    %v3396 = vsub.f32 %v3392, %v3394
    %v3397 = vsub.f32 %v3375, %v3383
    %v3398 = vsub.f32 %v3376, %v3384
    %v3399 = vadd.f32 %v3395, 1e-12
    %v3400 = vadd.f32 %v3396, 1e-12
    %v3401 = vrsqrt.pop %v3399
    %v3402 = vrsqrt.pop %v3400
    %v3403 = vmul.f32 %v3397, %v3401
    %v3404 = vmul.f32 %v3398, %v3402
    %v3405 = vlaneseq
    %v3406 = vshrl.u32 %v3405, 7
    %v3407 = vsub.s32 0, %v3406
    %v3408 = vrot.slane %v3377, %v3407
    %v3409 = vmul.f32 %v3403, %v3408
    %v3410 = vmul.f32 %v3404, %v3408
    %v3411 = vlaneseq
    %v3412 = vshrl.u32 %v3411, 7
    %v3413 = vsub.s32 0, %v3412
    %v3414 = vrot.slane %v3378, %v3413
    %v3415 = vadd.f32 %v3409, %v3414
    %v3416 = vadd.f32 %v3410, %v3414
    %v3417 = vlaneseq
    %v3418 = vshrl.u32 %v3417, 7
    %v3419 = vmul.u32 %v3418, 8
    %vm3420 = vcmp.eq.s32.totalorder %v3419, %v43
    %v3421 = vsel %vm3420, 1.0, 0.0
    %v3422 = vpack.c.bf16 %v3421, %v3421
    %v3423 = vpack.c.bf16 %v3416, %v3415
    %v3425 = vsel %vm638, %v3422, 0
    %3427 = vmatprep.subr.bf16.mxu0 0
    %3428 = vmatpush1.bf16.msra.mxu0 %v3423
    %3429 = vmatprep.subr.bf16.mxu0 0
    %3430 = vmatpush1.bf16.msra.mxu0 0
    %3431 = vmatprep.subr.bf16.mxu0 0
    %3432 = vmatpush1.bf16.msra.mxu0 0
    %3433 = vmatprep.subr.bf16.mxu0 0
    %3434 = vmatpush1.bf16.msra.mxu0 0
    %3435 = vmatprep.subr.bf16.mxu0 0
    %3436 = vmatpush1.bf16.msra.mxu0 0
    %3437 = vmatprep.subr.bf16.mxu0 0
    %3438 = vmatpush1.bf16.msra.mxu0 0
    %3439 = vmatprep.subr.bf16.mxu0 0
    %3440 = vmatpush1.bf16.msra.mxu0 0
    %3441 = vmatprep.subr.bf16.mxu0 0
    %3442 = vmatpush1.bf16.msra.mxu0 0
    %3443 = vmatprep.subr.bf16.mxu0 0
    %3444 = vmatpush1.bf16.msra.mxu0 0
    %3445 = vmatprep.subr.bf16.mxu0 0
    %3446 = vmatpush1.bf16.msra.mxu0 0
    %3447 = vmatprep.subr.bf16.mxu0 0
    %3448 = vmatpush1.bf16.msra.mxu0 0
    %3449 = vmatprep.subr.bf16.mxu0 0
    %3450 = vmatpush1.bf16.msra.mxu0 0
    %3451 = vmatprep.subr.bf16.mxu0 0
    %3452 = vmatpush1.bf16.msra.mxu0 0
    %3453 = vmatprep.subr.bf16.mxu0 0
    %3454 = vmatpush1.bf16.msra.mxu0 0
    %3455 = vmatprep.subr.bf16.mxu0 0
    %3456 = vmatpush1.bf16.msra.mxu0 0
    %3457 = vmatprep.subr.bf16.mxu0 0
    %3458 = vmatpush1.bf16.msra.mxu0 0
    %3459 = vmatprep.mubr.bf16.mxu0 0
    %3460 = vmatmul.mubr.bf16.gmra.mrb[0].mxu0 %v3425
    %v3461 = vpop.f32.mrb[0].mxu0
    %v3462 = vadd.f32 0.0, %v3461
    %v3463 = vpop.f32.mrb[0].mxu0
    %v3464 = vpop.f32.mrb[0].mxu0
    %v3465 = vpop.f32.mrb[0].mxu0
    %3466 = vdwg.mxu0
    %v3467 = vpack.c.bf16 %v3462, %v3462
    %v3468 = vld [vmem:[%s9] sm:$0xf]
    %v3469 = vld [vmem:[%s9 + $0x4] sm:$0xf]
    %v3470 = vld [vmem:[%s9 + $0x8] sm:$0xf]
    %v3471 = vld [vmem:[%s9 + $0xc] sm:$0xf]
    %v3472 = vld [vmem:[%s9 + $0x10] sm:$0xf]
    %v3473 = vld [vmem:[%s9 + $0x14] sm:$0xf]
    %v3474 = vld [vmem:[%s9 + $0x18] sm:$0xf]
    %v3475 = vld [vmem:[%s9 + $0x1c] sm:$0xf]
    %v3476 = vld [vmem:[%s9 + $0x20] sm:$0xf]
    %v3477 = vld [vmem:[%s9 + $0x24] sm:$0xf]
    %v3478 = vld [vmem:[%s9 + $0x28] sm:$0xf]
    %v3479 = vld [vmem:[%s9 + $0x2c] sm:$0xf]
    %v3480 = vld [vmem:[%s9 + $0x30] sm:$0xf]
    %v3481 = vld [vmem:[%s9 + $0x34] sm:$0xf]
    %v3482 = vld [vmem:[%s9 + $0x38] sm:$0xf]
    %v3483 = vld [vmem:[%s9 + $0x3c] sm:$0xf]
    %v3484 = vld [vmem:[%s10 + $0xe] sm:$0x1]
    %v3485 = vlaneseq
    %v3486 = vshrl.u32 %v3485, 7
    %v3487 = vsub.s32 0, %v3486
    %v3488 = vrot.slane %v3484, %v3487
    %v3505 = vunpack.c.l.b16 %v3468
    %v3506 = vunpack.c.l.b16 %v3469
    %v3507 = vunpack.c.l.b16 %v3470
    %v3508 = vunpack.c.l.b16 %v3471
    %v3509 = vunpack.c.l.b16 %v3472
    %v3510 = vunpack.c.l.b16 %v3473
    %v3511 = vunpack.c.l.b16 %v3474
    %v3512 = vunpack.c.l.b16 %v3475
    %v3513 = vunpack.c.l.b16 %v3476
    %v3514 = vunpack.c.l.b16 %v3477
    %v3515 = vunpack.c.l.b16 %v3478
    %v3516 = vunpack.c.l.b16 %v3479
    %v3517 = vunpack.c.l.b16 %v3480
    %v3518 = vunpack.c.l.b16 %v3481
    %v3519 = vunpack.c.l.b16 %v3482
    %v3520 = vunpack.c.l.b16 %v3483
    %v3521 = vpack.c.b16 %v3506, %v3505
    %v3522 = vpack.c.b16 %v3508, %v3507
    %v3523 = vpack.c.b16 %v3510, %v3509
    %v3524 = vpack.c.b16 %v3512, %v3511
    %v3525 = vpack.c.b16 %v3514, %v3513
    %v3526 = vpack.c.b16 %v3516, %v3515
    %v3527 = vpack.c.b16 %v3518, %v3517
    %v3528 = vpack.c.b16 %v3520, %v3519
    %3537 = vmatprep.subr.bf16.mxu0 0
    %3538 = vmatpush1.bf16.msra.mxu0 %v3521
    %3539 = vmatprep.subr.bf16.mxu0 0
    %3540 = vmatpush1.bf16.msra.mxu0 %v3522
    %3541 = vmatprep.subr.bf16.mxu0 0
    %3542 = vmatpush1.bf16.msra.mxu0 %v3523
    %3543 = vmatprep.subr.bf16.mxu0 0
    %3544 = vmatpush1.bf16.msra.mxu0 %v3524
    %3545 = vmatprep.subr.bf16.mxu0 0
    %3546 = vmatpush1.bf16.msra.mxu0 %v3525
    %3547 = vmatprep.subr.bf16.mxu0 0
    %3548 = vmatpush1.bf16.msra.mxu0 %v3526
    %3549 = vmatprep.subr.bf16.mxu0 0
    %3550 = vmatpush1.bf16.msra.mxu0 %v3527
    %3551 = vmatprep.subr.bf16.mxu0 0
    %3552 = vmatpush1.bf16.msra.mxu0 %v3528
    %3553 = vmatprep.subr.bf16.mxu0 0
    %3554 = vmatpush1.bf16.msra.mxu0 0
    %3555 = vmatprep.subr.bf16.mxu0 0
    %3556 = vmatpush1.bf16.msra.mxu0 0
    %3557 = vmatprep.subr.bf16.mxu0 0
    %3558 = vmatpush1.bf16.msra.mxu0 0
    %3559 = vmatprep.subr.bf16.mxu0 0
    %3560 = vmatpush1.bf16.msra.mxu0 0
    %3561 = vmatprep.subr.bf16.mxu0 0
    %3562 = vmatpush1.bf16.msra.mxu0 0
    %3563 = vmatprep.subr.bf16.mxu0 0
    %3564 = vmatpush1.bf16.msra.mxu0 0
    %3565 = vmatprep.subr.bf16.mxu0 0
    %3566 = vmatpush1.bf16.msra.mxu0 0
    %3567 = vmatprep.subr.bf16.mxu0 0
    %3568 = vmatpush1.bf16.msra.mxu0 0
    %3569 = vmatprep.mubr.bf16.mxu0 0
    %3570 = vmatmul.mubr.bf16.gmra.mrb[0].mxu0 %v3467
    %v3571 = vpop.f32.mrb[0].mxu0
    %v3572 = vadd.f32 %v3488, %v3571
    %v3573 = vpop.f32.mrb[0].mxu0
    %v3574 = vpop.f32.mrb[0].mxu0
    %v3575 = vpop.f32.mrb[0].mxu0
    %3576 = vdwg.mxu0
    %v3577 = vtanh.pop %v3572
    %v3578 = vpack.c.bf16 %v3577, %v3577
    %s3579 = scalar_lea.vmem %s9, 64
    %v3580 = vld [vmem:[%s3579] sm:$0xf]
    %v3581 = vld [vmem:[%s3579 + $0x4] sm:$0xf]
    %v3582 = vld [vmem:[%s3579 + $0x8] sm:$0xf]
    %v3583 = vld [vmem:[%s3579 + $0xc] sm:$0xf]
    %v3584 = vld [vmem:[%s3579 + $0x10] sm:$0xf]
    %v3585 = vld [vmem:[%s3579 + $0x14] sm:$0xf]
    %v3586 = vld [vmem:[%s3579 + $0x18] sm:$0xf]
    %v3587 = vld [vmem:[%s3579 + $0x1c] sm:$0xf]
    %v3588 = vld [vmem:[%s3579 + $0x20] sm:$0xf]
    %v3589 = vld [vmem:[%s3579 + $0x24] sm:$0xf]
    %v3590 = vld [vmem:[%s3579 + $0x28] sm:$0xf]
    %v3591 = vld [vmem:[%s3579 + $0x2c] sm:$0xf]
    %v3592 = vld [vmem:[%s3579 + $0x30] sm:$0xf]
    %v3593 = vld [vmem:[%s3579 + $0x34] sm:$0xf]
    %v3594 = vld [vmem:[%s3579 + $0x38] sm:$0xf]
    %v3595 = vld [vmem:[%s3579 + $0x3c] sm:$0xf]
    %v3596 = vld [vmem:[%s10 + $0xf] sm:$0x1]
    %v3597 = vlaneseq
    %v3598 = vshrl.u32 %v3597, 7
    %v3599 = vsub.s32 0, %v3598
    %v3600 = vrot.slane %v3596, %v3599
    %v3617 = vunpack.c.l.b16 %v3580
    %v3618 = vunpack.c.l.b16 %v3581
    %v3619 = vunpack.c.l.b16 %v3582
    %v3620 = vunpack.c.l.b16 %v3583
    %v3621 = vunpack.c.l.b16 %v3584
    %v3622 = vunpack.c.l.b16 %v3585
    %v3623 = vunpack.c.l.b16 %v3586
    %v3624 = vunpack.c.l.b16 %v3587
    %v3625 = vunpack.c.l.b16 %v3588
    %v3626 = vunpack.c.l.b16 %v3589
    %v3627 = vunpack.c.l.b16 %v3590
    %v3628 = vunpack.c.l.b16 %v3591
    %v3629 = vunpack.c.l.b16 %v3592
    %v3630 = vunpack.c.l.b16 %v3593
    %v3631 = vunpack.c.l.b16 %v3594
    %v3632 = vunpack.c.l.b16 %v3595
    %v3633 = vpack.c.b16 %v3618, %v3617
    %v3634 = vpack.c.b16 %v3620, %v3619
    %v3635 = vpack.c.b16 %v3622, %v3621
    %v3636 = vpack.c.b16 %v3624, %v3623
    %v3637 = vpack.c.b16 %v3626, %v3625
    %v3638 = vpack.c.b16 %v3628, %v3627
    %v3639 = vpack.c.b16 %v3630, %v3629
    %v3640 = vpack.c.b16 %v3632, %v3631
    %3649 = vmatprep.subr.bf16.mxu0 0
    %3650 = vmatpush1.bf16.msra.mxu0 %v3633
    %3651 = vmatprep.subr.bf16.mxu0 0
    %3652 = vmatpush1.bf16.msra.mxu0 %v3634
    %3653 = vmatprep.subr.bf16.mxu0 0
    %3654 = vmatpush1.bf16.msra.mxu0 %v3635
    %3655 = vmatprep.subr.bf16.mxu0 0
    %3656 = vmatpush1.bf16.msra.mxu0 %v3636
    %3657 = vmatprep.subr.bf16.mxu0 0
    %3658 = vmatpush1.bf16.msra.mxu0 %v3637
    %3659 = vmatprep.subr.bf16.mxu0 0
    %3660 = vmatpush1.bf16.msra.mxu0 %v3638
    %3661 = vmatprep.subr.bf16.mxu0 0
    %3662 = vmatpush1.bf16.msra.mxu0 %v3639
    %3663 = vmatprep.subr.bf16.mxu0 0
    %3664 = vmatpush1.bf16.msra.mxu0 %v3640
    %3665 = vmatprep.subr.bf16.mxu0 0
    %3666 = vmatpush1.bf16.msra.mxu0 0
    %3667 = vmatprep.subr.bf16.mxu0 0
    %3668 = vmatpush1.bf16.msra.mxu0 0
    %3669 = vmatprep.subr.bf16.mxu0 0
    %3670 = vmatpush1.bf16.msra.mxu0 0
    %3671 = vmatprep.subr.bf16.mxu0 0
    %3672 = vmatpush1.bf16.msra.mxu0 0
    %3673 = vmatprep.subr.bf16.mxu0 0
    %3674 = vmatpush1.bf16.msra.mxu0 0
    %3675 = vmatprep.subr.bf16.mxu0 0
    %3676 = vmatpush1.bf16.msra.mxu0 0
    %3677 = vmatprep.subr.bf16.mxu0 0
    %3678 = vmatpush1.bf16.msra.mxu0 0
    %3679 = vmatprep.subr.bf16.mxu0 0
    %3680 = vmatpush1.bf16.msra.mxu0 0
    %3681 = vmatprep.mubr.bf16.mxu0 0
    %3682 = vmatmul.mubr.bf16.gmra.mrb[0].mxu0 %v3578
    %v3683 = vpop.f32.mrb[0].mxu0
    %v3684 = vadd.f32 %v3600, %v3683
    %v3685 = vpop.f32.mrb[0].mxu0
    %v3686 = vpop.f32.mrb[0].mxu0
    %v3687 = vpop.f32.mrb[0].mxu0
    %3688 = vdwg.mxu0
    %3689 = vst [vmem:[#allocation2] sm:$0x3] %v3684
    // Predicated region
    $region46: #{tpu_custom_call.1} parent=1 // pred_check
      _
    $region47: #{tpu_custom_call.1} parent=1 // pred_check_branch
      %3691 = sbr.rel (0) target = $region49
    $region48: #{tpu_custom_call.1} parent=1 // pred_region
      %s3693 = ssub.s32 32, 32
      %3694 = vsyncadd [#allocation3], %s3693
      %s3696 = sshll.u32 [#allocation2], 4
      %s3697 = int_to_ptr.vmem [resolvable:$true] %s3696
      %3699 = dma.vmem_to_hbm [thread:$0]  %s3697, 32, %s11, [#allocation3]
    $region49: #{tpu_custom_call.1} parent=1 // pred_fallthru
      _
    // Predicated region
    $region50: #{tpu_custom_call.1} parent=1 // pred_check
      _
    $region51: #{tpu_custom_call.1} parent=1 // pred_check_branch
      %3701 = sbr.rel (0) target = $region53
    $region52: #{tpu_custom_call.1} parent=1 // pred_region
      %3702 = dma.done [#allocation3], 32
    $region53: #{tpu_custom_call.1} parent=1 // pred_fallthru
      _
    %3703 = vsyncpa [#allocation3], 1

</llo_original>
